<compile_context>
chip_gen: v5e
topology: v5e:2x2
jax: 0.10.0
libtpu: 0.0.40
codegen_flags: <defaults>
</compile_context>

<pallas_src>
from functools import partial

import numpy as np
import jax
import jax.numpy as jnp
from jax.experimental import pallas as pl
from jax.experimental.pallas import tpu as pltpu


# ----------------------------- configuration --------------------------------
class config:
    rpn_anchor_ratios = [0.5, 1.0, 2.0]
    rpn_anchor_scales = [1.0, 2.0]


IMG_W, IMG_H = 256, 256          # input_img_size = (W, H)
RF = 16                          # receptive_field_size
FEAT_W, FEAT_H = 16, 16          # feature_extractor_size = (W, H)
CIN = 4                          # feature_extractor_out_dim
CMID = 512                       # conv_rpn out channels (fixed by module)
K = len(config.rpn_anchor_scales) * len(config.rpn_anchor_ratios)   # 6
HW = FEAT_H * FEAT_W                                                 # 256
NA = HW * K                                                          # 1536
KPAD = 128                       # lane-dense padded width (im2col K & head N)


# ----------------------------- anchor helpers (numpy setup) -----------------
def anchors_offset2bbox_np(a):
    cx, cy, w, h = a[:, 0], a[:, 1], a[:, 2], a[:, 3]
    x0 = cx - 0.5 * (w - 1.0)
    y0 = cy - 0.5 * (h - 1.0)
    x1 = cx + 0.5 * (w - 1.0)
    y1 = cy + 0.5 * (h - 1.0)
    return np.stack([x0, y0, x1, y1], axis=1).astype(np.float32)


def anchors_bbox2offset_np(b):
    x0, y0, x1, y1 = b[:, 0], b[:, 1], b[:, 2], b[:, 3]
    w = x1 - x0 + 1.0
    h = y1 - y0 + 1.0
    cx = x0 + 0.5 * (w - 1.0)
    cy = y0 + 0.5 * (h - 1.0)
    return np.stack([cx, cy, w, h], axis=1).astype(np.float32)


def get_anchors():
    """Port of RPN._get_anchors (pure deterministic setup)."""
    ratios = config.rpn_anchor_ratios
    scales = config.rpn_anchor_scales
    base_area = RF * RF
    base_cc = (RF - 1.0) * 0.5
    base_cr = (RF - 1.0) * 0.5
    anchors = []
    for r in ratios:
        n_cols = np.round(np.sqrt(base_area / r))
        n_rows = np.round(n_cols * r)
        cmid = 0.5 * (n_cols - 1)
        rmid = 0.5 * (n_rows - 1)
        anchors.append([base_cc - cmid, base_cr - rmid, base_cc + cmid, base_cr + rmid])
    final = []
    for a in anchors:
        aw = a[2] - a[0] + 1
        ah = a[3] - a[1] + 1
        acw = a[0] + 0.5 * (aw - 1)
        ach = a[1] + 0.5 * (ah - 1)
        for s in scales:
            final.append([acw - 0.5 * (aw * s - 1.0), ach - 0.5 * (ah * s - 1.0),
                          acw + 0.5 * (aw * s - 1.0), ach + 0.5 * (ah * s - 1.0)])
    anchors = np.array(final)
    final = []
    for a in anchors:
        aw = a[2] - a[0] + 1
        ah = a[3] - a[1] + 1
        acw = a[0] + 0.5 * (aw - 1)
        ach = a[1] + 0.5 * (ah - 1)
        final.append([acw, ach, aw, ah])
    anchors = np.array(final, dtype=np.float32).reshape(-1)

    n_anchors = 4 * K
    all_anchors = np.zeros((n_anchors, FEAT_H, FEAT_W), dtype=np.float32)
    for kk in range(0, n_anchors, 4):
        for i in range(FEAT_H):
            for j in range(FEAT_W):
                all_anchors[kk + 0, i, j] = anchors[kk + 0] + j * RF
                all_anchors[kk + 1, i, j] = anchors[kk + 1] + i * RF
                all_anchors[kk + 2, i, j] = anchors[kk + 2]
                all_anchors[kk + 3, i, j] = anchors[kk + 3]
    a = np.transpose(all_anchors, (1, 2, 0)).reshape(-1, 4)   # (NA, 4) offset fmt
    a_bbox = anchors_offset2bbox_np(a)                        # (NA, 4) bbox fmt
    valid = ((a_bbox[:, 0] >= 0) & (a_bbox[:, 1] >= 0) &
             (a_bbox[:, 2] < IMG_W) & (a_bbox[:, 3] < IMG_H))
    return a_bbox, valid


def nms_np(boxes, scores, thresh):
    """Greedy NMS on host (classic Faster R-CNN '+1' convention)."""
    x1, y1, x2, y2 = boxes[:, 0], boxes[:, 1], boxes[:, 2], boxes[:, 3]
    areas = (x2 - x1 + 1.0) * (y2 - y1 + 1.0)
    order = np.argsort(-scores, kind="stable")
    keep = []
    while order.size > 0:
        i = order[0]
        keep.append(i)
        rest = order[1:]
        xx1 = np.maximum(x1[i], x1[rest])
        yy1 = np.maximum(y1[i], y1[rest])
        xx2 = np.minimum(x2[i], x2[rest])
        yy2 = np.minimum(y2[i], y2[rest])
        w = np.maximum(0.0, xx2 - xx1 + 1.0)
        h = np.maximum(0.0, yy2 - yy1 + 1.0)
        inter = w * h
        iou = inter / (areas[i] + areas[rest] - inter)
        order = rest[iou <= thresh]
    return np.asarray(keep, dtype=np.int64)


# ----------------------------- offline packing -------------------------------
def pack_params(w_conv, b_conv, w_cls, b_cls, w_reg, b_reg):
    """Re-layout PyTorch-style weights into lane-dense, kernel-friendly shapes.

    - 3x3 conv weights -> im2col matmul weights, contraction padded 36 -> 128.
    - cls/reg 1x1 heads fused into ONE (CMID, 128) matmul whose columns are
      coordinate-major blocks of width K:
        cols [0:6K]  = [tx_k | ty_k | tw_k | th_k | cls0_k | cls1_k]
        cols [6K:]   = zero padding.
    """
    wc = np.zeros((KPAD, CMID), np.float32)
    wc[:9 * CIN, :] = np.asarray(w_conv, np.float32).reshape(9 * CIN, CMID)

    # PyTorch head channel order is k-major: reg ch = 4k+coord, cls ch = 2k+c.
    perm_reg = np.array([4 * k + c for c in range(4) for k in range(K)])
    perm_cls = np.array([2 * k + c for c in range(2) for k in range(K)])

    wh = np.zeros((CMID, KPAD), np.float32)
    bh = np.zeros((1, KPAD), np.float32)
    wh[:, 0:4 * K] = np.asarray(w_reg, np.float32)[:, perm_reg]
    wh[:, 4 * K:6 * K] = np.asarray(w_cls, np.float32)[:, perm_cls]
    bh[0, 0:4 * K] = np.asarray(b_reg, np.float32).reshape(-1)[perm_reg]
    bh[0, 4 * K:6 * K] = np.asarray(b_cls, np.float32).reshape(-1)[perm_cls]

    bc = np.asarray(b_conv, np.float32).reshape(1, CMID)
    return (jnp.asarray(wc), jnp.asarray(bc), jnp.asarray(wh), jnp.asarray(bh))


def pack_anchors(anchors_off):
    """(NA, 4) cx,cy,w,h -> (HW, 128) coordinate-major blocks [ax|ay|aw|ah|0]."""
    ap = anchors_off.reshape(HW, K, 4).transpose(0, 2, 1).reshape(HW, 4 * K)
    out = np.zeros((HW, KPAD), np.float32)
    out[:, :4 * K] = ap
    return jnp.asarray(out)


# ----------------------------- fused Pallas kernel ---------------------------
def rpn_fused_kernel(xcol_ref, wc_ref, bc_ref, wh_ref, bh_ref, a_ref, out_ref):
    """conv_rpn (3x3 as padded im2col matmul) + ReLU, fused cls+reg heads,
    anchor decode, box clipping and 2-way softmax.  Single (HW, 128) output:

      cols [0:4K)   = proposal  x0 | y0 | x1 | y1  (K-wide blocks)
      cols [4K:8K)  = clipped   x0 | y0 | x1 | y1
      cols [8K:9K)  = P(object)  (softmax class 1)
      cols [9K:11K) = raw cls logits  c0 | c1
      cols [11K:)   = zeros
    """
    # 3x3 conv as lane-dense matmul (contraction padded to 128) + ReLU.
    h = jnp.dot(xcol_ref[...], wc_ref[...], preferred_element_type=jnp.float32)
    h = jnp.maximum(h + bc_ref[...], 0.0)                     # (HW, 512)

    # Fused cls+reg heads: one lane-dense 128-wide MXU pass.
    y = jnp.dot(h, wh_ref[...], preferred_element_type=jnp.float32) + bh_ref[...]

    tx = y[:, 0 * K:1 * K]
    ty = y[:, 1 * K:2 * K]
    tw = y[:, 2 * K:3 * K]
    th = y[:, 3 * K:4 * K]
    c0 = y[:, 4 * K:5 * K]
    c1 = y[:, 5 * K:6 * K]

    ax = a_ref[:, 0 * K:1 * K]
    ay = a_ref[:, 1 * K:2 * K]
    aw = a_ref[:, 2 * K:3 * K]
    ah = a_ref[:, 3 * K:4 * K]

    # anchors (cx,cy,w,h) + deltas -> proposals (unclamped exp, like the module).
    px = ax + aw * tx
    py = ay + ah * ty
    pw = aw * jnp.exp(tw)
    ph = ah * jnp.exp(th)

    x0 = px - 0.5 * (pw - 1.0)
    y0 = py - 0.5 * (ph - 1.0)
    x1 = px + 0.5 * (pw - 1.0)
    y1 = py + 0.5 * (ph - 1.0)

    cx0 = jnp.clip(x0, 0.0, IMG_W - 1.0)
    cy0 = jnp.clip(y0, 0.0, IMG_H - 1.0)
    cx1 = jnp.clip(x1, 0.0, IMG_W - 1.0)
    cy1 = jnp.clip(y1, 0.0, IMG_H - 1.0)

    # 2-way softmax class-1 probability == sigmoid(c1 - c0) (EUP; one exp).
    p1 = 1.0 / (1.0 + jnp.exp(c0 - c1))

    pad = jnp.zeros((HW, KPAD - 11 * K), jnp.float32)
    out_ref[...] = jnp.concatenate(
        [x0, y0, x1, y1, cx0, cy0, cx1, cy1, p1, c0, c1, pad], axis=-1)


_VMEM = pl.BlockSpec(memory_space=pltpu.MemorySpace.VMEM)


@partial(jax.jit, static_argnames=("n_pre",))
def rpn_device(x_nchw, wc, bc, wh, bh, anchors_packed, hw_v, k_v, *, n_pre):
    # glue: NCHW batch 0 -> NHWC, pad, im2col, pad contraction 36 -> 128.
    x0 = jnp.transpose(x_nchw[0], (1, 2, 0))                  # (H, W, Cin)
    xpad = jnp.pad(x0, ((1, 1), (1, 1), (0, 0)))
    cols = [xpad[dy:dy + FEAT_H, dx:dx + FEAT_W, :]
            for dy in range(3) for dx in range(3)]
    xcol = jnp.concatenate(cols, axis=-1).reshape(HW, 9 * CIN)
    xcol = jnp.pad(xcol, ((0, 0), (0, KPAD - 9 * CIN)))        # (HW, 128)

    out = pl.pallas_call(
        rpn_fused_kernel,
        out_shape=jax.ShapeDtypeStruct((HW, KPAD), jnp.float32),
        in_specs=[_VMEM] * 6,
        out_specs=_VMEM,
    )(xcol, wc, bc, wh, bh, anchors_packed)

    prop3 = out[:, 0 * K:4 * K].reshape(HW, 4, K)              # [hw, coord, k]
    clip3 = out[:, 4 * K:8 * K].reshape(HW, 4, K)
    probs = out[:, 8 * K:9 * K].reshape(NA)                    # anchor a = hw*K + k
    cls3 = out[:, 9 * K:11 * K].reshape(HW, 2, K)

    # Valid-anchor rows the module returns, gathered on device.
    prop_valid = prop3[hw_v, :, k_v]                           # (Nv, 4)
    cls_valid = cls3[hw_v, :, k_v]                             # (Nv, 2)

    # Device-side top-k of objectness + gather of matching clipped boxes
    # (shrinks the D2H tail; replaces the host argsort).
    top_probs, top_idx = jax.lax.top_k(probs, n_pre)
    boxes_sel = clip3[top_idx // K, :, top_idx % K]            # (n_pre, 4)

    return prop_valid, cls_valid, boxes_sel, top_probs


# ----------------------------- forward wrapper --------------------------------
def rpn_forward(x_nchw, dev_params, anchors_packed, hw_v, k_v,
                pre_nms_top_n, pos_nms_top_n):
    wc, bc, wh, bh = dev_params
    n_pre = pre_nms_top_n if pre_nms_top_n > 0 else NA
    n_pre = min(int(n_pre), NA)

    prop_valid, cls_valid, boxes_sel, top_probs = rpn_device(
        x_nchw, wc, bc, wh, bh, anchors_packed, hw_v, k_v, n_pre=n_pre)
    jax.block_until_ready((prop_valid, cls_valid, boxes_sel, top_probs))

    boxes_sel = np.asarray(boxes_sel)
    top_probs = np.asarray(top_probs)

    # TODO(synk): greedy NMS has a data-dependent output shape, so it stays on host.
    keep = nms_np(boxes_sel, top_probs, 0.7)
    if pos_nms_top_n > 0:
        keep = keep[:pos_nms_top_n]
    filtered_proposals = boxes_sel[keep, :]
    probs_object = top_probs[keep]
    assert probs_object.shape[0] > 0, \
        "Inspect the following code behavior when this happens."

    return (np.asarray(prop_valid), np.asarray(cls_valid),
            filtered_proposals, probs_object)


# ----------------------------- main --------------------------------------------
if __name__ == "__main__":
    key = jax.random.PRNGKey(0)
    k1, k2, k3, k4, k5, k6, k7 = jax.random.split(key, 7)

    # Deterministic synthetic parameters (shapes implied by the module __init__),
    # in PyTorch-equivalent channel ordering (reg ch = 4k+coord, cls ch = 2k+c).
    w_conv = jax.random.normal(k1, (3, 3, CIN, CMID), jnp.float32) * 0.05   # HWIO
    b_conv = jax.random.normal(k2, (1, CMID), jnp.float32) * 0.05
    w_cls = jax.random.normal(k3, (CMID, 2 * K), jnp.float32) * 0.02
    b_cls = jax.random.normal(k4, (1, 2 * K), jnp.float32) * 0.02
    w_reg = jax.random.normal(k5, (CMID, 4 * K), jnp.float32) * 0.01
    b_reg = jax.random.normal(k6, (1, 4 * K), jnp.float32) * 0.01

    # Feature-map input (NCHW, matching the PyTorch module's expected input).
    x = jax.random.normal(k7, (2, CIN, FEAT_H, FEAT_W), jnp.float32)

    # Anchor buffers (deterministic numpy setup, as in __init__).
    all_anchors_bbox, valid_mask = get_anchors()            # (NA, 4), (NA,)
    anchors_off = anchors_bbox2offset_np(all_anchors_bbox)  # (NA, 4) cx,cy,w,h
    anchors_packed = pack_anchors(anchors_off)              # (HW, 128)
    valid_idx = np.nonzero(valid_mask)[0]
    hw_v = jnp.asarray((valid_idx // K).astype(np.int32))
    k_v = jnp.asarray((valid_idx % K).astype(np.int32))

    dev_params = pack_params(w_conv, b_conv, w_cls, b_cls, w_reg, b_reg)

    proposals, cls_out, filtered, probs_obj = rpn_forward(
        x, dev_params, anchors_packed, hw_v, k_v,
        pre_nms_top_n=200, pos_nms_top_n=50)

    # Basic sanity checks on shapes/values.
    assert proposals.shape == (valid_idx.shape[0], 4)
    assert cls_out.shape == (valid_idx.shape[0], 2)
    assert filtered.shape[1] == 4 and filtered.shape[0] == probs_obj.shape[0]
    assert np.all(np.isfinite(proposals)) and np.all(np.isfinite(probs_obj))
    assert np.all(probs_obj >= 0.0) and np.all(probs_obj <= 1.0)
    assert np.all(filtered[:, 0] >= 0) and np.all(filtered[:, 2] <= IMG_W - 1)
    assert np.all(filtered[:, 1] >= 0) and np.all(filtered[:, 3] <= IMG_H - 1)

    print("KERNEL_OK")
</pallas_src>

<mosaic_0001>
module attributes {stable_mosaic.version = 11 : i64} {
  func.func @rpn_fused_kernel(%arg0: memref<256x128xf32, #tpu.memory_space<vmem>>, %arg1: memref<128x512xf32, #tpu.memory_space<vmem>>, %arg2: memref<1x512xf32, #tpu.memory_space<vmem>>, %arg3: memref<512x128xf32, #tpu.memory_space<vmem>>, %arg4: memref<1x128xf32, #tpu.memory_space<vmem>>, %arg5: memref<256x128xf32, #tpu.memory_space<vmem>>, %arg6: memref<256x128xf32, #tpu.memory_space<vmem>>) attributes {dimension_semantics = [], scalar_prefetch = 0 : i64, scratch_operands = 0 : i64, tpu.core_type = #tpu.core_type<tc>} {
    %c0 = arith.constant 0 : index
    %c0_0 = arith.constant 0 : index
    %0 = vector.load %arg0[%c0, %c0_0] : memref<256x128xf32, #tpu.memory_space<vmem>>, vector<256x128xf32>
    %c0_1 = arith.constant 0 : index
    %c0_2 = arith.constant 0 : index
    %1 = vector.load %arg1[%c0_1, %c0_2] : memref<128x512xf32, #tpu.memory_space<vmem>>, vector<128x512xf32>
    %cst = arith.constant dense<0.000000e+00> : vector<256x512xf32>
    %2 = tpu.matmul %0, %1, %cst {dimension_numbers = #tpu.dot_dimension_numbers<[1], [0], [0], [1], [0, 0, 1, 1], [], []>} : vector<256x128xf32>, vector<128x512xf32>, vector<256x512xf32> -> vector<256x512xf32>
    %c0_3 = arith.constant 0 : index
    %c0_4 = arith.constant 0 : index
    %3 = vector.load %arg2[%c0_3, %c0_4] : memref<1x512xf32, #tpu.memory_space<vmem>>, vector<1x512xf32>
    %4 = vector.broadcast %3 : vector<1x512xf32> to vector<256x512xf32>
    %5 = arith.addf %2, %4 : vector<256x512xf32>
    %cst_5 = arith.constant 0.000000e+00 : f32
    %6 = vector.broadcast %cst_5 : f32 to vector<256x512xf32>
    %7 = arith.maximumf %5, %6 : vector<256x512xf32>
    %c0_6 = arith.constant 0 : index
    %c0_7 = arith.constant 0 : index
    %8 = vector.load %arg3[%c0_6, %c0_7] : memref<512x128xf32, #tpu.memory_space<vmem>>, vector<512x128xf32>
    %cst_8 = arith.constant dense<0.000000e+00> : vector<256x128xf32>
    %9 = tpu.matmul %7, %8, %cst_8 {dimension_numbers = #tpu.dot_dimension_numbers<[1], [0], [0], [1], [0, 0, 1, 1], [], []>} : vector<256x512xf32>, vector<512x128xf32>, vector<256x128xf32> -> vector<256x128xf32>
    %c0_9 = arith.constant 0 : index
    %c0_10 = arith.constant 0 : index
    %10 = vector.load %arg4[%c0_9, %c0_10] : memref<1x128xf32, #tpu.memory_space<vmem>>, vector<1x128xf32>
    %11 = vector.broadcast %10 : vector<1x128xf32> to vector<256x128xf32>
    %12 = arith.addf %9, %11 : vector<256x128xf32>
    %13 = vector.extract_strided_slice %12 {offsets = [0, 0], sizes = [256, 6], strides = [1, 1]} : vector<256x128xf32> to vector<256x6xf32>
    %14 = vector.extract_strided_slice %12 {offsets = [0, 6], sizes = [256, 6], strides = [1, 1]} : vector<256x128xf32> to vector<256x6xf32>
    %15 = vector.extract_strided_slice %12 {offsets = [0, 12], sizes = [256, 6], strides = [1, 1]} : vector<256x128xf32> to vector<256x6xf32>
    %16 = vector.extract_strided_slice %12 {offsets = [0, 18], sizes = [256, 6], strides = [1, 1]} : vector<256x128xf32> to vector<256x6xf32>
    %17 = vector.extract_strided_slice %12 {offsets = [0, 24], sizes = [256, 6], strides = [1, 1]} : vector<256x128xf32> to vector<256x6xf32>
    %18 = vector.extract_strided_slice %12 {offsets = [0, 30], sizes = [256, 6], strides = [1, 1]} : vector<256x128xf32> to vector<256x6xf32>
    %c0_11 = arith.constant 0 : index
    %c0_12 = arith.constant 0 : index
    %19 = vector.load %arg5[%c0_11, %c0_12] : memref<256x128xf32, #tpu.memory_space<vmem>>, vector<256x6xf32>
    %c0_13 = arith.constant 0 : index
    %c6 = arith.constant 6 : index
    %20 = vector.load %arg5[%c0_13, %c6] : memref<256x128xf32, #tpu.memory_space<vmem>>, vector<256x6xf32>
    %c0_14 = arith.constant 0 : index
    %c12 = arith.constant 12 : index
    %21 = vector.load %arg5[%c0_14, %c12] : memref<256x128xf32, #tpu.memory_space<vmem>>, vector<256x6xf32>
    %c0_15 = arith.constant 0 : index
    %c18 = arith.constant 18 : index
    %22 = vector.load %arg5[%c0_15, %c18] : memref<256x128xf32, #tpu.memory_space<vmem>>, vector<256x6xf32>
    %23 = arith.mulf %21, %13 : vector<256x6xf32>
    %24 = arith.addf %19, %23 : vector<256x6xf32>
    %25 = arith.mulf %22, %14 : vector<256x6xf32>
    %26 = arith.addf %20, %25 : vector<256x6xf32>
    %27 = math.exp %15 : vector<256x6xf32>
    %28 = arith.mulf %21, %27 : vector<256x6xf32>
    %29 = math.exp %16 : vector<256x6xf32>
    %30 = arith.mulf %22, %29 : vector<256x6xf32>
    %cst_16 = arith.constant 1.000000e+00 : f32
    %31 = vector.broadcast %cst_16 : f32 to vector<256x6xf32>
    %32 = arith.subf %28, %31 : vector<256x6xf32>
    %cst_17 = arith.constant 5.000000e-01 : f32
    %33 = vector.broadcast %cst_17 : f32 to vector<256x6xf32>
    %34 = arith.mulf %33, %32 : vector<256x6xf32>
    %35 = arith.subf %24, %34 : vector<256x6xf32>
    %cst_18 = arith.constant 1.000000e+00 : f32
    %36 = vector.broadcast %cst_18 : f32 to vector<256x6xf32>
    %37 = arith.subf %30, %36 : vector<256x6xf32>
    %cst_19 = arith.constant 5.000000e-01 : f32
    %38 = vector.broadcast %cst_19 : f32 to vector<256x6xf32>
    %39 = arith.mulf %38, %37 : vector<256x6xf32>
    %40 = arith.subf %26, %39 : vector<256x6xf32>
    %cst_20 = arith.constant 1.000000e+00 : f32
    %41 = vector.broadcast %cst_20 : f32 to vector<256x6xf32>
    %42 = arith.subf %28, %41 : vector<256x6xf32>
    %cst_21 = arith.constant 5.000000e-01 : f32
    %43 = vector.broadcast %cst_21 : f32 to vector<256x6xf32>
    %44 = arith.mulf %43, %42 : vector<256x6xf32>
    %45 = arith.addf %24, %44 : vector<256x6xf32>
    %cst_22 = arith.constant 1.000000e+00 : f32
    %46 = vector.broadcast %cst_22 : f32 to vector<256x6xf32>
    %47 = arith.subf %30, %46 : vector<256x6xf32>
    %cst_23 = arith.constant 5.000000e-01 : f32
    %48 = vector.broadcast %cst_23 : f32 to vector<256x6xf32>
    %49 = arith.mulf %48, %47 : vector<256x6xf32>
    %50 = arith.addf %26, %49 : vector<256x6xf32>
    %cst_24 = arith.constant 0.000000e+00 : f32
    %cst_25 = arith.constant 2.550000e+02 : f32
    %51 = vector.broadcast %cst_24 : f32 to vector<256x6xf32>
    %52 = arith.maximumf %51, %35 : vector<256x6xf32>
    %53 = vector.broadcast %cst_25 : f32 to vector<256x6xf32>
    %54 = arith.minimumf %53, %52 : vector<256x6xf32>
    %cst_26 = arith.constant 0.000000e+00 : f32
    %cst_27 = arith.constant 2.550000e+02 : f32
    %55 = vector.broadcast %cst_26 : f32 to vector<256x6xf32>
    %56 = arith.maximumf %55, %40 : vector<256x6xf32>
    %57 = vector.broadcast %cst_27 : f32 to vector<256x6xf32>
    %58 = arith.minimumf %57, %56 : vector<256x6xf32>
    %cst_28 = arith.constant 0.000000e+00 : f32
    %cst_29 = arith.constant 2.550000e+02 : f32
    %59 = vector.broadcast %cst_28 : f32 to vector<256x6xf32>
    %60 = arith.maximumf %59, %45 : vector<256x6xf32>
    %61 = vector.broadcast %cst_29 : f32 to vector<256x6xf32>
    %62 = arith.minimumf %61, %60 : vector<256x6xf32>
    %cst_30 = arith.constant 0.000000e+00 : f32
    %cst_31 = arith.constant 2.550000e+02 : f32
    %63 = vector.broadcast %cst_30 : f32 to vector<256x6xf32>
    %64 = arith.maximumf %63, %50 : vector<256x6xf32>
    %65 = vector.broadcast %cst_31 : f32 to vector<256x6xf32>
    %66 = arith.minimumf %65, %64 : vector<256x6xf32>
    %67 = arith.subf %17, %18 : vector<256x6xf32>
    %68 = math.exp %67 : vector<256x6xf32>
    %cst_32 = arith.constant 1.000000e+00 : f32
    %69 = vector.broadcast %cst_32 : f32 to vector<256x6xf32>
    %70 = arith.addf %69, %68 : vector<256x6xf32>
    %cst_33 = arith.constant 1.000000e+00 : f32
    %71 = vector.broadcast %cst_33 : f32 to vector<256x6xf32>
    %72 = arith.divf %71, %70 : vector<256x6xf32>
    %cst_34 = arith.constant 0.000000e+00 : f32
    %73 = vector.broadcast %cst_34 : f32 to vector<256x62xf32>
    %74 = tpu.concatenate %35, %40, %45, %50, %54, %58, %62, %66, %72, %17, %18, %73 in 1 : vector<256x6xf32>, vector<256x6xf32>, vector<256x6xf32>, vector<256x6xf32>, vector<256x6xf32>, vector<256x6xf32>, vector<256x6xf32>, vector<256x6xf32>, vector<256x6xf32>, vector<256x6xf32>, vector<256x6xf32>, vector<256x62xf32> -> vector<256x128xf32>
    %c0_35 = arith.constant 0 : index
    %c0_36 = arith.constant 0 : index
    %75 = vector.load %arg6[%c0_35, %c0_36] : memref<256x128xf32, #tpu.memory_space<vmem>>, vector<256x128xf32>
    tpu.vector_store %arg6[%c0_35, %c0_36], %74 {strides = array<i32>} : memref<256x128xf32, #tpu.memory_space<vmem>>, vector<256x128xf32>,
    return
  }
}

</mosaic_0001>

<llo_original>
// kernel: rpn_device.1
$region0: #{rpn_device.1}
  #allocation0 [shape = 'u32[]', space=smem, size = 0x4, offset = 0x4, fixed_abs, tag = 'smem constant byte address 0x4 - core index']
  #allocation1 [shape = 'u32[72,128]{1,0:T(1,128)}', space=vmem, size = 0x9000, scoped, tag = 'internal scratch']
  %s0 = inlined_call_operand.vmem [shape: f32[256,128], index: 0, kind: input, shape index: {}]
  %s1 = inlined_call_operand.vmem [shape: f32[128,512], index: 1, kind: input, shape index: {}]
  %s2 = inlined_call_operand.vmem [shape: f32[1,512], index: 2, kind: input, shape index: {}]
  %s3 = inlined_call_operand.vmem [shape: f32[512,128], index: 3, kind: input, shape index: {}]
  %s4 = inlined_call_operand.vmem [shape: f32[1,128], index: 4, kind: input, shape index: {}]
  %s5 = inlined_call_operand.vmem [shape: f32[256,128], index: 5, kind: input, shape index: {}]
  %s6 = inlined_call_operand.vmem [shape: f32[256,128], index: 6, kind: output, shape index: {}]
  %s7 = sld [smem:[#allocation0]]
  $region34: #{rpn_device.1} parent=0
    _
  %s9 = ssub.s32 1, %s7
  %s10 = scalar_select 0, %s9, %s7
  // Predicated region
  $region2: #{rpn_device.1} parent=0 // pred_check
    _
  $region3: #{rpn_device.1} parent=0 // pred_check_branch
    %12 = sbr.rel (0) target = $region5
  $region4: #{rpn_device.1} parent=0 // pred_region
    _
  $region5: #{rpn_device.1} parent=0 // pred_fallthru
    _
  // Predicated region
  $region6: #{rpn_device.1} parent=0 // pred_check
    _
  $region7: #{rpn_device.1} parent=0 // pred_check_branch
    %14 = sbr.rel (0) target = $region9
  $region8: #{rpn_device.1} parent=0 // pred_region
    _
  $region9: #{rpn_device.1} parent=0 // pred_fallthru
    _
  // Predicated region
  $region10: #{rpn_device.1} parent=0 // pred_check
    _
  $region11: #{rpn_device.1} parent=0 // pred_check_branch
    %16 = sbr.rel (0) target = $region13
  $region12: #{rpn_device.1} parent=0 // pred_region
    _
  $region13: #{rpn_device.1} parent=0 // pred_fallthru
    _
  // Predicated region
  $region14: #{rpn_device.1} parent=0 // pred_check
    _
  $region15: #{rpn_device.1} parent=0 // pred_check_branch
    %18 = sbr.rel (0) target = $region17
  $region16: #{rpn_device.1} parent=0 // pred_region
    _
  $region17: #{rpn_device.1} parent=0 // pred_fallthru
    _
  // Predicated region
  $region18: #{rpn_device.1} parent=0 // pred_check
    _
  $region19: #{rpn_device.1} parent=0 // pred_check_branch
    %20 = sbr.rel (0) target = $region21
  $region20: #{rpn_device.1} parent=0 // pred_region
    _
  $region21: #{rpn_device.1} parent=0 // pred_fallthru
    _
  // Predicated region
  $region22: #{rpn_device.1} parent=0 // pred_check
    _
  $region23: #{rpn_device.1} parent=0 // pred_check_branch
    %22 = sbr.rel (0) target = $region25
  $region24: #{rpn_device.1} parent=0 // pred_region
    _
  $region25: #{rpn_device.1} parent=0 // pred_fallthru
    _
  %v23 = vld [vmem:[%s0] sm:$0xff]
  %v24 = vld [vmem:[%s0 + $0x8] sm:$0xff]
  %v25 = vld [vmem:[%s0 + $0x10] sm:$0xff]
  %v26 = vld [vmem:[%s0 + $0x18] sm:$0xff]
  %v27 = vld [vmem:[%s0 + $0x20] sm:$0xff]
  %v28 = vld [vmem:[%s0 + $0x28] sm:$0xff]
  %v29 = vld [vmem:[%s0 + $0x30] sm:$0xff]
  %v30 = vld [vmem:[%s0 + $0x38] sm:$0xff]
  %v31 = vld [vmem:[%s0 + $0x40] sm:$0xff]
  %v32 = vld [vmem:[%s0 + $0x48] sm:$0xff]
  %v33 = vld [vmem:[%s0 + $0x50] sm:$0xff]
  %v34 = vld [vmem:[%s0 + $0x58] sm:$0xff]
  %v35 = vld [vmem:[%s0 + $0x60] sm:$0xff]
  %v36 = vld [vmem:[%s0 + $0x68] sm:$0xff]
  %v37 = vld [vmem:[%s0 + $0x70] sm:$0xff]
  %v38 = vld [vmem:[%s0 + $0x78] sm:$0xff]
  %v39 = vld [vmem:[%s0 + $0x80] sm:$0xff]
  %v40 = vld [vmem:[%s0 + $0x88] sm:$0xff]
  %v41 = vld [vmem:[%s0 + $0x90] sm:$0xff]
  %v42 = vld [vmem:[%s0 + $0x98] sm:$0xff]
  %v43 = vld [vmem:[%s0 + $0xa0] sm:$0xff]
  %v44 = vld [vmem:[%s0 + $0xa8] sm:$0xff]
  %v45 = vld [vmem:[%s0 + $0xb0] sm:$0xff]
  %v46 = vld [vmem:[%s0 + $0xb8] sm:$0xff]
  %v47 = vld [vmem:[%s0 + $0xc0] sm:$0xff]
  %v48 = vld [vmem:[%s0 + $0xc8] sm:$0xff]
  %v49 = vld [vmem:[%s0 + $0xd0] sm:$0xff]
  %v50 = vld [vmem:[%s0 + $0xd8] sm:$0xff]
  %v51 = vld [vmem:[%s0 + $0xe0] sm:$0xff]
  %v52 = vld [vmem:[%s0 + $0xe8] sm:$0xff]
  %v53 = vld [vmem:[%s0 + $0xf0] sm:$0xff]
  %v54 = vld [vmem:[%s0 + $0xf8] sm:$0xff]
  %v55 = vld [vmem:[%s1] sm:$0xff]
  %v56 = vld [vmem:[%s1 + $0x8] sm:$0xff]
  %v57 = vld [vmem:[%s1 + $0x10] sm:$0xff]
  %v58 = vld [vmem:[%s1 + $0x18] sm:$0xff]
  %v59 = vld [vmem:[%s1 + $0x20] sm:$0xff]
  %v60 = vld [vmem:[%s1 + $0x28] sm:$0xff]
  %v61 = vld [vmem:[%s1 + $0x30] sm:$0xff]
  %v62 = vld [vmem:[%s1 + $0x38] sm:$0xff]
  %v63 = vld [vmem:[%s1 + $0x40] sm:$0xff]
  %v64 = vld [vmem:[%s1 + $0x48] sm:$0xff]
  %v65 = vld [vmem:[%s1 + $0x50] sm:$0xff]
  %v66 = vld [vmem:[%s1 + $0x58] sm:$0xff]
  %v67 = vld [vmem:[%s1 + $0x60] sm:$0xff]
  %v68 = vld [vmem:[%s1 + $0x68] sm:$0xff]
  %v69 = vld [vmem:[%s1 + $0x70] sm:$0xff]
  %v70 = vld [vmem:[%s1 + $0x78] sm:$0xff]
  %v71 = vld [vmem:[%s1 + $0x80] sm:$0xff]
  %v72 = vld [vmem:[%s1 + $0x88] sm:$0xff]
  %v73 = vld [vmem:[%s1 + $0x90] sm:$0xff]
  %v74 = vld [vmem:[%s1 + $0x98] sm:$0xff]
  %v75 = vld [vmem:[%s1 + $0xa0] sm:$0xff]
  %v76 = vld [vmem:[%s1 + $0xa8] sm:$0xff]
  %v77 = vld [vmem:[%s1 + $0xb0] sm:$0xff]
  %v78 = vld [vmem:[%s1 + $0xb8] sm:$0xff]
  %v79 = vld [vmem:[%s1 + $0xc0] sm:$0xff]
  %v80 = vld [vmem:[%s1 + $0xc8] sm:$0xff]
  %v81 = vld [vmem:[%s1 + $0xd0] sm:$0xff]
  %v82 = vld [vmem:[%s1 + $0xd8] sm:$0xff]
  %v83 = vld [vmem:[%s1 + $0xe0] sm:$0xff]
  %v84 = vld [vmem:[%s1 + $0xe8] sm:$0xff]
  %v85 = vld [vmem:[%s1 + $0xf0] sm:$0xff]
  %v86 = vld [vmem:[%s1 + $0xf8] sm:$0xff]
  %v87 = vld [vmem:[%s1 + $0x100] sm:$0xff]
  %v88 = vld [vmem:[%s1 + $0x108] sm:$0xff]
  %v89 = vld [vmem:[%s1 + $0x110] sm:$0xff]
  %v90 = vld [vmem:[%s1 + $0x118] sm:$0xff]
  %v91 = vld [vmem:[%s1 + $0x120] sm:$0xff]
  %v92 = vld [vmem:[%s1 + $0x128] sm:$0xff]
  %v93 = vld [vmem:[%s1 + $0x130] sm:$0xff]
  %v94 = vld [vmem:[%s1 + $0x138] sm:$0xff]
  %v95 = vld [vmem:[%s1 + $0x140] sm:$0xff]
  %v96 = vld [vmem:[%s1 + $0x148] sm:$0xff]
  %v97 = vld [vmem:[%s1 + $0x150] sm:$0xff]
  %v98 = vld [vmem:[%s1 + $0x158] sm:$0xff]
  %v99 = vld [vmem:[%s1 + $0x160] sm:$0xff]
  %v100 = vld [vmem:[%s1 + $0x168] sm:$0xff]
  %v101 = vld [vmem:[%s1 + $0x170] sm:$0xff]
  %v102 = vld [vmem:[%s1 + $0x178] sm:$0xff]
  %v103 = vld [vmem:[%s1 + $0x180] sm:$0xff]
  %v104 = vld [vmem:[%s1 + $0x188] sm:$0xff]
  %v105 = vld [vmem:[%s1 + $0x190] sm:$0xff]
  %v106 = vld [vmem:[%s1 + $0x198] sm:$0xff]
  %v107 = vld [vmem:[%s1 + $0x1a0] sm:$0xff]
  %v108 = vld [vmem:[%s1 + $0x1a8] sm:$0xff]
  %v109 = vld [vmem:[%s1 + $0x1b0] sm:$0xff]
  %v110 = vld [vmem:[%s1 + $0x1b8] sm:$0xff]
  %v111 = vld [vmem:[%s1 + $0x1c0] sm:$0xff]
  %v112 = vld [vmem:[%s1 + $0x1c8] sm:$0xff]
  %v113 = vld [vmem:[%s1 + $0x1d0] sm:$0xff]
  %v114 = vld [vmem:[%s1 + $0x1d8] sm:$0xff]
  %v115 = vld [vmem:[%s1 + $0x1e0] sm:$0xff]
  %v116 = vld [vmem:[%s1 + $0x1e8] sm:$0xff]
  %v117 = vld [vmem:[%s1 + $0x1f0] sm:$0xff]
  %v118 = vld [vmem:[%s1 + $0x1f8] sm:$0xff]
  %v119 = vld [vmem:[%s2] sm:$0xf]
  %v121 = vperm.slane %v119, 0
  %v122 = vperm.slane %v119, 1
  %v123 = vperm.slane %v119, 2
  %v124 = vperm.slane %v119, 3
  %129 = vmatpush.msra.mxu0 %v115
  %130 = vmatpush.msra.mxu0 %v111
  %131 = vmatpush.msra.mxu0 %v107
  %132 = vmatpush.msra.mxu0 %v103
  %133 = vmatpush.msra.mxu0 %v99
  %134 = vmatpush.msra.mxu0 %v95
  %135 = vmatpush.msra.mxu0 %v91
  %136 = vmatpush.msra.mxu0 %v87
  %137 = vmatpush.msra.mxu0 %v83
  %138 = vmatpush.msra.mxu0 %v79
  %139 = vmatpush.msra.mxu0 %v75
  %140 = vmatpush.msra.mxu0 %v71
  %141 = vmatpush.msra.mxu0 %v67
  %142 = vmatpush.msra.mxu0 %v63
  %143 = vmatpush.msra.mxu0 %v59
  %144 = vmatpush.msra.mxu0 %v55
  %145 = vmatmul.f32.gmra.mxu0 %v23
  %v146 = vpop.f32.mrf.mxu0
  %v147 = vadd.f32 %v121, %v146
  %148 = vmatmul.f32.gmra.mxu0 %v24
  %v149 = vpop.f32.mrf.mxu0
  %v150 = vadd.f32 %v121, %v149
  %151 = vmatmul.f32.gmra.mxu0 %v25
  %v152 = vpop.f32.mrf.mxu0
  %v153 = vadd.f32 %v121, %v152
  %154 = vmatmul.f32.gmra.mxu0 %v26
  %v155 = vpop.f32.mrf.mxu0
  %v156 = vadd.f32 %v121, %v155
  %157 = vmatmul.f32.gmra.mxu0 %v27
  %v158 = vpop.f32.mrf.mxu0
  %v159 = vadd.f32 %v121, %v158
  %160 = vmatmul.f32.gmra.mxu0 %v28
  %v161 = vpop.f32.mrf.mxu0
  %v162 = vadd.f32 %v121, %v161
  %163 = vmatmul.f32.gmra.mxu0 %v29
  %v164 = vpop.f32.mrf.mxu0
  %v165 = vadd.f32 %v121, %v164
  %166 = vmatmul.f32.gmra.mxu0 %v30
  %v167 = vpop.f32.mrf.mxu0
  %v168 = vadd.f32 %v121, %v167
  %169 = vmatmul.f32.gmra.mxu0 %v31
  %v170 = vpop.f32.mrf.mxu0
  %v171 = vadd.f32 %v121, %v170
  %172 = vmatmul.f32.gmra.mxu0 %v32
  %v173 = vpop.f32.mrf.mxu0
  %v174 = vadd.f32 %v121, %v173
  %175 = vmatmul.f32.gmra.mxu0 %v33
  %v176 = vpop.f32.mrf.mxu0
  %v177 = vadd.f32 %v121, %v176
  %178 = vmatmul.f32.gmra.mxu0 %v34
  %v179 = vpop.f32.mrf.mxu0
  %v180 = vadd.f32 %v121, %v179
  %181 = vmatmul.f32.gmra.mxu0 %v35
  %v182 = vpop.f32.mrf.mxu0
  %v183 = vadd.f32 %v121, %v182
  %184 = vmatmul.f32.gmra.mxu0 %v36
  %v185 = vpop.f32.mrf.mxu0
  %v186 = vadd.f32 %v121, %v185
  %187 = vmatmul.f32.gmra.mxu0 %v37
  %v188 = vpop.f32.mrf.mxu0
  %v189 = vadd.f32 %v121, %v188
  %190 = vmatmul.f32.gmra.mxu0 %v38
  %v191 = vpop.f32.mrf.mxu0
  %v192 = vadd.f32 %v121, %v191
  %193 = vmatmul.f32.gmra.mxu0 %v39
  %v194 = vpop.f32.mrf.mxu0
  %v195 = vadd.f32 %v121, %v194
  %196 = vmatmul.f32.gmra.mxu0 %v40
  %v197 = vpop.f32.mrf.mxu0
  %v198 = vadd.f32 %v121, %v197
  %199 = vmatmul.f32.gmra.mxu0 %v41
  %v200 = vpop.f32.mrf.mxu0
  %v201 = vadd.f32 %v121, %v200
  %202 = vmatmul.f32.gmra.mxu0 %v42
  %v203 = vpop.f32.mrf.mxu0
  %v204 = vadd.f32 %v121, %v203
  %205 = vmatmul.f32.gmra.mxu0 %v43
  %v206 = vpop.f32.mrf.mxu0
  %v207 = vadd.f32 %v121, %v206
  %208 = vmatmul.f32.gmra.mxu0 %v44
  %v209 = vpop.f32.mrf.mxu0
  %v210 = vadd.f32 %v121, %v209
  %211 = vmatmul.f32.gmra.mxu0 %v45
  %v212 = vpop.f32.mrf.mxu0
  %v213 = vadd.f32 %v121, %v212
  %214 = vmatmul.f32.gmra.mxu0 %v46
  %v215 = vpop.f32.mrf.mxu0
  %v216 = vadd.f32 %v121, %v215
  %217 = vmatmul.f32.gmra.mxu0 %v47
  %v218 = vpop.f32.mrf.mxu0
  %v219 = vadd.f32 %v121, %v218
  %220 = vmatmul.f32.gmra.mxu0 %v48
  %v221 = vpop.f32.mrf.mxu0
  %v222 = vadd.f32 %v121, %v221
  %223 = vmatmul.f32.gmra.mxu0 %v49
  %v224 = vpop.f32.mrf.mxu0
  %v225 = vadd.f32 %v121, %v224
  %226 = vmatmul.f32.gmra.mxu0 %v50
  %v227 = vpop.f32.mrf.mxu0
  %v228 = vadd.f32 %v121, %v227
  %229 = vmatmul.f32.gmra.mxu0 %v51
  %v230 = vpop.f32.mrf.mxu0
  %v231 = vadd.f32 %v121, %v230
  %232 = vmatmul.f32.gmra.mxu0 %v52
  %v233 = vpop.f32.mrf.mxu0
  %v234 = vadd.f32 %v121, %v233
  %235 = vmatmul.f32.gmra.mxu0 %v53
  %v236 = vpop.f32.mrf.mxu0
  %v237 = vadd.f32 %v121, %v236
  %238 = vmatmul.f32.gmra.mxu0 %v54
  %v239 = vpop.f32.mrf.mxu0
  %v240 = vadd.f32 %v121, %v239
  %241 = vdwg.mxu0
  %242 = vmatpush.msra.mxu0 %v116
  %243 = vmatpush.msra.mxu0 %v112
  %244 = vmatpush.msra.mxu0 %v108
  %245 = vmatpush.msra.mxu0 %v104
  %246 = vmatpush.msra.mxu0 %v100
  %247 = vmatpush.msra.mxu0 %v96
  %248 = vmatpush.msra.mxu0 %v92
  %249 = vmatpush.msra.mxu0 %v88
  %250 = vmatpush.msra.mxu0 %v84
  %251 = vmatpush.msra.mxu0 %v80
  %252 = vmatpush.msra.mxu0 %v76
  %253 = vmatpush.msra.mxu0 %v72
  %254 = vmatpush.msra.mxu0 %v68
  %255 = vmatpush.msra.mxu0 %v64
  %256 = vmatpush.msra.mxu0 %v60
  %257 = vmatpush.msra.mxu0 %v56
  %258 = vmatmul.f32.gmra.mxu0 %v23
  %v259 = vpop.f32.mrf.mxu0
  %v260 = vadd.f32 %v122, %v259
  %261 = vmatmul.f32.gmra.mxu0 %v24
  %v262 = vpop.f32.mrf.mxu0
  %v263 = vadd.f32 %v122, %v262
  %264 = vmatmul.f32.gmra.mxu0 %v25
  %v265 = vpop.f32.mrf.mxu0
  %v266 = vadd.f32 %v122, %v265
  %267 = vmatmul.f32.gmra.mxu0 %v26
  %v268 = vpop.f32.mrf.mxu0
  %v269 = vadd.f32 %v122, %v268
  %270 = vmatmul.f32.gmra.mxu0 %v27
  %v271 = vpop.f32.mrf.mxu0
  %v272 = vadd.f32 %v122, %v271
  %273 = vmatmul.f32.gmra.mxu0 %v28
  %v274 = vpop.f32.mrf.mxu0
  %v275 = vadd.f32 %v122, %v274
  %276 = vmatmul.f32.gmra.mxu0 %v29
  %v277 = vpop.f32.mrf.mxu0
  %v278 = vadd.f32 %v122, %v277
  %279 = vmatmul.f32.gmra.mxu0 %v30
  %v280 = vpop.f32.mrf.mxu0
  %v281 = vadd.f32 %v122, %v280
  %282 = vmatmul.f32.gmra.mxu0 %v31
  %v283 = vpop.f32.mrf.mxu0
  %v284 = vadd.f32 %v122, %v283
  %285 = vmatmul.f32.gmra.mxu0 %v32
  %v286 = vpop.f32.mrf.mxu0
  %v287 = vadd.f32 %v122, %v286
  %288 = vmatmul.f32.gmra.mxu0 %v33
  %v289 = vpop.f32.mrf.mxu0
  %v290 = vadd.f32 %v122, %v289
  %291 = vmatmul.f32.gmra.mxu0 %v34
  %v292 = vpop.f32.mrf.mxu0
  %v293 = vadd.f32 %v122, %v292
  %294 = vmatmul.f32.gmra.mxu0 %v35
  %v295 = vpop.f32.mrf.mxu0
  %v296 = vadd.f32 %v122, %v295
  %297 = vmatmul.f32.gmra.mxu0 %v36
  %v298 = vpop.f32.mrf.mxu0
  %v299 = vadd.f32 %v122, %v298
  %300 = vmatmul.f32.gmra.mxu0 %v37
  %v301 = vpop.f32.mrf.mxu0
  %v302 = vadd.f32 %v122, %v301
  %303 = vmatmul.f32.gmra.mxu0 %v38
  %v304 = vpop.f32.mrf.mxu0
  %v305 = vadd.f32 %v122, %v304
  %306 = vmatmul.f32.gmra.mxu0 %v39
  %v307 = vpop.f32.mrf.mxu0
  %v308 = vadd.f32 %v122, %v307
  %309 = vmatmul.f32.gmra.mxu0 %v40
  %v310 = vpop.f32.mrf.mxu0
  %v311 = vadd.f32 %v122, %v310
  %312 = vmatmul.f32.gmra.mxu0 %v41
  %v313 = vpop.f32.mrf.mxu0
  %v314 = vadd.f32 %v122, %v313
  %315 = vmatmul.f32.gmra.mxu0 %v42
  %v316 = vpop.f32.mrf.mxu0
  %v317 = vadd.f32 %v122, %v316
  %318 = vmatmul.f32.gmra.mxu0 %v43
  %v319 = vpop.f32.mrf.mxu0
  %v320 = vadd.f32 %v122, %v319
  %321 = vmatmul.f32.gmra.mxu0 %v44
  %v322 = vpop.f32.mrf.mxu0
  %v323 = vadd.f32 %v122, %v322
  %324 = vmatmul.f32.gmra.mxu0 %v45
  %v325 = vpop.f32.mrf.mxu0
  %v326 = vadd.f32 %v122, %v325
  %327 = vmatmul.f32.gmra.mxu0 %v46
  %v328 = vpop.f32.mrf.mxu0
  %v329 = vadd.f32 %v122, %v328
  %330 = vmatmul.f32.gmra.mxu0 %v47
  %v331 = vpop.f32.mrf.mxu0
  %v332 = vadd.f32 %v122, %v331
  %333 = vmatmul.f32.gmra.mxu0 %v48
  %v334 = vpop.f32.mrf.mxu0
  %v335 = vadd.f32 %v122, %v334
  %336 = vmatmul.f32.gmra.mxu0 %v49
  %v337 = vpop.f32.mrf.mxu0
  %v338 = vadd.f32 %v122, %v337
  %339 = vmatmul.f32.gmra.mxu0 %v50
  %v340 = vpop.f32.mrf.mxu0
  %v341 = vadd.f32 %v122, %v340
  %342 = vmatmul.f32.gmra.mxu0 %v51
  %v343 = vpop.f32.mrf.mxu0
  %v344 = vadd.f32 %v122, %v343
  %345 = vmatmul.f32.gmra.mxu0 %v52
  %v346 = vpop.f32.mrf.mxu0
  %v347 = vadd.f32 %v122, %v346
  %348 = vmatmul.f32.gmra.mxu0 %v53
  %v349 = vpop.f32.mrf.mxu0
  %v350 = vadd.f32 %v122, %v349
  %351 = vmatmul.f32.gmra.mxu0 %v54
  %v352 = vpop.f32.mrf.mxu0
  %v353 = vadd.f32 %v122, %v352
  %354 = vdwg.mxu0
  %355 = vmatpush.msra.mxu0 %v117
  %356 = vmatpush.msra.mxu0 %v113
  %357 = vmatpush.msra.mxu0 %v109
  %358 = vmatpush.msra.mxu0 %v105
  %359 = vmatpush.msra.mxu0 %v101
  %360 = vmatpush.msra.mxu0 %v97
  %361 = vmatpush.msra.mxu0 %v93
  %362 = vmatpush.msra.mxu0 %v89
  %363 = vmatpush.msra.mxu0 %v85
  %364 = vmatpush.msra.mxu0 %v81
  %365 = vmatpush.msra.mxu0 %v77
  %366 = vmatpush.msra.mxu0 %v73
  %367 = vmatpush.msra.mxu0 %v69
  %368 = vmatpush.msra.mxu0 %v65
  %369 = vmatpush.msra.mxu0 %v61
  %370 = vmatpush.msra.mxu0 %v57
  %371 = vmatmul.f32.gmra.mxu0 %v23
  %v372 = vpop.f32.mrf.mxu0
  %v373 = vadd.f32 %v123, %v372
  %374 = vmatmul.f32.gmra.mxu0 %v24
  %v375 = vpop.f32.mrf.mxu0
  %v376 = vadd.f32 %v123, %v375
  %377 = vmatmul.f32.gmra.mxu0 %v25
  %v378 = vpop.f32.mrf.mxu0
  %v379 = vadd.f32 %v123, %v378
  %380 = vmatmul.f32.gmra.mxu0 %v26
  %v381 = vpop.f32.mrf.mxu0
  %v382 = vadd.f32 %v123, %v381
  %383 = vmatmul.f32.gmra.mxu0 %v27
  %v384 = vpop.f32.mrf.mxu0
  %v385 = vadd.f32 %v123, %v384
  %386 = vmatmul.f32.gmra.mxu0 %v28
  %v387 = vpop.f32.mrf.mxu0
  %v388 = vadd.f32 %v123, %v387
  %389 = vmatmul.f32.gmra.mxu0 %v29
  %v390 = vpop.f32.mrf.mxu0
  %v391 = vadd.f32 %v123, %v390
  %392 = vmatmul.f32.gmra.mxu0 %v30
  %v393 = vpop.f32.mrf.mxu0
  %v394 = vadd.f32 %v123, %v393
  %395 = vmatmul.f32.gmra.mxu0 %v31
  %v396 = vpop.f32.mrf.mxu0
  %v397 = vadd.f32 %v123, %v396
  %398 = vmatmul.f32.gmra.mxu0 %v32
  %v399 = vpop.f32.mrf.mxu0
  %v400 = vadd.f32 %v123, %v399
  %401 = vmatmul.f32.gmra.mxu0 %v33
  %v402 = vpop.f32.mrf.mxu0
  %v403 = vadd.f32 %v123, %v402
  %404 = vmatmul.f32.gmra.mxu0 %v34
  %v405 = vpop.f32.mrf.mxu0
  %v406 = vadd.f32 %v123, %v405
  %407 = vmatmul.f32.gmra.mxu0 %v35
  %v408 = vpop.f32.mrf.mxu0
  %v409 = vadd.f32 %v123, %v408
  %410 = vmatmul.f32.gmra.mxu0 %v36
  %v411 = vpop.f32.mrf.mxu0
  %v412 = vadd.f32 %v123, %v411
  %413 = vmatmul.f32.gmra.mxu0 %v37
  %v414 = vpop.f32.mrf.mxu0
  %v415 = vadd.f32 %v123, %v414
  %416 = vmatmul.f32.gmra.mxu0 %v38
  %v417 = vpop.f32.mrf.mxu0
  %v418 = vadd.f32 %v123, %v417
  %419 = vmatmul.f32.gmra.mxu0 %v39
  %v420 = vpop.f32.mrf.mxu0
  %v421 = vadd.f32 %v123, %v420
  %422 = vmatmul.f32.gmra.mxu0 %v40
  %v423 = vpop.f32.mrf.mxu0
  %v424 = vadd.f32 %v123, %v423
  %425 = vmatmul.f32.gmra.mxu0 %v41
  %v426 = vpop.f32.mrf.mxu0
  %v427 = vadd.f32 %v123, %v426
  %428 = vmatmul.f32.gmra.mxu0 %v42
  %v429 = vpop.f32.mrf.mxu0
  %v430 = vadd.f32 %v123, %v429
  %431 = vmatmul.f32.gmra.mxu0 %v43
  %v432 = vpop.f32.mrf.mxu0
  %v433 = vadd.f32 %v123, %v432
  %434 = vmatmul.f32.gmra.mxu0 %v44
  %v435 = vpop.f32.mrf.mxu0
  %v436 = vadd.f32 %v123, %v435
  %437 = vmatmul.f32.gmra.mxu0 %v45
  %v438 = vpop.f32.mrf.mxu0
  %v439 = vadd.f32 %v123, %v438
  %440 = vmatmul.f32.gmra.mxu0 %v46
  %v441 = vpop.f32.mrf.mxu0
  %v442 = vadd.f32 %v123, %v441
  %443 = vmatmul.f32.gmra.mxu0 %v47
  %v444 = vpop.f32.mrf.mxu0
  %v445 = vadd.f32 %v123, %v444
  %446 = vmatmul.f32.gmra.mxu0 %v48
  %v447 = vpop.f32.mrf.mxu0
  %v448 = vadd.f32 %v123, %v447
  %449 = vmatmul.f32.gmra.mxu0 %v49
  %v450 = vpop.f32.mrf.mxu0
  %v451 = vadd.f32 %v123, %v450
  %452 = vmatmul.f32.gmra.mxu0 %v50
  %v453 = vpop.f32.mrf.mxu0
  %v454 = vadd.f32 %v123, %v453
  %455 = vmatmul.f32.gmra.mxu0 %v51
  %v456 = vpop.f32.mrf.mxu0
  %v457 = vadd.f32 %v123, %v456
  %458 = vmatmul.f32.gmra.mxu0 %v52
  %v459 = vpop.f32.mrf.mxu0
  %v460 = vadd.f32 %v123, %v459
  %461 = vmatmul.f32.gmra.mxu0 %v53
  %v462 = vpop.f32.mrf.mxu0
  %v463 = vadd.f32 %v123, %v462
  %464 = vmatmul.f32.gmra.mxu0 %v54
  %v465 = vpop.f32.mrf.mxu0
  %v466 = vadd.f32 %v123, %v465
  %467 = vdwg.mxu0
  %468 = vmatpush.msra.mxu0 %v118
  %469 = vmatpush.msra.mxu0 %v114
  %470 = vmatpush.msra.mxu0 %v110
  %471 = vmatpush.msra.mxu0 %v106
  %472 = vmatpush.msra.mxu0 %v102
  %473 = vmatpush.msra.mxu0 %v98
  %474 = vmatpush.msra.mxu0 %v94
  %475 = vmatpush.msra.mxu0 %v90
  %476 = vmatpush.msra.mxu0 %v86
  %477 = vmatpush.msra.mxu0 %v82
  %478 = vmatpush.msra.mxu0 %v78
  %479 = vmatpush.msra.mxu0 %v74
  %480 = vmatpush.msra.mxu0 %v70
  %481 = vmatpush.msra.mxu0 %v66
  %482 = vmatpush.msra.mxu0 %v62
  %483 = vmatpush.msra.mxu0 %v58
  %484 = vmatmul.f32.gmra.mxu0 %v23
  %v485 = vpop.f32.mrf.mxu0
  %v486 = vadd.f32 %v124, %v485
  %487 = vmatmul.f32.gmra.mxu0 %v24
  %v488 = vpop.f32.mrf.mxu0
  %v489 = vadd.f32 %v124, %v488
  %490 = vmatmul.f32.gmra.mxu0 %v25
  %v491 = vpop.f32.mrf.mxu0
  %v492 = vadd.f32 %v124, %v491
  %493 = vmatmul.f32.gmra.mxu0 %v26
  %v494 = vpop.f32.mrf.mxu0
  %v495 = vadd.f32 %v124, %v494
  %496 = vmatmul.f32.gmra.mxu0 %v27
  %v497 = vpop.f32.mrf.mxu0
  %v498 = vadd.f32 %v124, %v497
  %499 = vmatmul.f32.gmra.mxu0 %v28
  %v500 = vpop.f32.mrf.mxu0
  %v501 = vadd.f32 %v124, %v500
  %502 = vmatmul.f32.gmra.mxu0 %v29
  %v503 = vpop.f32.mrf.mxu0
  %v504 = vadd.f32 %v124, %v503
  %505 = vmatmul.f32.gmra.mxu0 %v30
  %v506 = vpop.f32.mrf.mxu0
  %v507 = vadd.f32 %v124, %v506
  %508 = vmatmul.f32.gmra.mxu0 %v31
  %v509 = vpop.f32.mrf.mxu0
  %v510 = vadd.f32 %v124, %v509
  %511 = vmatmul.f32.gmra.mxu0 %v32
  %v512 = vpop.f32.mrf.mxu0
  %v513 = vadd.f32 %v124, %v512
  %514 = vmatmul.f32.gmra.mxu0 %v33
  %v515 = vpop.f32.mrf.mxu0
  %v516 = vadd.f32 %v124, %v515
  %517 = vmatmul.f32.gmra.mxu0 %v34
  %v518 = vpop.f32.mrf.mxu0
  %v519 = vadd.f32 %v124, %v518
  %520 = vmatmul.f32.gmra.mxu0 %v35
  %v521 = vpop.f32.mrf.mxu0
  %v522 = vadd.f32 %v124, %v521
  %523 = vmatmul.f32.gmra.mxu0 %v36
  %v524 = vpop.f32.mrf.mxu0
  %v525 = vadd.f32 %v124, %v524
  %526 = vmatmul.f32.gmra.mxu0 %v37
  %v527 = vpop.f32.mrf.mxu0
  %v528 = vadd.f32 %v124, %v527
  %529 = vmatmul.f32.gmra.mxu0 %v38
  %v530 = vpop.f32.mrf.mxu0
  %v531 = vadd.f32 %v124, %v530
  %532 = vmatmul.f32.gmra.mxu0 %v39
  %v533 = vpop.f32.mrf.mxu0
  %v534 = vadd.f32 %v124, %v533
  %535 = vmatmul.f32.gmra.mxu0 %v40
  %v536 = vpop.f32.mrf.mxu0
  %v537 = vadd.f32 %v124, %v536
  %538 = vmatmul.f32.gmra.mxu0 %v41
  %v539 = vpop.f32.mrf.mxu0
  %v540 = vadd.f32 %v124, %v539
  %541 = vmatmul.f32.gmra.mxu0 %v42
  %v542 = vpop.f32.mrf.mxu0
  %v543 = vadd.f32 %v124, %v542
  %544 = vmatmul.f32.gmra.mxu0 %v43
  %v545 = vpop.f32.mrf.mxu0
  %v546 = vadd.f32 %v124, %v545
  %547 = vmatmul.f32.gmra.mxu0 %v44
  %v548 = vpop.f32.mrf.mxu0
  %v549 = vadd.f32 %v124, %v548
  %550 = vmatmul.f32.gmra.mxu0 %v45
  %v551 = vpop.f32.mrf.mxu0
  %v552 = vadd.f32 %v124, %v551
  %553 = vmatmul.f32.gmra.mxu0 %v46
  %v554 = vpop.f32.mrf.mxu0
  %v555 = vadd.f32 %v124, %v554
  %556 = vmatmul.f32.gmra.mxu0 %v47
  %v557 = vpop.f32.mrf.mxu0
  %v558 = vadd.f32 %v124, %v557
  %559 = vmatmul.f32.gmra.mxu0 %v48
  %v560 = vpop.f32.mrf.mxu0
  %v561 = vadd.f32 %v124, %v560
  %562 = vmatmul.f32.gmra.mxu0 %v49
  %v563 = vpop.f32.mrf.mxu0
  %v564 = vadd.f32 %v124, %v563
  %565 = vmatmul.f32.gmra.mxu0 %v50
  %v566 = vpop.f32.mrf.mxu0
  %v567 = vadd.f32 %v124, %v566
  %568 = vmatmul.f32.gmra.mxu0 %v51
  %v569 = vpop.f32.mrf.mxu0
  %v570 = vadd.f32 %v124, %v569
  %571 = vmatmul.f32.gmra.mxu0 %v52
  %v572 = vpop.f32.mrf.mxu0
  %v573 = vadd.f32 %v124, %v572
  %574 = vmatmul.f32.gmra.mxu0 %v53
  %v575 = vpop.f32.mrf.mxu0
  %v576 = vadd.f32 %v124, %v575
  %577 = vmatmul.f32.gmra.mxu0 %v54
  %v578 = vpop.f32.mrf.mxu0
  %v579 = vadd.f32 %v124, %v578
  %580 = vdwg.mxu0
  %v581 = vmax.f32 %v147, 0.0
  %v582 = vmax.f32 %v260, 0.0
  %v583 = vmax.f32 %v373, 0.0
  %v584 = vmax.f32 %v486, 0.0
  %v585 = vmax.f32 %v150, 0.0
  %v586 = vmax.f32 %v263, 0.0
  %v587 = vmax.f32 %v376, 0.0
  %v588 = vmax.f32 %v489, 0.0
  %v589 = vmax.f32 %v153, 0.0
  %v590 = vmax.f32 %v266, 0.0
  %v591 = vmax.f32 %v379, 0.0
  %v592 = vmax.f32 %v492, 0.0
  %v593 = vmax.f32 %v156, 0.0
  %v594 = vmax.f32 %v269, 0.0
  %v595 = vmax.f32 %v382, 0.0
  %v596 = vmax.f32 %v495, 0.0
  %v597 = vmax.f32 %v159, 0.0
  %v598 = vmax.f32 %v272, 0.0
  %v599 = vmax.f32 %v385, 0.0
  %v600 = vmax.f32 %v498, 0.0
  %v601 = vmax.f32 %v162, 0.0
  %v602 = vmax.f32 %v275, 0.0
  %v603 = vmax.f32 %v388, 0.0
  %v604 = vmax.f32 %v501, 0.0
  %v605 = vmax.f32 %v165, 0.0
  %v606 = vmax.f32 %v278, 0.0
  %v607 = vmax.f32 %v391, 0.0
  %v608 = vmax.f32 %v504, 0.0
  %v609 = vmax.f32 %v168, 0.0
  %v610 = vmax.f32 %v281, 0.0
  %v611 = vmax.f32 %v394, 0.0
  %v612 = vmax.f32 %v507, 0.0
  %v613 = vmax.f32 %v171, 0.0
  %v614 = vmax.f32 %v284, 0.0
  %v615 = vmax.f32 %v397, 0.0
  %v616 = vmax.f32 %v510, 0.0
  %v617 = vmax.f32 %v174, 0.0
  %v618 = vmax.f32 %v287, 0.0
  %v619 = vmax.f32 %v400, 0.0
  %v620 = vmax.f32 %v513, 0.0
  %v621 = vmax.f32 %v177, 0.0
  %v622 = vmax.f32 %v290, 0.0
  %v623 = vmax.f32 %v403, 0.0
  %v624 = vmax.f32 %v516, 0.0
  %v625 = vmax.f32 %v180, 0.0
  %v626 = vmax.f32 %v293, 0.0
  %v627 = vmax.f32 %v406, 0.0
  %v628 = vmax.f32 %v519, 0.0
  %v629 = vmax.f32 %v183, 0.0
  %v630 = vmax.f32 %v296, 0.0
  %v631 = vmax.f32 %v409, 0.0
  %v632 = vmax.f32 %v522, 0.0
  %v633 = vmax.f32 %v186, 0.0
  %v634 = vmax.f32 %v299, 0.0
  %v635 = vmax.f32 %v412, 0.0
  %v636 = vmax.f32 %v525, 0.0
  %v637 = vmax.f32 %v189, 0.0
  %v638 = vmax.f32 %v302, 0.0
  %v639 = vmax.f32 %v415, 0.0
  %v640 = vmax.f32 %v528, 0.0
  %v641 = vmax.f32 %v192, 0.0
  %v642 = vmax.f32 %v305, 0.0
  %v643 = vmax.f32 %v418, 0.0
  %v644 = vmax.f32 %v531, 0.0
  %v645 = vmax.f32 %v195, 0.0
  %v646 = vmax.f32 %v308, 0.0
  %v647 = vmax.f32 %v421, 0.0
  %v648 = vmax.f32 %v534, 0.0
  %v649 = vmax.f32 %v198, 0.0
  %v650 = vmax.f32 %v311, 0.0
  %v651 = vmax.f32 %v424, 0.0
  %v652 = vmax.f32 %v537, 0.0
  %v653 = vmax.f32 %v201, 0.0
  %v654 = vmax.f32 %v314, 0.0
  %v655 = vmax.f32 %v427, 0.0
  %v656 = vmax.f32 %v540, 0.0
  %v657 = vmax.f32 %v204, 0.0
  %v658 = vmax.f32 %v317, 0.0
  %v659 = vmax.f32 %v430, 0.0
  %v660 = vmax.f32 %v543, 0.0
  %v661 = vmax.f32 %v207, 0.0
  %v662 = vmax.f32 %v320, 0.0
  %v663 = vmax.f32 %v433, 0.0
  %v664 = vmax.f32 %v546, 0.0
  %v665 = vmax.f32 %v210, 0.0
  %v666 = vmax.f32 %v323, 0.0
  %v667 = vmax.f32 %v436, 0.0
  %v668 = vmax.f32 %v549, 0.0
  %v669 = vmax.f32 %v213, 0.0
  %v670 = vmax.f32 %v326, 0.0
  %v671 = vmax.f32 %v439, 0.0
  %v672 = vmax.f32 %v552, 0.0
  %v673 = vmax.f32 %v216, 0.0
  %v674 = vmax.f32 %v329, 0.0
  %v675 = vmax.f32 %v442, 0.0
  %v676 = vmax.f32 %v555, 0.0
  %v677 = vmax.f32 %v219, 0.0
  %v678 = vmax.f32 %v332, 0.0
  %v679 = vmax.f32 %v445, 0.0
  %v680 = vmax.f32 %v558, 0.0
  %v681 = vmax.f32 %v222, 0.0
  %v682 = vmax.f32 %v335, 0.0
  %v683 = vmax.f32 %v448, 0.0
  %v684 = vmax.f32 %v561, 0.0
  %v685 = vmax.f32 %v225, 0.0
  %v686 = vmax.f32 %v338, 0.0
  %v687 = vmax.f32 %v451, 0.0
  %v688 = vmax.f32 %v564, 0.0
  %v689 = vmax.f32 %v228, 0.0
  %v690 = vmax.f32 %v341, 0.0
  %v691 = vmax.f32 %v454, 0.0
  %v692 = vmax.f32 %v567, 0.0
  %v693 = vmax.f32 %v231, 0.0
  %v694 = vmax.f32 %v344, 0.0
  %v695 = vmax.f32 %v457, 0.0
  %v696 = vmax.f32 %v570, 0.0
  %v697 = vmax.f32 %v234, 0.0
  %v698 = vmax.f32 %v347, 0.0
  %v699 = vmax.f32 %v460, 0.0
  %v700 = vmax.f32 %v573, 0.0
  %v701 = vmax.f32 %v237, 0.0
  %v702 = vmax.f32 %v350, 0.0
  %v703 = vmax.f32 %v463, 0.0
  %v704 = vmax.f32 %v576, 0.0
  %v705 = vmax.f32 %v240, 0.0
  %v706 = vmax.f32 %v353, 0.0
  %v707 = vmax.f32 %v466, 0.0
  %v708 = vmax.f32 %v579, 0.0
  %v709 = vld [vmem:[%s3] sm:$0xff]
  %v710 = vld [vmem:[%s3 + $0x8] sm:$0xff]
  %v711 = vld [vmem:[%s3 + $0x10] sm:$0xff]
  %v712 = vld [vmem:[%s3 + $0x18] sm:$0xff]
  %v713 = vld [vmem:[%s3 + $0x20] sm:$0xff]
  %v714 = vld [vmem:[%s3 + $0x28] sm:$0xff]
  %v715 = vld [vmem:[%s3 + $0x30] sm:$0xff]
  %v716 = vld [vmem:[%s3 + $0x38] sm:$0xff]
  %v717 = vld [vmem:[%s3 + $0x40] sm:$0xff]
  %v718 = vld [vmem:[%s3 + $0x48] sm:$0xff]
  %v719 = vld [vmem:[%s3 + $0x50] sm:$0xff]
  %v720 = vld [vmem:[%s3 + $0x58] sm:$0xff]
  %v721 = vld [vmem:[%s3 + $0x60] sm:$0xff]
  %v722 = vld [vmem:[%s3 + $0x68] sm:$0xff]
  %v723 = vld [vmem:[%s3 + $0x70] sm:$0xff]
  %v724 = vld [vmem:[%s3 + $0x78] sm:$0xff]
  %v725 = vld [vmem:[%s3 + $0x80] sm:$0xff]
  %v726 = vld [vmem:[%s3 + $0x88] sm:$0xff]
  %v727 = vld [vmem:[%s3 + $0x90] sm:$0xff]
  %v728 = vld [vmem:[%s3 + $0x98] sm:$0xff]
  %v729 = vld [vmem:[%s3 + $0xa0] sm:$0xff]
  %v730 = vld [vmem:[%s3 + $0xa8] sm:$0xff]
  %v731 = vld [vmem:[%s3 + $0xb0] sm:$0xff]
  %v732 = vld [vmem:[%s3 + $0xb8] sm:$0xff]
  %v733 = vld [vmem:[%s3 + $0xc0] sm:$0xff]
  %v734 = vld [vmem:[%s3 + $0xc8] sm:$0xff]
  %v735 = vld [vmem:[%s3 + $0xd0] sm:$0xff]
  %v736 = vld [vmem:[%s3 + $0xd8] sm:$0xff]
  %v737 = vld [vmem:[%s3 + $0xe0] sm:$0xff]
  %v738 = vld [vmem:[%s3 + $0xe8] sm:$0xff]
  %v739 = vld [vmem:[%s3 + $0xf0] sm:$0xff]
  %v740 = vld [vmem:[%s3 + $0xf8] sm:$0xff]
  %v741 = vld [vmem:[%s3 + $0x100] sm:$0xff]
  %v742 = vld [vmem:[%s3 + $0x108] sm:$0xff]
  %v743 = vld [vmem:[%s3 + $0x110] sm:$0xff]
  %v744 = vld [vmem:[%s3 + $0x118] sm:$0xff]
  %v745 = vld [vmem:[%s3 + $0x120] sm:$0xff]
  %v746 = vld [vmem:[%s3 + $0x128] sm:$0xff]
  %v747 = vld [vmem:[%s3 + $0x130] sm:$0xff]
  %v748 = vld [vmem:[%s3 + $0x138] sm:$0xff]
  %v749 = vld [vmem:[%s3 + $0x140] sm:$0xff]
  %v750 = vld [vmem:[%s3 + $0x148] sm:$0xff]
  %v751 = vld [vmem:[%s3 + $0x150] sm:$0xff]
  %v752 = vld [vmem:[%s3 + $0x158] sm:$0xff]
  %v753 = vld [vmem:[%s3 + $0x160] sm:$0xff]
  %v754 = vld [vmem:[%s3 + $0x168] sm:$0xff]
  %v755 = vld [vmem:[%s3 + $0x170] sm:$0xff]
  %v756 = vld [vmem:[%s3 + $0x178] sm:$0xff]
  %v757 = vld [vmem:[%s3 + $0x180] sm:$0xff]
  %v758 = vld [vmem:[%s3 + $0x188] sm:$0xff]
  %v759 = vld [vmem:[%s3 + $0x190] sm:$0xff]
  %v760 = vld [vmem:[%s3 + $0x198] sm:$0xff]
  %v761 = vld [vmem:[%s3 + $0x1a0] sm:$0xff]
  %v762 = vld [vmem:[%s3 + $0x1a8] sm:$0xff]
  %v763 = vld [vmem:[%s3 + $0x1b0] sm:$0xff]
  %v764 = vld [vmem:[%s3 + $0x1b8] sm:$0xff]
  %v765 = vld [vmem:[%s3 + $0x1c0] sm:$0xff]
  %v766 = vld [vmem:[%s3 + $0x1c8] sm:$0xff]
  %v767 = vld [vmem:[%s3 + $0x1d0] sm:$0xff]
  %v768 = vld [vmem:[%s3 + $0x1d8] sm:$0xff]
  %v769 = vld [vmem:[%s3 + $0x1e0] sm:$0xff]
  %v770 = vld [vmem:[%s3 + $0x1e8] sm:$0xff]
  %v771 = vld [vmem:[%s3 + $0x1f0] sm:$0xff]
  %v772 = vld [vmem:[%s3 + $0x1f8] sm:$0xff]
  %v773 = vld [vmem:[%s4] sm:$0x1]
  %v775 = vperm.slane %v773, 0
  %777 = vmatpush.msra.mxu0 %v724
  %778 = vmatpush.msra.mxu0 %v723
  %779 = vmatpush.msra.mxu0 %v722
  %780 = vmatpush.msra.mxu0 %v721
  %781 = vmatpush.msra.mxu0 %v720
  %782 = vmatpush.msra.mxu0 %v719
  %783 = vmatpush.msra.mxu0 %v718
  %784 = vmatpush.msra.mxu0 %v717
  %785 = vmatpush.msra.mxu0 %v716
  %786 = vmatpush.msra.mxu0 %v715
  %787 = vmatpush.msra.mxu0 %v714
  %788 = vmatpush.msra.mxu0 %v713
  %789 = vmatpush.msra.mxu0 %v712
  %790 = vmatpush.msra.mxu0 %v711
  %791 = vmatpush.msra.mxu0 %v710
  %792 = vmatpush.msra.mxu0 %v709
  %793 = vmatmul.f32.gmra.mxu0 %v581
  %v794 = vpop.f32.mrf.mxu0
  %v795 = vadd.f32 %v775, %v794
  %796 = vmatmul.f32.gmra.mxu0 %v585
  %v797 = vpop.f32.mrf.mxu0
  %v798 = vadd.f32 %v775, %v797
  %799 = vmatmul.f32.gmra.mxu0 %v589
  %v800 = vpop.f32.mrf.mxu0
  %v801 = vadd.f32 %v775, %v800
  %802 = vmatmul.f32.gmra.mxu0 %v593
  %v803 = vpop.f32.mrf.mxu0
  %v804 = vadd.f32 %v775, %v803
  %805 = vmatmul.f32.gmra.mxu0 %v597
  %v806 = vpop.f32.mrf.mxu0
  %v807 = vadd.f32 %v775, %v806
  %808 = vmatmul.f32.gmra.mxu0 %v601
  %v809 = vpop.f32.mrf.mxu0
  %v810 = vadd.f32 %v775, %v809
  %811 = vmatmul.f32.gmra.mxu0 %v605
  %v812 = vpop.f32.mrf.mxu0
  %v813 = vadd.f32 %v775, %v812
  %814 = vmatmul.f32.gmra.mxu0 %v609
  %v815 = vpop.f32.mrf.mxu0
  %v816 = vadd.f32 %v775, %v815
  %817 = vmatmul.f32.gmra.mxu0 %v613
  %v818 = vpop.f32.mrf.mxu0
  %v819 = vadd.f32 %v775, %v818
  %820 = vmatmul.f32.gmra.mxu0 %v617
  %v821 = vpop.f32.mrf.mxu0
  %v822 = vadd.f32 %v775, %v821
  %823 = vmatmul.f32.gmra.mxu0 %v621
  %v824 = vpop.f32.mrf.mxu0
  %v825 = vadd.f32 %v775, %v824
  %826 = vmatmul.f32.gmra.mxu0 %v625
  %v827 = vpop.f32.mrf.mxu0
  %v828 = vadd.f32 %v775, %v827
  %829 = vmatmul.f32.gmra.mxu0 %v629
  %v830 = vpop.f32.mrf.mxu0
  %v831 = vadd.f32 %v775, %v830
  %832 = vmatmul.f32.gmra.mxu0 %v633
  %v833 = vpop.f32.mrf.mxu0
  %v834 = vadd.f32 %v775, %v833
  %835 = vmatmul.f32.gmra.mxu0 %v637
  %v836 = vpop.f32.mrf.mxu0
  %v837 = vadd.f32 %v775, %v836
  %838 = vmatmul.f32.gmra.mxu0 %v641
  %v839 = vpop.f32.mrf.mxu0
  %v840 = vadd.f32 %v775, %v839
  %841 = vmatmul.f32.gmra.mxu0 %v645
  %v842 = vpop.f32.mrf.mxu0
  %v843 = vadd.f32 %v775, %v842
  %844 = vmatmul.f32.gmra.mxu0 %v649
  %v845 = vpop.f32.mrf.mxu0
  %v846 = vadd.f32 %v775, %v845
  %847 = vmatmul.f32.gmra.mxu0 %v653
  %v848 = vpop.f32.mrf.mxu0
  %v849 = vadd.f32 %v775, %v848
  %850 = vmatmul.f32.gmra.mxu0 %v657
  %v851 = vpop.f32.mrf.mxu0
  %v852 = vadd.f32 %v775, %v851
  %853 = vmatmul.f32.gmra.mxu0 %v661
  %v854 = vpop.f32.mrf.mxu0
  %v855 = vadd.f32 %v775, %v854
  %856 = vmatmul.f32.gmra.mxu0 %v665
  %v857 = vpop.f32.mrf.mxu0
  %v858 = vadd.f32 %v775, %v857
  %859 = vmatmul.f32.gmra.mxu0 %v669
  %v860 = vpop.f32.mrf.mxu0
  %v861 = vadd.f32 %v775, %v860
  %862 = vmatmul.f32.gmra.mxu0 %v673
  %v863 = vpop.f32.mrf.mxu0
  %v864 = vadd.f32 %v775, %v863
  %865 = vmatmul.f32.gmra.mxu0 %v677
  %v866 = vpop.f32.mrf.mxu0
  %v867 = vadd.f32 %v775, %v866
  %868 = vmatmul.f32.gmra.mxu0 %v681
  %v869 = vpop.f32.mrf.mxu0
  %v870 = vadd.f32 %v775, %v869
  %871 = vmatmul.f32.gmra.mxu0 %v685
  %v872 = vpop.f32.mrf.mxu0
  %v873 = vadd.f32 %v775, %v872
  %874 = vmatmul.f32.gmra.mxu0 %v689
  %v875 = vpop.f32.mrf.mxu0
  %v876 = vadd.f32 %v775, %v875
  %877 = vmatmul.f32.gmra.mxu0 %v693
  %v878 = vpop.f32.mrf.mxu0
  %v879 = vadd.f32 %v775, %v878
  %880 = vmatmul.f32.gmra.mxu0 %v697
  %v881 = vpop.f32.mrf.mxu0
  %v882 = vadd.f32 %v775, %v881
  %883 = vmatmul.f32.gmra.mxu0 %v701
  %v884 = vpop.f32.mrf.mxu0
  %v885 = vadd.f32 %v775, %v884
  %886 = vmatmul.f32.gmra.mxu0 %v705
  %v887 = vpop.f32.mrf.mxu0
  %v888 = vadd.f32 %v775, %v887
  %889 = vdwg.mxu0
  %890 = vmatpush.msra.mxu0 %v740
  %891 = vmatpush.msra.mxu0 %v739
  %892 = vmatpush.msra.mxu0 %v738
  %893 = vmatpush.msra.mxu0 %v737
  %894 = vmatpush.msra.mxu0 %v736
  %895 = vmatpush.msra.mxu0 %v735
  %896 = vmatpush.msra.mxu0 %v734
  %897 = vmatpush.msra.mxu0 %v733
  %898 = vmatpush.msra.mxu0 %v732
  %899 = vmatpush.msra.mxu0 %v731
  %900 = vmatpush.msra.mxu0 %v730
  %901 = vmatpush.msra.mxu0 %v729
  %902 = vmatpush.msra.mxu0 %v728
  %903 = vmatpush.msra.mxu0 %v727
  %904 = vmatpush.msra.mxu0 %v726
  %905 = vmatpush.msra.mxu0 %v725
  %906 = vmatmul.f32.gmra.mxu0 %v582
  %v907 = vpop.f32.mrf.mxu0
  %v908 = vadd.f32 %v795, %v907
  %909 = vmatmul.f32.gmra.mxu0 %v586
  %v910 = vpop.f32.mrf.mxu0
  %v911 = vadd.f32 %v798, %v910
  %912 = vmatmul.f32.gmra.mxu0 %v590
  %v913 = vpop.f32.mrf.mxu0
  %v914 = vadd.f32 %v801, %v913
  %915 = vmatmul.f32.gmra.mxu0 %v594
  %v916 = vpop.f32.mrf.mxu0
  %v917 = vadd.f32 %v804, %v916
  %918 = vmatmul.f32.gmra.mxu0 %v598
  %v919 = vpop.f32.mrf.mxu0
  %v920 = vadd.f32 %v807, %v919
  %921 = vmatmul.f32.gmra.mxu0 %v602
  %v922 = vpop.f32.mrf.mxu0
  %v923 = vadd.f32 %v810, %v922
  %924 = vmatmul.f32.gmra.mxu0 %v606
  %v925 = vpop.f32.mrf.mxu0
  %v926 = vadd.f32 %v813, %v925
  %927 = vmatmul.f32.gmra.mxu0 %v610
  %v928 = vpop.f32.mrf.mxu0
  %v929 = vadd.f32 %v816, %v928
  %930 = vmatmul.f32.gmra.mxu0 %v614
  %v931 = vpop.f32.mrf.mxu0
  %v932 = vadd.f32 %v819, %v931
  %933 = vmatmul.f32.gmra.mxu0 %v618
  %v934 = vpop.f32.mrf.mxu0
  %v935 = vadd.f32 %v822, %v934
  %936 = vmatmul.f32.gmra.mxu0 %v622
  %v937 = vpop.f32.mrf.mxu0
  %v938 = vadd.f32 %v825, %v937
  %939 = vmatmul.f32.gmra.mxu0 %v626
  %v940 = vpop.f32.mrf.mxu0
  %v941 = vadd.f32 %v828, %v940
  %942 = vmatmul.f32.gmra.mxu0 %v630
  %v943 = vpop.f32.mrf.mxu0
  %v944 = vadd.f32 %v831, %v943
  %945 = vmatmul.f32.gmra.mxu0 %v634
  %v946 = vpop.f32.mrf.mxu0
  %v947 = vadd.f32 %v834, %v946
  %948 = vmatmul.f32.gmra.mxu0 %v638
  %v949 = vpop.f32.mrf.mxu0
  %v950 = vadd.f32 %v837, %v949
  %951 = vmatmul.f32.gmra.mxu0 %v642
  %v952 = vpop.f32.mrf.mxu0
  %v953 = vadd.f32 %v840, %v952
  %954 = vmatmul.f32.gmra.mxu0 %v646
  %v955 = vpop.f32.mrf.mxu0
  %v956 = vadd.f32 %v843, %v955
  %957 = vmatmul.f32.gmra.mxu0 %v650
  %v958 = vpop.f32.mrf.mxu0
  %v959 = vadd.f32 %v846, %v958
  %960 = vmatmul.f32.gmra.mxu0 %v654
  %v961 = vpop.f32.mrf.mxu0
  %v962 = vadd.f32 %v849, %v961
  %963 = vmatmul.f32.gmra.mxu0 %v658
  %v964 = vpop.f32.mrf.mxu0
  %v965 = vadd.f32 %v852, %v964
  %966 = vmatmul.f32.gmra.mxu0 %v662
  %v967 = vpop.f32.mrf.mxu0
  %v968 = vadd.f32 %v855, %v967
  %969 = vmatmul.f32.gmra.mxu0 %v666
  %v970 = vpop.f32.mrf.mxu0
  %v971 = vadd.f32 %v858, %v970
  %972 = vmatmul.f32.gmra.mxu0 %v670
  %v973 = vpop.f32.mrf.mxu0
  %v974 = vadd.f32 %v861, %v973
  %975 = vmatmul.f32.gmra.mxu0 %v674
  %v976 = vpop.f32.mrf.mxu0
  %v977 = vadd.f32 %v864, %v976
  %978 = vmatmul.f32.gmra.mxu0 %v678
  %v979 = vpop.f32.mrf.mxu0
  %v980 = vadd.f32 %v867, %v979
  %981 = vmatmul.f32.gmra.mxu0 %v682
  %v982 = vpop.f32.mrf.mxu0
  %v983 = vadd.f32 %v870, %v982
  %984 = vmatmul.f32.gmra.mxu0 %v686
  %v985 = vpop.f32.mrf.mxu0
  %v986 = vadd.f32 %v873, %v985
  %987 = vmatmul.f32.gmra.mxu0 %v690
  %v988 = vpop.f32.mrf.mxu0
  %v989 = vadd.f32 %v876, %v988
  %990 = vmatmul.f32.gmra.mxu0 %v694
  %v991 = vpop.f32.mrf.mxu0
  %v992 = vadd.f32 %v879, %v991
  %993 = vmatmul.f32.gmra.mxu0 %v698
  %v994 = vpop.f32.mrf.mxu0
  %v995 = vadd.f32 %v882, %v994
  %996 = vmatmul.f32.gmra.mxu0 %v702
  %v997 = vpop.f32.mrf.mxu0
  %v998 = vadd.f32 %v885, %v997
  %999 = vmatmul.f32.gmra.mxu0 %v706
  %v1000 = vpop.f32.mrf.mxu0
  %v1001 = vadd.f32 %v888, %v1000
  %1002 = vdwg.mxu0
  %1003 = vmatpush.msra.mxu0 %v756
  %1004 = vmatpush.msra.mxu0 %v755
  %1005 = vmatpush.msra.mxu0 %v754
  %1006 = vmatpush.msra.mxu0 %v753
  %1007 = vmatpush.msra.mxu0 %v752
  %1008 = vmatpush.msra.mxu0 %v751
  %1009 = vmatpush.msra.mxu0 %v750
  %1010 = vmatpush.msra.mxu0 %v749
  %1011 = vmatpush.msra.mxu0 %v748
  %1012 = vmatpush.msra.mxu0 %v747
  %1013 = vmatpush.msra.mxu0 %v746
  %1014 = vmatpush.msra.mxu0 %v745
  %1015 = vmatpush.msra.mxu0 %v744
  %1016 = vmatpush.msra.mxu0 %v743
  %1017 = vmatpush.msra.mxu0 %v742
  %1018 = vmatpush.msra.mxu0 %v741
  %1019 = vmatmul.f32.gmra.mxu0 %v583
  %v1020 = vpop.f32.mrf.mxu0
  %v1021 = vadd.f32 %v908, %v1020
  %1022 = vmatmul.f32.gmra.mxu0 %v587
  %v1023 = vpop.f32.mrf.mxu0
  %v1024 = vadd.f32 %v911, %v1023
  %1025 = vmatmul.f32.gmra.mxu0 %v591
  %v1026 = vpop.f32.mrf.mxu0
  %v1027 = vadd.f32 %v914, %v1026
  %1028 = vmatmul.f32.gmra.mxu0 %v595
  %v1029 = vpop.f32.mrf.mxu0
  %v1030 = vadd.f32 %v917, %v1029
  %1031 = vmatmul.f32.gmra.mxu0 %v599
  %v1032 = vpop.f32.mrf.mxu0
  %v1033 = vadd.f32 %v920, %v1032
  %1034 = vmatmul.f32.gmra.mxu0 %v603
  %v1035 = vpop.f32.mrf.mxu0
  %v1036 = vadd.f32 %v923, %v1035
  %1037 = vmatmul.f32.gmra.mxu0 %v607
  %v1038 = vpop.f32.mrf.mxu0
  %v1039 = vadd.f32 %v926, %v1038
  %1040 = vmatmul.f32.gmra.mxu0 %v611
  %v1041 = vpop.f32.mrf.mxu0
  %v1042 = vadd.f32 %v929, %v1041
  %1043 = vmatmul.f32.gmra.mxu0 %v615
  %v1044 = vpop.f32.mrf.mxu0
  %v1045 = vadd.f32 %v932, %v1044
  %1046 = vmatmul.f32.gmra.mxu0 %v619
  %v1047 = vpop.f32.mrf.mxu0
  %v1048 = vadd.f32 %v935, %v1047
  %1049 = vmatmul.f32.gmra.mxu0 %v623
  %v1050 = vpop.f32.mrf.mxu0
  %v1051 = vadd.f32 %v938, %v1050
  %1052 = vmatmul.f32.gmra.mxu0 %v627
  %v1053 = vpop.f32.mrf.mxu0
  %v1054 = vadd.f32 %v941, %v1053
  %1055 = vmatmul.f32.gmra.mxu0 %v631
  %v1056 = vpop.f32.mrf.mxu0
  %v1057 = vadd.f32 %v944, %v1056
  %1058 = vmatmul.f32.gmra.mxu0 %v635
  %v1059 = vpop.f32.mrf.mxu0
  %v1060 = vadd.f32 %v947, %v1059
  %1061 = vmatmul.f32.gmra.mxu0 %v639
  %v1062 = vpop.f32.mrf.mxu0
  %v1063 = vadd.f32 %v950, %v1062
  %1064 = vmatmul.f32.gmra.mxu0 %v643
  %v1065 = vpop.f32.mrf.mxu0
  %v1066 = vadd.f32 %v953, %v1065
  %1067 = vmatmul.f32.gmra.mxu0 %v647
  %v1068 = vpop.f32.mrf.mxu0
  %v1069 = vadd.f32 %v956, %v1068
  %1070 = vmatmul.f32.gmra.mxu0 %v651
  %v1071 = vpop.f32.mrf.mxu0
  %v1072 = vadd.f32 %v959, %v1071
  %1073 = vmatmul.f32.gmra.mxu0 %v655
  %v1074 = vpop.f32.mrf.mxu0
  %v1075 = vadd.f32 %v962, %v1074
  %1076 = vmatmul.f32.gmra.mxu0 %v659
  %v1077 = vpop.f32.mrf.mxu0
  %v1078 = vadd.f32 %v965, %v1077
  %1079 = vmatmul.f32.gmra.mxu0 %v663
  %v1080 = vpop.f32.mrf.mxu0
  %v1081 = vadd.f32 %v968, %v1080
  %1082 = vmatmul.f32.gmra.mxu0 %v667
  %v1083 = vpop.f32.mrf.mxu0
  %v1084 = vadd.f32 %v971, %v1083
  %1085 = vmatmul.f32.gmra.mxu0 %v671
  %v1086 = vpop.f32.mrf.mxu0
  %v1087 = vadd.f32 %v974, %v1086
  %1088 = vmatmul.f32.gmra.mxu0 %v675
  %v1089 = vpop.f32.mrf.mxu0
  %v1090 = vadd.f32 %v977, %v1089
  %1091 = vmatmul.f32.gmra.mxu0 %v679
  %v1092 = vpop.f32.mrf.mxu0
  %v1093 = vadd.f32 %v980, %v1092
  %1094 = vmatmul.f32.gmra.mxu0 %v683
  %v1095 = vpop.f32.mrf.mxu0
  %v1096 = vadd.f32 %v983, %v1095
  %1097 = vmatmul.f32.gmra.mxu0 %v687
  %v1098 = vpop.f32.mrf.mxu0
  %v1099 = vadd.f32 %v986, %v1098
  %1100 = vmatmul.f32.gmra.mxu0 %v691
  %v1101 = vpop.f32.mrf.mxu0
  %v1102 = vadd.f32 %v989, %v1101
  %1103 = vmatmul.f32.gmra.mxu0 %v695
  %v1104 = vpop.f32.mrf.mxu0
  %v1105 = vadd.f32 %v992, %v1104
  %1106 = vmatmul.f32.gmra.mxu0 %v699
  %v1107 = vpop.f32.mrf.mxu0
  %v1108 = vadd.f32 %v995, %v1107
  %1109 = vmatmul.f32.gmra.mxu0 %v703
  %v1110 = vpop.f32.mrf.mxu0
  %v1111 = vadd.f32 %v998, %v1110
  %1112 = vmatmul.f32.gmra.mxu0 %v707
  %v1113 = vpop.f32.mrf.mxu0
  %v1114 = vadd.f32 %v1001, %v1113
  %1115 = vdwg.mxu0
  %1116 = vmatpush.msra.mxu0 %v772
  %1117 = vmatpush.msra.mxu0 %v771
  %1118 = vmatpush.msra.mxu0 %v770
  %1119 = vmatpush.msra.mxu0 %v769
  %1120 = vmatpush.msra.mxu0 %v768
  %1121 = vmatpush.msra.mxu0 %v767
  %1122 = vmatpush.msra.mxu0 %v766
  %1123 = vmatpush.msra.mxu0 %v765
  %1124 = vmatpush.msra.mxu0 %v764
  %1125 = vmatpush.msra.mxu0 %v763
  %1126 = vmatpush.msra.mxu0 %v762
  %1127 = vmatpush.msra.mxu0 %v761
  %1128 = vmatpush.msra.mxu0 %v760
  %1129 = vmatpush.msra.mxu0 %v759
  %1130 = vmatpush.msra.mxu0 %v758
  %1131 = vmatpush.msra.mxu0 %v757
  %1132 = vmatmul.f32.gmra.mxu0 %v584
  %v1133 = vpop.f32.mrf.mxu0
  %v1134 = vadd.f32 %v1021, %v1133
  %1135 = vmatmul.f32.gmra.mxu0 %v588
  %v1136 = vpop.f32.mrf.mxu0
  %v1137 = vadd.f32 %v1024, %v1136
  %1138 = vmatmul.f32.gmra.mxu0 %v592
  %v1139 = vpop.f32.mrf.mxu0
  %v1140 = vadd.f32 %v1027, %v1139
  %1141 = vmatmul.f32.gmra.mxu0 %v596
  %v1142 = vpop.f32.mrf.mxu0
  %v1143 = vadd.f32 %v1030, %v1142
  %1144 = vmatmul.f32.gmra.mxu0 %v600
  %v1145 = vpop.f32.mrf.mxu0
  %v1146 = vadd.f32 %v1033, %v1145
  %1147 = vmatmul.f32.gmra.mxu0 %v604
  %v1148 = vpop.f32.mrf.mxu0
  %v1149 = vadd.f32 %v1036, %v1148
  %1150 = vmatmul.f32.gmra.mxu0 %v608
  %v1151 = vpop.f32.mrf.mxu0
  %v1152 = vadd.f32 %v1039, %v1151
  %1153 = vmatmul.f32.gmra.mxu0 %v612
  %v1154 = vpop.f32.mrf.mxu0
  %v1155 = vadd.f32 %v1042, %v1154
  %1156 = vmatmul.f32.gmra.mxu0 %v616
  %v1157 = vpop.f32.mrf.mxu0
  %v1158 = vadd.f32 %v1045, %v1157
  %1159 = vmatmul.f32.gmra.mxu0 %v620
  %v1160 = vpop.f32.mrf.mxu0
  %v1161 = vadd.f32 %v1048, %v1160
  %1162 = vmatmul.f32.gmra.mxu0 %v624
  %v1163 = vpop.f32.mrf.mxu0
  %v1164 = vadd.f32 %v1051, %v1163
  %1165 = vmatmul.f32.gmra.mxu0 %v628
  %v1166 = vpop.f32.mrf.mxu0
  %v1167 = vadd.f32 %v1054, %v1166
  %1168 = vmatmul.f32.gmra.mxu0 %v632
  %v1169 = vpop.f32.mrf.mxu0
  %v1170 = vadd.f32 %v1057, %v1169
  %1171 = vmatmul.f32.gmra.mxu0 %v636
  %v1172 = vpop.f32.mrf.mxu0
  %v1173 = vadd.f32 %v1060, %v1172
  %1174 = vmatmul.f32.gmra.mxu0 %v640
  %v1175 = vpop.f32.mrf.mxu0
  %v1176 = vadd.f32 %v1063, %v1175
  %1177 = vmatmul.f32.gmra.mxu0 %v644
  %v1178 = vpop.f32.mrf.mxu0
  %v1179 = vadd.f32 %v1066, %v1178
  %1180 = vmatmul.f32.gmra.mxu0 %v648
  %v1181 = vpop.f32.mrf.mxu0
  %v1182 = vadd.f32 %v1069, %v1181
  %1183 = vmatmul.f32.gmra.mxu0 %v652
  %v1184 = vpop.f32.mrf.mxu0
  %v1185 = vadd.f32 %v1072, %v1184
  %1186 = vmatmul.f32.gmra.mxu0 %v656
  %v1187 = vpop.f32.mrf.mxu0
  %v1188 = vadd.f32 %v1075, %v1187
  %1189 = vmatmul.f32.gmra.mxu0 %v660
  %v1190 = vpop.f32.mrf.mxu0
  %v1191 = vadd.f32 %v1078, %v1190
  %1192 = vmatmul.f32.gmra.mxu0 %v664
  %v1193 = vpop.f32.mrf.mxu0
  %v1194 = vadd.f32 %v1081, %v1193
  %1195 = vmatmul.f32.gmra.mxu0 %v668
  %v1196 = vpop.f32.mrf.mxu0
  %v1197 = vadd.f32 %v1084, %v1196
  %1198 = vmatmul.f32.gmra.mxu0 %v672
  %v1199 = vpop.f32.mrf.mxu0
  %v1200 = vadd.f32 %v1087, %v1199
  %1201 = vmatmul.f32.gmra.mxu0 %v676
  %v1202 = vpop.f32.mrf.mxu0
  %v1203 = vadd.f32 %v1090, %v1202
  %1204 = vmatmul.f32.gmra.mxu0 %v680
  %v1205 = vpop.f32.mrf.mxu0
  %v1206 = vadd.f32 %v1093, %v1205
  %1207 = vmatmul.f32.gmra.mxu0 %v684
  %v1208 = vpop.f32.mrf.mxu0
  %v1209 = vadd.f32 %v1096, %v1208
  %1210 = vmatmul.f32.gmra.mxu0 %v688
  %v1211 = vpop.f32.mrf.mxu0
  %v1212 = vadd.f32 %v1099, %v1211
  %1213 = vmatmul.f32.gmra.mxu0 %v692
  %v1214 = vpop.f32.mrf.mxu0
  %v1215 = vadd.f32 %v1102, %v1214
  %1216 = vmatmul.f32.gmra.mxu0 %v696
  %v1217 = vpop.f32.mrf.mxu0
  %v1218 = vadd.f32 %v1105, %v1217
  %1219 = vmatmul.f32.gmra.mxu0 %v700
  %v1220 = vpop.f32.mrf.mxu0
  %v1221 = vadd.f32 %v1108, %v1220
  %1222 = vmatmul.f32.gmra.mxu0 %v704
  %v1223 = vpop.f32.mrf.mxu0
  %v1224 = vadd.f32 %v1111, %v1223
  %1225 = vmatmul.f32.gmra.mxu0 %v708
  %v1226 = vpop.f32.mrf.mxu0
  %v1227 = vadd.f32 %v1114, %v1226
  %1228 = vdwg.mxu0
  %v1229 = vld [vmem:[%s5] sm:$0xff]
  %v1230 = vld [vmem:[%s5 + $0x8] sm:$0xff]
  %v1231 = vld [vmem:[%s5 + $0x10] sm:$0xff]
  %v1232 = vld [vmem:[%s5 + $0x18] sm:$0xff]
  %v1233 = vld [vmem:[%s5 + $0x20] sm:$0xff]
  %v1234 = vld [vmem:[%s5 + $0x28] sm:$0xff]
  %v1235 = vld [vmem:[%s5 + $0x30] sm:$0xff]
  %v1236 = vld [vmem:[%s5 + $0x38] sm:$0xff]
  %v1237 = vld [vmem:[%s5 + $0x40] sm:$0xff]
  %v1238 = vld [vmem:[%s5 + $0x48] sm:$0xff]
  %v1239 = vld [vmem:[%s5 + $0x50] sm:$0xff]
  %v1240 = vld [vmem:[%s5 + $0x58] sm:$0xff]
  %v1241 = vld [vmem:[%s5 + $0x60] sm:$0xff]
  %v1242 = vld [vmem:[%s5 + $0x68] sm:$0xff]
  %v1243 = vld [vmem:[%s5 + $0x70] sm:$0xff]
  %v1244 = vld [vmem:[%s5 + $0x78] sm:$0xff]
  %v1245 = vld [vmem:[%s5 + $0x80] sm:$0xff]
  %v1246 = vld [vmem:[%s5 + $0x88] sm:$0xff]
  %v1247 = vld [vmem:[%s5 + $0x90] sm:$0xff]
  %v1248 = vld [vmem:[%s5 + $0x98] sm:$0xff]
  %v1249 = vld [vmem:[%s5 + $0xa0] sm:$0xff]
  %v1250 = vld [vmem:[%s5 + $0xa8] sm:$0xff]
  %v1251 = vld [vmem:[%s5 + $0xb0] sm:$0xff]
  %v1252 = vld [vmem:[%s5 + $0xb8] sm:$0xff]
  %v1253 = vld [vmem:[%s5 + $0xc0] sm:$0xff]
  %v1254 = vld [vmem:[%s5 + $0xc8] sm:$0xff]
  %v1255 = vld [vmem:[%s5 + $0xd0] sm:$0xff]
  %v1256 = vld [vmem:[%s5 + $0xd8] sm:$0xff]
  %v1257 = vld [vmem:[%s5 + $0xe0] sm:$0xff]
  %v1258 = vld [vmem:[%s5 + $0xe8] sm:$0xff]
  %v1259 = vld [vmem:[%s5 + $0xf0] sm:$0xff]
  %v1260 = vld [vmem:[%s5 + $0xf8] sm:$0xff]
  %1293 = vrot.lane.b32.xlu0 %v1134, 12
  %v1294 = vpop.permute.xlu0 %1293
  %1295 = vrot.lane.b32.xlu0 %v1137, 12
  %v1296 = vpop.permute.xlu0 %1295
  %1297 = vrot.lane.b32.xlu0 %v1140, 12
  %v1298 = vpop.permute.xlu0 %1297
  %1299 = vrot.lane.b32.xlu0 %v1143, 12
  %v1300 = vpop.permute.xlu0 %1299
  %1301 = vrot.lane.b32.xlu0 %v1146, 12
  %v1302 = vpop.permute.xlu0 %1301
  %1303 = vrot.lane.b32.xlu0 %v1149, 12
  %v1304 = vpop.permute.xlu0 %1303
  %1305 = vrot.lane.b32.xlu0 %v1152, 12
  %v1306 = vpop.permute.xlu0 %1305
  %1307 = vrot.lane.b32.xlu0 %v1155, 12
  %v1308 = vpop.permute.xlu0 %1307
  %1309 = vrot.lane.b32.xlu0 %v1158, 12
  %v1310 = vpop.permute.xlu0 %1309
  %1311 = vrot.lane.b32.xlu0 %v1161, 12
  %v1312 = vpop.permute.xlu0 %1311
  %1313 = vrot.lane.b32.xlu0 %v1164, 12
  %v1314 = vpop.permute.xlu0 %1313
  %1315 = vrot.lane.b32.xlu0 %v1167, 12
  %v1316 = vpop.permute.xlu0 %1315
  %1317 = vrot.lane.b32.xlu0 %v1170, 12
  %v1318 = vpop.permute.xlu0 %1317
  %1319 = vrot.lane.b32.xlu0 %v1173, 12
  %v1320 = vpop.permute.xlu0 %1319
  %1321 = vrot.lane.b32.xlu0 %v1176, 12
  %v1322 = vpop.permute.xlu0 %1321
  %1323 = vrot.lane.b32.xlu0 %v1179, 12
  %v1324 = vpop.permute.xlu0 %1323
  %1325 = vrot.lane.b32.xlu0 %v1182, 12
  %v1326 = vpop.permute.xlu0 %1325
  %1327 = vrot.lane.b32.xlu0 %v1185, 12
  %v1328 = vpop.permute.xlu0 %1327
  %1329 = vrot.lane.b32.xlu0 %v1188, 12
  %v1330 = vpop.permute.xlu0 %1329
  %1331 = vrot.lane.b32.xlu0 %v1191, 12
  %v1332 = vpop.permute.xlu0 %1331
  %1333 = vrot.lane.b32.xlu0 %v1194, 12
  %v1334 = vpop.permute.xlu0 %1333
  %1335 = vrot.lane.b32.xlu0 %v1197, 12
  %v1336 = vpop.permute.xlu0 %1335
  %1337 = vrot.lane.b32.xlu0 %v1200, 12
  %v1338 = vpop.permute.xlu0 %1337
  %1339 = vrot.lane.b32.xlu0 %v1203, 12
  %v1340 = vpop.permute.xlu0 %1339
  %1341 = vrot.lane.b32.xlu0 %v1206, 12
  %v1342 = vpop.permute.xlu0 %1341
  %1343 = vrot.lane.b32.xlu0 %v1209, 12
  %v1344 = vpop.permute.xlu0 %1343
  %1345 = vrot.lane.b32.xlu0 %v1212, 12
  %v1346 = vpop.permute.xlu0 %1345
  %1347 = vrot.lane.b32.xlu0 %v1215, 12
  %v1348 = vpop.permute.xlu0 %1347
  %1349 = vrot.lane.b32.xlu0 %v1218, 12
  %v1350 = vpop.permute.xlu0 %1349
  %1351 = vrot.lane.b32.xlu0 %v1221, 12
  %v1352 = vpop.permute.xlu0 %1351
  %1353 = vrot.lane.b32.xlu0 %v1224, 12
  %v1354 = vpop.permute.xlu0 %1353
  %1355 = vrot.lane.b32.xlu0 %v1227, 12
  %v1356 = vpop.permute.xlu0 %1355
  %v1389 = vmul.f32 %v1229, %v1294
  %v1390 = vmul.f32 %v1230, %v1296
  %v1391 = vmul.f32 %v1231, %v1298
  %v1392 = vmul.f32 %v1232, %v1300
  %v1393 = vmul.f32 %v1233, %v1302
  %v1394 = vmul.f32 %v1234, %v1304
  %v1395 = vmul.f32 %v1235, %v1306
  %v1396 = vmul.f32 %v1236, %v1308
  %v1397 = vmul.f32 %v1237, %v1310
  %v1398 = vmul.f32 %v1238, %v1312
  %v1399 = vmul.f32 %v1239, %v1314
  %v1400 = vmul.f32 %v1240, %v1316
  %v1401 = vmul.f32 %v1241, %v1318
  %v1402 = vmul.f32 %v1242, %v1320
  %v1403 = vmul.f32 %v1243, %v1322
  %v1404 = vmul.f32 %v1244, %v1324
  %v1405 = vmul.f32 %v1245, %v1326
  %v1406 = vmul.f32 %v1246, %v1328
  %v1407 = vmul.f32 %v1247, %v1330
  %v1408 = vmul.f32 %v1248, %v1332
  %v1409 = vmul.f32 %v1249, %v1334
  %v1410 = vmul.f32 %v1250, %v1336
  %v1411 = vmul.f32 %v1251, %v1338
  %v1412 = vmul.f32 %v1252, %v1340
  %v1413 = vmul.f32 %v1253, %v1342
  %v1414 = vmul.f32 %v1254, %v1344
  %v1415 = vmul.f32 %v1255, %v1346
  %v1416 = vmul.f32 %v1256, %v1348
  %v1417 = vmul.f32 %v1257, %v1350
  %v1418 = vmul.f32 %v1258, %v1352
  %v1419 = vmul.f32 %v1259, %v1354
  %v1420 = vmul.f32 %v1260, %v1356
  %1453 = vrot.lane.b32.xlu0 %v1389, 116
  %v1454 = vpop.permute.xlu0 %1453
  %1455 = vrot.lane.b32.xlu0 %v1390, 116
  %v1456 = vpop.permute.xlu0 %1455
  %1457 = vrot.lane.b32.xlu0 %v1391, 116
  %v1458 = vpop.permute.xlu0 %1457
  %1459 = vrot.lane.b32.xlu0 %v1392, 116
  %v1460 = vpop.permute.xlu0 %1459
  %1461 = vrot.lane.b32.xlu0 %v1393, 116
  %v1462 = vpop.permute.xlu0 %1461
  %1463 = vrot.lane.b32.xlu0 %v1394, 116
  %v1464 = vpop.permute.xlu0 %1463
  %1465 = vrot.lane.b32.xlu0 %v1395, 116
  %v1466 = vpop.permute.xlu0 %1465
  %1467 = vrot.lane.b32.xlu0 %v1396, 116
  %v1468 = vpop.permute.xlu0 %1467
  %1469 = vrot.lane.b32.xlu0 %v1397, 116
  %v1470 = vpop.permute.xlu0 %1469
  %1471 = vrot.lane.b32.xlu0 %v1398, 116
  %v1472 = vpop.permute.xlu0 %1471
  %1473 = vrot.lane.b32.xlu0 %v1399, 116
  %v1474 = vpop.permute.xlu0 %1473
  %1475 = vrot.lane.b32.xlu0 %v1400, 116
  %v1476 = vpop.permute.xlu0 %1475
  %1477 = vrot.lane.b32.xlu0 %v1401, 116
  %v1478 = vpop.permute.xlu0 %1477
  %1479 = vrot.lane.b32.xlu0 %v1402, 116
  %v1480 = vpop.permute.xlu0 %1479
  %1481 = vrot.lane.b32.xlu0 %v1403, 116
  %v1482 = vpop.permute.xlu0 %1481
  %1483 = vrot.lane.b32.xlu0 %v1404, 116
  %v1484 = vpop.permute.xlu0 %1483
  %1485 = vrot.lane.b32.xlu0 %v1405, 116
  %v1486 = vpop.permute.xlu0 %1485
  %1487 = vrot.lane.b32.xlu0 %v1406, 116
  %v1488 = vpop.permute.xlu0 %1487
  %1489 = vrot.lane.b32.xlu0 %v1407, 116
  %v1490 = vpop.permute.xlu0 %1489
  %1491 = vrot.lane.b32.xlu0 %v1408, 116
  %v1492 = vpop.permute.xlu0 %1491
  %1493 = vrot.lane.b32.xlu0 %v1409, 116
  %v1494 = vpop.permute.xlu0 %1493
  %1495 = vrot.lane.b32.xlu0 %v1410, 116
  %v1496 = vpop.permute.xlu0 %1495
  %1497 = vrot.lane.b32.xlu0 %v1411, 116
  %v1498 = vpop.permute.xlu0 %1497
  %1499 = vrot.lane.b32.xlu0 %v1412, 116
  %v1500 = vpop.permute.xlu0 %1499
  %1501 = vrot.lane.b32.xlu0 %v1413, 116
  %v1502 = vpop.permute.xlu0 %1501
  %1503 = vrot.lane.b32.xlu0 %v1414, 116
  %v1504 = vpop.permute.xlu0 %1503
  %1505 = vrot.lane.b32.xlu0 %v1415, 116
  %v1506 = vpop.permute.xlu0 %1505
  %1507 = vrot.lane.b32.xlu0 %v1416, 116
  %v1508 = vpop.permute.xlu0 %1507
  %1509 = vrot.lane.b32.xlu0 %v1417, 116
  %v1510 = vpop.permute.xlu0 %1509
  %1511 = vrot.lane.b32.xlu0 %v1418, 116
  %v1512 = vpop.permute.xlu0 %1511
  %1513 = vrot.lane.b32.xlu0 %v1419, 116
  %v1514 = vpop.permute.xlu0 %1513
  %1515 = vrot.lane.b32.xlu0 %v1420, 116
  %v1516 = vpop.permute.xlu0 %1515
  %v1549 = vadd.f32 %v1229, %v1454
  %v1550 = vadd.f32 %v1230, %v1456
  %v1551 = vadd.f32 %v1231, %v1458
  %v1552 = vadd.f32 %v1232, %v1460
  %v1553 = vadd.f32 %v1233, %v1462
  %v1554 = vadd.f32 %v1234, %v1464
  %v1555 = vadd.f32 %v1235, %v1466
  %v1556 = vadd.f32 %v1236, %v1468
  %v1557 = vadd.f32 %v1237, %v1470
  %v1558 = vadd.f32 %v1238, %v1472
  %v1559 = vadd.f32 %v1239, %v1474
  %v1560 = vadd.f32 %v1240, %v1476
  %v1561 = vadd.f32 %v1241, %v1478
  %v1562 = vadd.f32 %v1242, %v1480
  %v1563 = vadd.f32 %v1243, %v1482
  %v1564 = vadd.f32 %v1244, %v1484
  %v1565 = vadd.f32 %v1245, %v1486
  %v1566 = vadd.f32 %v1246, %v1488
  %v1567 = vadd.f32 %v1247, %v1490
  %v1568 = vadd.f32 %v1248, %v1492
  %v1569 = vadd.f32 %v1249, %v1494
  %v1570 = vadd.f32 %v1250, %v1496
  %v1571 = vadd.f32 %v1251, %v1498
  %v1572 = vadd.f32 %v1252, %v1500
  %v1573 = vadd.f32 %v1253, %v1502
  %v1574 = vadd.f32 %v1254, %v1504
  %v1575 = vadd.f32 %v1255, %v1506
  %v1576 = vadd.f32 %v1256, %v1508
  %v1577 = vadd.f32 %v1257, %v1510
  %v1578 = vadd.f32 %v1258, %v1512
  %v1579 = vadd.f32 %v1259, %v1514
  %v1580 = vadd.f32 %v1260, %v1516
  %v1581 = vmul.f32 %v1134, 1.442695
  %v1582 = vpow.pop %v1581
  %v1583 = vmul.f32 %v1137, 1.442695
  %v1584 = vpow.pop %v1583
  %v1585 = vmul.f32 %v1140, 1.442695
  %v1586 = vpow.pop %v1585
  %v1587 = vmul.f32 %v1143, 1.442695
  %v1588 = vpow.pop %v1587
  %v1589 = vmul.f32 %v1146, 1.442695
  %v1590 = vpow.pop %v1589
  %v1591 = vmul.f32 %v1149, 1.442695
  %v1592 = vpow.pop %v1591
  %v1593 = vmul.f32 %v1152, 1.442695
  %v1594 = vpow.pop %v1593
  %v1595 = vmul.f32 %v1155, 1.442695
  %v1596 = vpow.pop %v1595
  %v1597 = vmul.f32 %v1158, 1.442695
  %v1598 = vpow.pop %v1597
  %v1599 = vmul.f32 %v1161, 1.442695
  %v1600 = vpow.pop %v1599
  %v1601 = vmul.f32 %v1164, 1.442695
  %v1602 = vpow.pop %v1601
  %v1603 = vmul.f32 %v1167, 1.442695
  %v1604 = vpow.pop %v1603
  %v1605 = vmul.f32 %v1170, 1.442695
  %v1606 = vpow.pop %v1605
  %v1607 = vmul.f32 %v1173, 1.442695
  %v1608 = vpow.pop %v1607
  %v1609 = vmul.f32 %v1176, 1.442695
  %v1610 = vpow.pop %v1609
  %v1611 = vmul.f32 %v1179, 1.442695
  %v1612 = vpow.pop %v1611
  %v1613 = vmul.f32 %v1182, 1.442695
  %v1614 = vpow.pop %v1613
  %v1615 = vmul.f32 %v1185, 1.442695
  %v1616 = vpow.pop %v1615
  %v1617 = vmul.f32 %v1188, 1.442695
  %v1618 = vpow.pop %v1617
  %v1619 = vmul.f32 %v1191, 1.442695
  %v1620 = vpow.pop %v1619
  %v1621 = vmul.f32 %v1194, 1.442695
  %v1622 = vpow.pop %v1621
  %v1623 = vmul.f32 %v1197, 1.442695
  %v1624 = vpow.pop %v1623
  %v1625 = vmul.f32 %v1200, 1.442695
  %v1626 = vpow.pop %v1625
  %v1627 = vmul.f32 %v1203, 1.442695
  %v1628 = vpow.pop %v1627
  %v1629 = vmul.f32 %v1206, 1.442695
  %v1630 = vpow.pop %v1629
  %v1631 = vmul.f32 %v1209, 1.442695
  %v1632 = vpow.pop %v1631
  %v1633 = vmul.f32 %v1212, 1.442695
  %v1634 = vpow.pop %v1633
  %v1635 = vmul.f32 %v1215, 1.442695
  %v1636 = vpow.pop %v1635
  %v1637 = vmul.f32 %v1218, 1.442695
  %v1638 = vpow.pop %v1637
  %v1639 = vmul.f32 %v1221, 1.442695
  %v1640 = vpow.pop %v1639
  %v1641 = vmul.f32 %v1224, 1.442695
  %v1642 = vpow.pop %v1641
  %v1643 = vmul.f32 %v1227, 1.442695
  %v1644 = vpow.pop %v1643
  %v1645 = vmul.f32 %v1229, %v1582
  %v1646 = vmul.f32 %v1230, %v1584
  %v1647 = vmul.f32 %v1231, %v1586
  %v1648 = vmul.f32 %v1232, %v1588
  %v1649 = vmul.f32 %v1233, %v1590
  %v1650 = vmul.f32 %v1234, %v1592
  %v1651 = vmul.f32 %v1235, %v1594
  %v1652 = vmul.f32 %v1236, %v1596
  %v1653 = vmul.f32 %v1237, %v1598
  %v1654 = vmul.f32 %v1238, %v1600
  %v1655 = vmul.f32 %v1239, %v1602
  %v1656 = vmul.f32 %v1240, %v1604
  %v1657 = vmul.f32 %v1241, %v1606
  %v1658 = vmul.f32 %v1242, %v1608
  %v1659 = vmul.f32 %v1243, %v1610
  %v1660 = vmul.f32 %v1244, %v1612
  %v1661 = vmul.f32 %v1245, %v1614
  %v1662 = vmul.f32 %v1246, %v1616
  %v1663 = vmul.f32 %v1247, %v1618
  %v1664 = vmul.f32 %v1248, %v1620
  %v1665 = vmul.f32 %v1249, %v1622
  %v1666 = vmul.f32 %v1250, %v1624
  %v1667 = vmul.f32 %v1251, %v1626
  %v1668 = vmul.f32 %v1252, %v1628
  %v1669 = vmul.f32 %v1253, %v1630
  %v1670 = vmul.f32 %v1254, %v1632
  %v1671 = vmul.f32 %v1255, %v1634
  %v1672 = vmul.f32 %v1256, %v1636
  %v1673 = vmul.f32 %v1257, %v1638
  %v1674 = vmul.f32 %v1258, %v1640
  %v1675 = vmul.f32 %v1259, %v1642
  %v1676 = vmul.f32 %v1260, %v1644
  %v1677 = vsub.f32 %v1645, 1.0
  %v1678 = vsub.f32 %v1646, 1.0
  %v1679 = vsub.f32 %v1647, 1.0
  %v1680 = vsub.f32 %v1648, 1.0
  %v1681 = vsub.f32 %v1649, 1.0
  %v1682 = vsub.f32 %v1650, 1.0
  %v1683 = vsub.f32 %v1651, 1.0
  %v1684 = vsub.f32 %v1652, 1.0
  %v1685 = vsub.f32 %v1653, 1.0
  %v1686 = vsub.f32 %v1654, 1.0
  %v1687 = vsub.f32 %v1655, 1.0
  %v1688 = vsub.f32 %v1656, 1.0
  %v1689 = vsub.f32 %v1657, 1.0
  %v1690 = vsub.f32 %v1658, 1.0
  %v1691 = vsub.f32 %v1659, 1.0
  %v1692 = vsub.f32 %v1660, 1.0
  %v1693 = vsub.f32 %v1661, 1.0
  %v1694 = vsub.f32 %v1662, 1.0
  %v1695 = vsub.f32 %v1663, 1.0
  %v1696 = vsub.f32 %v1664, 1.0
  %v1697 = vsub.f32 %v1665, 1.0
  %v1698 = vsub.f32 %v1666, 1.0
  %v1699 = vsub.f32 %v1667, 1.0
  %v1700 = vsub.f32 %v1668, 1.0
  %v1701 = vsub.f32 %v1669, 1.0
  %v1702 = vsub.f32 %v1670, 1.0
  %v1703 = vsub.f32 %v1671, 1.0
  %v1704 = vsub.f32 %v1672, 1.0
  %v1705 = vsub.f32 %v1673, 1.0
  %v1706 = vsub.f32 %v1674, 1.0
  %v1707 = vsub.f32 %v1675, 1.0
  %v1708 = vsub.f32 %v1676, 1.0
  %v1709 = vmul.f32 %v1677, 0.5
  %v1710 = vmul.f32 %v1678, 0.5
  %v1711 = vmul.f32 %v1679, 0.5
  %v1712 = vmul.f32 %v1680, 0.5
  %v1713 = vmul.f32 %v1681, 0.5
  %v1714 = vmul.f32 %v1682, 0.5
  %v1715 = vmul.f32 %v1683, 0.5
  %v1716 = vmul.f32 %v1684, 0.5
  %v1717 = vmul.f32 %v1685, 0.5
  %v1718 = vmul.f32 %v1686, 0.5
  %v1719 = vmul.f32 %v1687, 0.5
  %v1720 = vmul.f32 %v1688, 0.5
  %v1721 = vmul.f32 %v1689, 0.5
  %v1722 = vmul.f32 %v1690, 0.5
  %v1723 = vmul.f32 %v1691, 0.5
  %v1724 = vmul.f32 %v1692, 0.5
  %v1725 = vmul.f32 %v1693, 0.5
  %v1726 = vmul.f32 %v1694, 0.5
  %v1727 = vmul.f32 %v1695, 0.5
  %v1728 = vmul.f32 %v1696, 0.5
  %v1729 = vmul.f32 %v1697, 0.5
  %v1730 = vmul.f32 %v1698, 0.5
  %v1731 = vmul.f32 %v1699, 0.5
  %v1732 = vmul.f32 %v1700, 0.5
  %v1733 = vmul.f32 %v1701, 0.5
  %v1734 = vmul.f32 %v1702, 0.5
  %v1735 = vmul.f32 %v1703, 0.5
  %v1736 = vmul.f32 %v1704, 0.5
  %v1737 = vmul.f32 %v1705, 0.5
  %v1738 = vmul.f32 %v1706, 0.5
  %v1739 = vmul.f32 %v1707, 0.5
  %v1740 = vmul.f32 %v1708, 0.5
  %1773 = vrot.lane.b32.xlu0 %v1709, 116
  %v1774 = vpop.permute.xlu0 %1773
  %1775 = vrot.lane.b32.xlu0 %v1710, 116
  %v1776 = vpop.permute.xlu0 %1775
  %1777 = vrot.lane.b32.xlu0 %v1711, 116
  %v1778 = vpop.permute.xlu0 %1777
  %1779 = vrot.lane.b32.xlu0 %v1712, 116
  %v1780 = vpop.permute.xlu0 %1779
  %1781 = vrot.lane.b32.xlu0 %v1713, 116
  %v1782 = vpop.permute.xlu0 %1781
  %1783 = vrot.lane.b32.xlu0 %v1714, 116
  %v1784 = vpop.permute.xlu0 %1783
  %1785 = vrot.lane.b32.xlu0 %v1715, 116
  %v1786 = vpop.permute.xlu0 %1785
  %1787 = vrot.lane.b32.xlu0 %v1716, 116
  %v1788 = vpop.permute.xlu0 %1787
  %1789 = vrot.lane.b32.xlu0 %v1717, 116
  %v1790 = vpop.permute.xlu0 %1789
  %1791 = vrot.lane.b32.xlu0 %v1718, 116
  %v1792 = vpop.permute.xlu0 %1791
  %1793 = vrot.lane.b32.xlu0 %v1719, 116
  %v1794 = vpop.permute.xlu0 %1793
  %1795 = vrot.lane.b32.xlu0 %v1720, 116
  %v1796 = vpop.permute.xlu0 %1795
  %1797 = vrot.lane.b32.xlu0 %v1721, 116
  %v1798 = vpop.permute.xlu0 %1797
  %1799 = vrot.lane.b32.xlu0 %v1722, 116
  %v1800 = vpop.permute.xlu0 %1799
  %1801 = vrot.lane.b32.xlu0 %v1723, 116
  %v1802 = vpop.permute.xlu0 %1801
  %1803 = vrot.lane.b32.xlu0 %v1724, 116
  %v1804 = vpop.permute.xlu0 %1803
  %1805 = vrot.lane.b32.xlu0 %v1725, 116
  %v1806 = vpop.permute.xlu0 %1805
  %1807 = vrot.lane.b32.xlu0 %v1726, 116
  %v1808 = vpop.permute.xlu0 %1807
  %1809 = vrot.lane.b32.xlu0 %v1727, 116
  %v1810 = vpop.permute.xlu0 %1809
  %1811 = vrot.lane.b32.xlu0 %v1728, 116
  %v1812 = vpop.permute.xlu0 %1811
  %1813 = vrot.lane.b32.xlu0 %v1729, 116
  %v1814 = vpop.permute.xlu0 %1813
  %1815 = vrot.lane.b32.xlu0 %v1730, 116
  %v1816 = vpop.permute.xlu0 %1815
  %1817 = vrot.lane.b32.xlu0 %v1731, 116
  %v1818 = vpop.permute.xlu0 %1817
  %1819 = vrot.lane.b32.xlu0 %v1732, 116
  %v1820 = vpop.permute.xlu0 %1819
  %1821 = vrot.lane.b32.xlu0 %v1733, 116
  %v1822 = vpop.permute.xlu0 %1821
  %1823 = vrot.lane.b32.xlu0 %v1734, 116
  %v1824 = vpop.permute.xlu0 %1823
  %1825 = vrot.lane.b32.xlu0 %v1735, 116
  %v1826 = vpop.permute.xlu0 %1825
  %1827 = vrot.lane.b32.xlu0 %v1736, 116
  %v1828 = vpop.permute.xlu0 %1827
  %1829 = vrot.lane.b32.xlu0 %v1737, 116
  %v1830 = vpop.permute.xlu0 %1829
  %1831 = vrot.lane.b32.xlu0 %v1738, 116
  %v1832 = vpop.permute.xlu0 %1831
  %1833 = vrot.lane.b32.xlu0 %v1739, 116
  %v1834 = vpop.permute.xlu0 %1833
  %1835 = vrot.lane.b32.xlu0 %v1740, 116
  %v1836 = vpop.permute.xlu0 %1835
  %v1869 = vsub.f32 %v1549, %v1774
  %v1870 = vsub.f32 %v1550, %v1776
  %v1871 = vsub.f32 %v1551, %v1778
  %v1872 = vsub.f32 %v1552, %v1780
  %v1873 = vsub.f32 %v1553, %v1782
  %v1874 = vsub.f32 %v1554, %v1784
  %v1875 = vsub.f32 %v1555, %v1786
  %v1876 = vsub.f32 %v1556, %v1788
  %v1877 = vsub.f32 %v1557, %v1790
  %v1878 = vsub.f32 %v1558, %v1792
  %v1879 = vsub.f32 %v1559, %v1794
  %v1880 = vsub.f32 %v1560, %v1796
  %v1881 = vsub.f32 %v1561, %v1798
  %v1882 = vsub.f32 %v1562, %v1800
  %v1883 = vsub.f32 %v1563, %v1802
  %v1884 = vsub.f32 %v1564, %v1804
  %v1885 = vsub.f32 %v1565, %v1806
  %v1886 = vsub.f32 %v1566, %v1808
  %v1887 = vsub.f32 %v1567, %v1810
  %v1888 = vsub.f32 %v1568, %v1812
  %v1889 = vsub.f32 %v1569, %v1814
  %v1890 = vsub.f32 %v1570, %v1816
  %v1891 = vsub.f32 %v1571, %v1818
  %v1892 = vsub.f32 %v1572, %v1820
  %v1893 = vsub.f32 %v1573, %v1822
  %v1894 = vsub.f32 %v1574, %v1824
  %v1895 = vsub.f32 %v1575, %v1826
  %v1896 = vsub.f32 %v1576, %v1828
  %v1897 = vsub.f32 %v1577, %v1830
  %v1898 = vsub.f32 %v1578, %v1832
  %v1899 = vsub.f32 %v1579, %v1834
  %v1900 = vsub.f32 %v1580, %v1836
  %v1901 = vadd.f32 %v1549, %v1774
  %v1902 = vadd.f32 %v1550, %v1776
  %v1903 = vadd.f32 %v1551, %v1778
  %v1904 = vadd.f32 %v1552, %v1780
  %v1905 = vadd.f32 %v1553, %v1782
  %v1906 = vadd.f32 %v1554, %v1784
  %v1907 = vadd.f32 %v1555, %v1786
  %v1908 = vadd.f32 %v1556, %v1788
  %v1909 = vadd.f32 %v1557, %v1790
  %v1910 = vadd.f32 %v1558, %v1792
  %v1911 = vadd.f32 %v1559, %v1794
  %v1912 = vadd.f32 %v1560, %v1796
  %v1913 = vadd.f32 %v1561, %v1798
  %v1914 = vadd.f32 %v1562, %v1800
  %v1915 = vadd.f32 %v1563, %v1802
  %v1916 = vadd.f32 %v1564, %v1804
  %v1917 = vadd.f32 %v1565, %v1806
  %v1918 = vadd.f32 %v1566, %v1808
  %v1919 = vadd.f32 %v1567, %v1810
  %v1920 = vadd.f32 %v1568, %v1812
  %v1921 = vadd.f32 %v1569, %v1814
  %v1922 = vadd.f32 %v1570, %v1816
  %v1923 = vadd.f32 %v1571, %v1818
  %v1924 = vadd.f32 %v1572, %v1820
  %v1925 = vadd.f32 %v1573, %v1822
  %v1926 = vadd.f32 %v1574, %v1824
  %v1927 = vadd.f32 %v1575, %v1826
  %v1928 = vadd.f32 %v1576, %v1828
  %v1929 = vadd.f32 %v1577, %v1830
  %v1930 = vadd.f32 %v1578, %v1832
  %v1931 = vadd.f32 %v1579, %v1834
  %v1932 = vadd.f32 %v1580, %v1836
  %v1933 = vmax.f32 %v1869, 0.0
  %v1934 = vmax.f32 %v1870, 0.0
  %v1935 = vmax.f32 %v1871, 0.0
  %v1936 = vmax.f32 %v1872, 0.0
  %v1937 = vmax.f32 %v1873, 0.0
  %v1938 = vmax.f32 %v1874, 0.0
  %v1939 = vmax.f32 %v1875, 0.0
  %v1940 = vmax.f32 %v1876, 0.0
  %v1941 = vmax.f32 %v1877, 0.0
  %v1942 = vmax.f32 %v1878, 0.0
  %v1943 = vmax.f32 %v1879, 0.0
  %v1944 = vmax.f32 %v1880, 0.0
  %v1945 = vmax.f32 %v1881, 0.0
  %v1946 = vmax.f32 %v1882, 0.0
  %v1947 = vmax.f32 %v1883, 0.0
  %v1948 = vmax.f32 %v1884, 0.0
  %v1949 = vmax.f32 %v1885, 0.0
  %v1950 = vmax.f32 %v1886, 0.0
  %v1951 = vmax.f32 %v1887, 0.0
  %v1952 = vmax.f32 %v1888, 0.0
  %v1953 = vmax.f32 %v1889, 0.0
  %v1954 = vmax.f32 %v1890, 0.0
  %v1955 = vmax.f32 %v1891, 0.0
  %v1956 = vmax.f32 %v1892, 0.0
  %v1957 = vmax.f32 %v1893, 0.0
  %v1958 = vmax.f32 %v1894, 0.0
  %v1959 = vmax.f32 %v1895, 0.0
  %v1960 = vmax.f32 %v1896, 0.0
  %v1961 = vmax.f32 %v1897, 0.0
  %v1962 = vmax.f32 %v1898, 0.0
  %v1963 = vmax.f32 %v1899, 0.0
  %v1964 = vmax.f32 %v1900, 0.0
  %v1965 = vmin.f32 %v1933, 255.0
  %v1966 = vmin.f32 %v1934, 255.0
  %v1967 = vmin.f32 %v1935, 255.0
  %v1968 = vmin.f32 %v1936, 255.0
  %v1969 = vmin.f32 %v1937, 255.0
  %v1970 = vmin.f32 %v1938, 255.0
  %v1971 = vmin.f32 %v1939, 255.0
  %v1972 = vmin.f32 %v1940, 255.0
  %v1973 = vmin.f32 %v1941, 255.0
  %v1974 = vmin.f32 %v1942, 255.0
  %v1975 = vmin.f32 %v1943, 255.0
  %v1976 = vmin.f32 %v1944, 255.0
  %v1977 = vmin.f32 %v1945, 255.0
  %v1978 = vmin.f32 %v1946, 255.0
  %v1979 = vmin.f32 %v1947, 255.0
  %v1980 = vmin.f32 %v1948, 255.0
  %v1981 = vmin.f32 %v1949, 255.0
  %v1982 = vmin.f32 %v1950, 255.0
  %v1983 = vmin.f32 %v1951, 255.0
  %v1984 = vmin.f32 %v1952, 255.0
  %v1985 = vmin.f32 %v1953, 255.0
  %v1986 = vmin.f32 %v1954, 255.0
  %v1987 = vmin.f32 %v1955, 255.0
  %v1988 = vmin.f32 %v1956, 255.0
  %v1989 = vmin.f32 %v1957, 255.0
  %v1990 = vmin.f32 %v1958, 255.0
  %v1991 = vmin.f32 %v1959, 255.0
  %v1992 = vmin.f32 %v1960, 255.0
  %v1993 = vmin.f32 %v1961, 255.0
  %v1994 = vmin.f32 %v1962, 255.0
  %v1995 = vmin.f32 %v1963, 255.0
  %v1996 = vmin.f32 %v1964, 255.0
  %v1997 = vmax.f32 %v1901, 0.0
  %v1998 = vmax.f32 %v1902, 0.0
  %v1999 = vmax.f32 %v1903, 0.0
  %v2000 = vmax.f32 %v1904, 0.0
  %v2001 = vmax.f32 %v1905, 0.0
  %v2002 = vmax.f32 %v1906, 0.0
  %v2003 = vmax.f32 %v1907, 0.0
  %v2004 = vmax.f32 %v1908, 0.0
  %v2005 = vmax.f32 %v1909, 0.0
  %v2006 = vmax.f32 %v1910, 0.0
  %v2007 = vmax.f32 %v1911, 0.0
  %v2008 = vmax.f32 %v1912, 0.0
  %v2009 = vmax.f32 %v1913, 0.0
  %v2010 = vmax.f32 %v1914, 0.0
  %v2011 = vmax.f32 %v1915, 0.0
  %v2012 = vmax.f32 %v1916, 0.0
  %v2013 = vmax.f32 %v1917, 0.0
  %v2014 = vmax.f32 %v1918, 0.0
  %v2015 = vmax.f32 %v1919, 0.0
  %v2016 = vmax.f32 %v1920, 0.0
  %v2017 = vmax.f32 %v1921, 0.0
  %v2018 = vmax.f32 %v1922, 0.0
  %v2019 = vmax.f32 %v1923, 0.0
  %v2020 = vmax.f32 %v1924, 0.0
  %v2021 = vmax.f32 %v1925, 0.0
  %v2022 = vmax.f32 %v1926, 0.0
  %v2023 = vmax.f32 %v1927, 0.0
  %v2024 = vmax.f32 %v1928, 0.0
  %v2025 = vmax.f32 %v1929, 0.0
  %v2026 = vmax.f32 %v1930, 0.0
  %v2027 = vmax.f32 %v1931, 0.0
  %v2028 = vmax.f32 %v1932, 0.0
  %v2029 = vmin.f32 %v1997, 255.0
  %v2030 = vmin.f32 %v1998, 255.0
  %v2031 = vmin.f32 %v1999, 255.0
  %v2032 = vmin.f32 %v2000, 255.0
  %v2033 = vmin.f32 %v2001, 255.0
  %v2034 = vmin.f32 %v2002, 255.0
  %v2035 = vmin.f32 %v2003, 255.0
  %v2036 = vmin.f32 %v2004, 255.0
  %v2037 = vmin.f32 %v2005, 255.0
  %v2038 = vmin.f32 %v2006, 255.0
  %v2039 = vmin.f32 %v2007, 255.0
  %v2040 = vmin.f32 %v2008, 255.0
  %v2041 = vmin.f32 %v2009, 255.0
  %v2042 = vmin.f32 %v2010, 255.0
  %v2043 = vmin.f32 %v2011, 255.0
  %v2044 = vmin.f32 %v2012, 255.0
  %v2045 = vmin.f32 %v2013, 255.0
  %v2046 = vmin.f32 %v2014, 255.0
  %v2047 = vmin.f32 %v2015, 255.0
  %v2048 = vmin.f32 %v2016, 255.0
  %v2049 = vmin.f32 %v2017, 255.0
  %v2050 = vmin.f32 %v2018, 255.0
  %v2051 = vmin.f32 %v2019, 255.0
  %v2052 = vmin.f32 %v2020, 255.0
  %v2053 = vmin.f32 %v2021, 255.0
  %v2054 = vmin.f32 %v2022, 255.0
  %v2055 = vmin.f32 %v2023, 255.0
  %v2056 = vmin.f32 %v2024, 255.0
  %v2057 = vmin.f32 %v2025, 255.0
  %v2058 = vmin.f32 %v2026, 255.0
  %v2059 = vmin.f32 %v2027, 255.0
  %v2060 = vmin.f32 %v2028, 255.0
  %2061 = vrot.lane.b32.xlu0 %v1134, 122
  %v2062 = vpop.permute.xlu0 %2061
  %2063 = vrot.lane.b32.xlu0 %v1137, 122
  %v2064 = vpop.permute.xlu0 %2063
  %2065 = vrot.lane.b32.xlu0 %v1140, 122
  %v2066 = vpop.permute.xlu0 %2065
  %2067 = vrot.lane.b32.xlu0 %v1143, 122
  %v2068 = vpop.permute.xlu0 %2067
  %2069 = vrot.lane.b32.xlu0 %v1146, 122
  %v2070 = vpop.permute.xlu0 %2069
  %2071 = vrot.lane.b32.xlu0 %v1149, 122
  %v2072 = vpop.permute.xlu0 %2071
  %2073 = vrot.lane.b32.xlu0 %v1152, 122
  %v2074 = vpop.permute.xlu0 %2073
  %2075 = vrot.lane.b32.xlu0 %v1155, 122
  %v2076 = vpop.permute.xlu0 %2075
  %2077 = vrot.lane.b32.xlu0 %v1158, 122
  %v2078 = vpop.permute.xlu0 %2077
  %2079 = vrot.lane.b32.xlu0 %v1161, 122
  %v2080 = vpop.permute.xlu0 %2079
  %2081 = vrot.lane.b32.xlu0 %v1164, 122
  %v2082 = vpop.permute.xlu0 %2081
  %2083 = vrot.lane.b32.xlu0 %v1167, 122
  %v2084 = vpop.permute.xlu0 %2083
  %2085 = vrot.lane.b32.xlu0 %v1170, 122
  %v2086 = vpop.permute.xlu0 %2085
  %2087 = vrot.lane.b32.xlu0 %v1173, 122
  %v2088 = vpop.permute.xlu0 %2087
  %2089 = vrot.lane.b32.xlu0 %v1176, 122
  %v2090 = vpop.permute.xlu0 %2089
  %2091 = vrot.lane.b32.xlu0 %v1179, 122
  %v2092 = vpop.permute.xlu0 %2091
  %2093 = vrot.lane.b32.xlu0 %v1182, 122
  %v2094 = vpop.permute.xlu0 %2093
  %2095 = vrot.lane.b32.xlu0 %v1185, 122
  %v2096 = vpop.permute.xlu0 %2095
  %2097 = vrot.lane.b32.xlu0 %v1188, 122
  %v2098 = vpop.permute.xlu0 %2097
  %2099 = vrot.lane.b32.xlu0 %v1191, 122
  %v2100 = vpop.permute.xlu0 %2099
  %2101 = vrot.lane.b32.xlu0 %v1194, 122
  %v2102 = vpop.permute.xlu0 %2101
  %2103 = vrot.lane.b32.xlu0 %v1197, 122
  %v2104 = vpop.permute.xlu0 %2103
  %2105 = vrot.lane.b32.xlu0 %v1200, 122
  %v2106 = vpop.permute.xlu0 %2105
  %2107 = vrot.lane.b32.xlu0 %v1203, 122
  %v2108 = vpop.permute.xlu0 %2107
  %2109 = vrot.lane.b32.xlu0 %v1206, 122
  %v2110 = vpop.permute.xlu0 %2109
  %2111 = vrot.lane.b32.xlu0 %v1209, 122
  %v2112 = vpop.permute.xlu0 %2111
  %2113 = vrot.lane.b32.xlu0 %v1212, 122
  %v2114 = vpop.permute.xlu0 %2113
  %2115 = vrot.lane.b32.xlu0 %v1215, 122
  %v2116 = vpop.permute.xlu0 %2115
  %2117 = vrot.lane.b32.xlu0 %v1218, 122
  %v2118 = vpop.permute.xlu0 %2117
  %2119 = vrot.lane.b32.xlu0 %v1221, 122
  %v2120 = vpop.permute.xlu0 %2119
  %2121 = vrot.lane.b32.xlu0 %v1224, 122
  %v2122 = vpop.permute.xlu0 %2121
  %2123 = vrot.lane.b32.xlu0 %v1227, 122
  %v2124 = vpop.permute.xlu0 %2123
  %v2157 = vsub.f32 %v1134, %v2062
  %v2158 = vsub.f32 %v1137, %v2064
  %v2159 = vsub.f32 %v1140, %v2066
  %v2160 = vsub.f32 %v1143, %v2068
  %v2161 = vsub.f32 %v1146, %v2070
  %v2162 = vsub.f32 %v1149, %v2072
  %v2163 = vsub.f32 %v1152, %v2074
  %v2164 = vsub.f32 %v1155, %v2076
  %v2165 = vsub.f32 %v1158, %v2078
  %v2166 = vsub.f32 %v1161, %v2080
  %v2167 = vsub.f32 %v1164, %v2082
  %v2168 = vsub.f32 %v1167, %v2084
  %v2169 = vsub.f32 %v1170, %v2086
  %v2170 = vsub.f32 %v1173, %v2088
  %v2171 = vsub.f32 %v1176, %v2090
  %v2172 = vsub.f32 %v1179, %v2092
  %v2173 = vsub.f32 %v1182, %v2094
  %v2174 = vsub.f32 %v1185, %v2096
  %v2175 = vsub.f32 %v1188, %v2098
  %v2176 = vsub.f32 %v1191, %v2100
  %v2177 = vsub.f32 %v1194, %v2102
  %v2178 = vsub.f32 %v1197, %v2104
  %v2179 = vsub.f32 %v1200, %v2106
  %v2180 = vsub.f32 %v1203, %v2108
  %v2181 = vsub.f32 %v1206, %v2110
  %v2182 = vsub.f32 %v1209, %v2112
  %v2183 = vsub.f32 %v1212, %v2114
  %v2184 = vsub.f32 %v1215, %v2116
  %v2185 = vsub.f32 %v1218, %v2118
  %v2186 = vsub.f32 %v1221, %v2120
  %v2187 = vsub.f32 %v1224, %v2122
  %v2188 = vsub.f32 %v1227, %v2124
  %v2189 = vmul.f32 %v2157, 1.442695
  %v2190 = vpow.pop %v2189
  %v2191 = vmul.f32 %v2158, 1.442695
  %v2192 = vpow.pop %v2191
  %v2193 = vmul.f32 %v2159, 1.442695
  %v2194 = vpow.pop %v2193
  %v2195 = vmul.f32 %v2160, 1.442695
  %v2196 = vpow.pop %v2195
  %v2197 = vmul.f32 %v2161, 1.442695
  %v2198 = vpow.pop %v2197
  %v2199 = vmul.f32 %v2162, 1.442695
  %v2200 = vpow.pop %v2199
  %v2201 = vmul.f32 %v2163, 1.442695
  %v2202 = vpow.pop %v2201
  %v2203 = vmul.f32 %v2164, 1.442695
  %v2204 = vpow.pop %v2203
  %v2205 = vmul.f32 %v2165, 1.442695
  %v2206 = vpow.pop %v2205
  %v2207 = vmul.f32 %v2166, 1.442695
  %v2208 = vpow.pop %v2207
  %v2209 = vmul.f32 %v2167, 1.442695
  %v2210 = vpow.pop %v2209
  %v2211 = vmul.f32 %v2168, 1.442695
  %v2212 = vpow.pop %v2211
  %v2213 = vmul.f32 %v2169, 1.442695
  %v2214 = vpow.pop %v2213
  %v2215 = vmul.f32 %v2170, 1.442695
  %v2216 = vpow.pop %v2215
  %v2217 = vmul.f32 %v2171, 1.442695
  %v2218 = vpow.pop %v2217
  %v2219 = vmul.f32 %v2172, 1.442695
  %v2220 = vpow.pop %v2219
  %v2221 = vmul.f32 %v2173, 1.442695
  %v2222 = vpow.pop %v2221
  %v2223 = vmul.f32 %v2174, 1.442695
  %v2224 = vpow.pop %v2223
  %v2225 = vmul.f32 %v2175, 1.442695
  %v2226 = vpow.pop %v2225
  %v2227 = vmul.f32 %v2176, 1.442695
  %v2228 = vpow.pop %v2227
  %v2229 = vmul.f32 %v2177, 1.442695
  %v2230 = vpow.pop %v2229
  %v2231 = vmul.f32 %v2178, 1.442695
  %v2232 = vpow.pop %v2231
  %v2233 = vmul.f32 %v2179, 1.442695
  %v2234 = vpow.pop %v2233
  %v2235 = vmul.f32 %v2180, 1.442695
  %v2236 = vpow.pop %v2235
  %v2237 = vmul.f32 %v2181, 1.442695
  %v2238 = vpow.pop %v2237
  %v2239 = vmul.f32 %v2182, 1.442695
  %v2240 = vpow.pop %v2239
  %v2241 = vmul.f32 %v2183, 1.442695
  %v2242 = vpow.pop %v2241
  %v2243 = vmul.f32 %v2184, 1.442695
  %v2244 = vpow.pop %v2243
  %v2245 = vmul.f32 %v2185, 1.442695
  %v2246 = vpow.pop %v2245
  %v2247 = vmul.f32 %v2186, 1.442695
  %v2248 = vpow.pop %v2247
  %v2249 = vmul.f32 %v2187, 1.442695
  %v2250 = vpow.pop %v2249
  %v2251 = vmul.f32 %v2188, 1.442695
  %v2252 = vpow.pop %v2251
  %v2253 = vadd.f32 %v2190, 1.0
  %v2254 = vadd.f32 %v2192, 1.0
  %v2255 = vadd.f32 %v2194, 1.0
  %v2256 = vadd.f32 %v2196, 1.0
  %v2257 = vadd.f32 %v2198, 1.0
  %v2258 = vadd.f32 %v2200, 1.0
  %v2259 = vadd.f32 %v2202, 1.0
  %v2260 = vadd.f32 %v2204, 1.0
  %v2261 = vadd.f32 %v2206, 1.0
  %v2262 = vadd.f32 %v2208, 1.0
  %v2263 = vadd.f32 %v2210, 1.0
  %v2264 = vadd.f32 %v2212, 1.0
  %v2265 = vadd.f32 %v2214, 1.0
  %v2266 = vadd.f32 %v2216, 1.0
  %v2267 = vadd.f32 %v2218, 1.0
  %v2268 = vadd.f32 %v2220, 1.0
  %v2269 = vadd.f32 %v2222, 1.0
  %v2270 = vadd.f32 %v2224, 1.0
  %v2271 = vadd.f32 %v2226, 1.0
  %v2272 = vadd.f32 %v2228, 1.0
  %v2273 = vadd.f32 %v2230, 1.0
  %v2274 = vadd.f32 %v2232, 1.0
  %v2275 = vadd.f32 %v2234, 1.0
  %v2276 = vadd.f32 %v2236, 1.0
  %v2277 = vadd.f32 %v2238, 1.0
  %v2278 = vadd.f32 %v2240, 1.0
  %v2279 = vadd.f32 %v2242, 1.0
  %v2280 = vadd.f32 %v2244, 1.0
  %v2281 = vadd.f32 %v2246, 1.0
  %v2282 = vadd.f32 %v2248, 1.0
  %v2283 = vadd.f32 %v2250, 1.0
  %v2284 = vadd.f32 %v2252, 1.0
  %v2285 = vrcp.pop %v2253
  %v2286 = vmul.f32 %v2253, %v2285
  %v2287 = vsub.f32 1.0, %v2286
  %v2288 = vmul.f32 %v2285, %v2287
  %v2289 = vadd.f32 %v2285, %v2288
  %vm2290 = vweird.f32 %v2253
  %vm2291 = vweird.f32 %v2285
  %vm2292 = vmor %vm2290, %vm2291
  %v2293 = vsel %vm2292, %v2285, %v2289
  %v2294 = vand.u32 2147483647, %v2253
  %vm2295 = vcmp.eq.f32.partialorder %v2294, 8.507059e+37
  %v2296 = vand.u32 %v2253, 2147483648
  %v2297 = vor.u32 1.1754944e-38, %v2296
  %v2298 = vsel %vm2295, %v2297, %v2293
  %v2299 = vmul.f32 1.0, %v2298
  %v2300 = vrcp.pop %v2254
  %v2301 = vmul.f32 %v2254, %v2300
  %v2302 = vsub.f32 1.0, %v2301
  %v2303 = vmul.f32 %v2300, %v2302
  %v2304 = vadd.f32 %v2300, %v2303
  %vm2305 = vweird.f32 %v2254
  %vm2306 = vweird.f32 %v2300
  %vm2307 = vmor %vm2305, %vm2306
  %v2308 = vsel %vm2307, %v2300, %v2304
  %v2309 = vand.u32 2147483647, %v2254
  %vm2310 = vcmp.eq.f32.partialorder %v2309, 8.507059e+37
  %v2311 = vand.u32 %v2254, 2147483648
  %v2312 = vor.u32 1.1754944e-38, %v2311
  %v2313 = vsel %vm2310, %v2312, %v2308
  %v2314 = vmul.f32 1.0, %v2313
  %v2315 = vrcp.pop %v2255
  %v2316 = vmul.f32 %v2255, %v2315
  %v2317 = vsub.f32 1.0, %v2316
  %v2318 = vmul.f32 %v2315, %v2317
  %v2319 = vadd.f32 %v2315, %v2318
  %vm2320 = vweird.f32 %v2255
  %vm2321 = vweird.f32 %v2315
  %vm2322 = vmor %vm2320, %vm2321
  %v2323 = vsel %vm2322, %v2315, %v2319
  %v2324 = vand.u32 2147483647, %v2255
  %vm2325 = vcmp.eq.f32.partialorder %v2324, 8.507059e+37
  %v2326 = vand.u32 %v2255, 2147483648
  %v2327 = vor.u32 1.1754944e-38, %v2326
  %v2328 = vsel %vm2325, %v2327, %v2323
  %v2329 = vmul.f32 1.0, %v2328
  %v2330 = vrcp.pop %v2256
  %v2331 = vmul.f32 %v2256, %v2330
  %v2332 = vsub.f32 1.0, %v2331
  %v2333 = vmul.f32 %v2330, %v2332
  %v2334 = vadd.f32 %v2330, %v2333
  %vm2335 = vweird.f32 %v2256
  %vm2336 = vweird.f32 %v2330
  %vm2337 = vmor %vm2335, %vm2336
  %v2338 = vsel %vm2337, %v2330, %v2334
  %v2339 = vand.u32 2147483647, %v2256
  %vm2340 = vcmp.eq.f32.partialorder %v2339, 8.507059e+37
  %v2341 = vand.u32 %v2256, 2147483648
  %v2342 = vor.u32 1.1754944e-38, %v2341
  %v2343 = vsel %vm2340, %v2342, %v2338
  %v2344 = vmul.f32 1.0, %v2343
  %v2345 = vrcp.pop %v2257
  %v2346 = vmul.f32 %v2257, %v2345
  %v2347 = vsub.f32 1.0, %v2346
  %v2348 = vmul.f32 %v2345, %v2347
  %v2349 = vadd.f32 %v2345, %v2348
  %vm2350 = vweird.f32 %v2257
  %vm2351 = vweird.f32 %v2345
  %vm2352 = vmor %vm2350, %vm2351
  %v2353 = vsel %vm2352, %v2345, %v2349
  %v2354 = vand.u32 2147483647, %v2257
  %vm2355 = vcmp.eq.f32.partialorder %v2354, 8.507059e+37
  %v2356 = vand.u32 %v2257, 2147483648
  %v2357 = vor.u32 1.1754944e-38, %v2356
  %v2358 = vsel %vm2355, %v2357, %v2353
  %v2359 = vmul.f32 1.0, %v2358
  %v2360 = vrcp.pop %v2258
  %v2361 = vmul.f32 %v2258, %v2360
  %v2362 = vsub.f32 1.0, %v2361
  %v2363 = vmul.f32 %v2360, %v2362
  %v2364 = vadd.f32 %v2360, %v2363
  %vm2365 = vweird.f32 %v2258
  %vm2366 = vweird.f32 %v2360
  %vm2367 = vmor %vm2365, %vm2366
  %v2368 = vsel %vm2367, %v2360, %v2364
  %v2369 = vand.u32 2147483647, %v2258
  %vm2370 = vcmp.eq.f32.partialorder %v2369, 8.507059e+37
  %v2371 = vand.u32 %v2258, 2147483648
  %v2372 = vor.u32 1.1754944e-38, %v2371
  %v2373 = vsel %vm2370, %v2372, %v2368
  %v2374 = vmul.f32 1.0, %v2373
  %v2375 = vrcp.pop %v2259
  %v2376 = vmul.f32 %v2259, %v2375
  %v2377 = vsub.f32 1.0, %v2376
  %v2378 = vmul.f32 %v2375, %v2377
  %v2379 = vadd.f32 %v2375, %v2378
  %vm2380 = vweird.f32 %v2259
  %vm2381 = vweird.f32 %v2375
  %vm2382 = vmor %vm2380, %vm2381
  %v2383 = vsel %vm2382, %v2375, %v2379
  %v2384 = vand.u32 2147483647, %v2259
  %vm2385 = vcmp.eq.f32.partialorder %v2384, 8.507059e+37
  %v2386 = vand.u32 %v2259, 2147483648
  %v2387 = vor.u32 1.1754944e-38, %v2386
  %v2388 = vsel %vm2385, %v2387, %v2383
  %v2389 = vmul.f32 1.0, %v2388
  %v2390 = vrcp.pop %v2260
  %v2391 = vmul.f32 %v2260, %v2390
  %v2392 = vsub.f32 1.0, %v2391
  %v2393 = vmul.f32 %v2390, %v2392
  %v2394 = vadd.f32 %v2390, %v2393
  %vm2395 = vweird.f32 %v2260
  %vm2396 = vweird.f32 %v2390
  %vm2397 = vmor %vm2395, %vm2396
  %v2398 = vsel %vm2397, %v2390, %v2394
  %v2399 = vand.u32 2147483647, %v2260
  %vm2400 = vcmp.eq.f32.partialorder %v2399, 8.507059e+37
  %v2401 = vand.u32 %v2260, 2147483648
  %v2402 = vor.u32 1.1754944e-38, %v2401
  %v2403 = vsel %vm2400, %v2402, %v2398
  %v2404 = vmul.f32 1.0, %v2403
  %v2405 = vrcp.pop %v2261
  %v2406 = vmul.f32 %v2261, %v2405
  %v2407 = vsub.f32 1.0, %v2406
  %v2408 = vmul.f32 %v2405, %v2407
  %v2409 = vadd.f32 %v2405, %v2408
  %vm2410 = vweird.f32 %v2261
  %vm2411 = vweird.f32 %v2405
  %vm2412 = vmor %vm2410, %vm2411
  %v2413 = vsel %vm2412, %v2405, %v2409
  %v2414 = vand.u32 2147483647, %v2261
  %vm2415 = vcmp.eq.f32.partialorder %v2414, 8.507059e+37
  %v2416 = vand.u32 %v2261, 2147483648
  %v2417 = vor.u32 1.1754944e-38, %v2416
  %v2418 = vsel %vm2415, %v2417, %v2413
  %v2419 = vmul.f32 1.0, %v2418
  %v2420 = vrcp.pop %v2262
  %v2421 = vmul.f32 %v2262, %v2420
  %v2422 = vsub.f32 1.0, %v2421
  %v2423 = vmul.f32 %v2420, %v2422
  %v2424 = vadd.f32 %v2420, %v2423
  %vm2425 = vweird.f32 %v2262
  %vm2426 = vweird.f32 %v2420
  %vm2427 = vmor %vm2425, %vm2426
  %v2428 = vsel %vm2427, %v2420, %v2424
  %v2429 = vand.u32 2147483647, %v2262
  %vm2430 = vcmp.eq.f32.partialorder %v2429, 8.507059e+37
  %v2431 = vand.u32 %v2262, 2147483648
  %v2432 = vor.u32 1.1754944e-38, %v2431
  %v2433 = vsel %vm2430, %v2432, %v2428
  %v2434 = vmul.f32 1.0, %v2433
  %v2435 = vrcp.pop %v2263
  %v2436 = vmul.f32 %v2263, %v2435
  %v2437 = vsub.f32 1.0, %v2436
  %v2438 = vmul.f32 %v2435, %v2437
  %v2439 = vadd.f32 %v2435, %v2438
  %vm2440 = vweird.f32 %v2263
  %vm2441 = vweird.f32 %v2435
  %vm2442 = vmor %vm2440, %vm2441
  %v2443 = vsel %vm2442, %v2435, %v2439
  %v2444 = vand.u32 2147483647, %v2263
  %vm2445 = vcmp.eq.f32.partialorder %v2444, 8.507059e+37
  %v2446 = vand.u32 %v2263, 2147483648
  %v2447 = vor.u32 1.1754944e-38, %v2446
  %v2448 = vsel %vm2445, %v2447, %v2443
  %v2449 = vmul.f32 1.0, %v2448
  %v2450 = vrcp.pop %v2264
  %v2451 = vmul.f32 %v2264, %v2450
  %v2452 = vsub.f32 1.0, %v2451
  %v2453 = vmul.f32 %v2450, %v2452
  %v2454 = vadd.f32 %v2450, %v2453
  %vm2455 = vweird.f32 %v2264
  %vm2456 = vweird.f32 %v2450
  %vm2457 = vmor %vm2455, %vm2456
  %v2458 = vsel %vm2457, %v2450, %v2454
  %v2459 = vand.u32 2147483647, %v2264
  %vm2460 = vcmp.eq.f32.partialorder %v2459, 8.507059e+37
  %v2461 = vand.u32 %v2264, 2147483648
  %v2462 = vor.u32 1.1754944e-38, %v2461
  %v2463 = vsel %vm2460, %v2462, %v2458
  %v2464 = vmul.f32 1.0, %v2463
  %v2465 = vrcp.pop %v2265
  %v2466 = vmul.f32 %v2265, %v2465
  %v2467 = vsub.f32 1.0, %v2466
  %v2468 = vmul.f32 %v2465, %v2467
  %v2469 = vadd.f32 %v2465, %v2468
  %vm2470 = vweird.f32 %v2265
  %vm2471 = vweird.f32 %v2465
  %vm2472 = vmor %vm2470, %vm2471
  %v2473 = vsel %vm2472, %v2465, %v2469
  %v2474 = vand.u32 2147483647, %v2265
  %vm2475 = vcmp.eq.f32.partialorder %v2474, 8.507059e+37
  %v2476 = vand.u32 %v2265, 2147483648
  %v2477 = vor.u32 1.1754944e-38, %v2476
  %v2478 = vsel %vm2475, %v2477, %v2473
  %v2479 = vmul.f32 1.0, %v2478
  %v2480 = vrcp.pop %v2266
  %v2481 = vmul.f32 %v2266, %v2480
  %v2482 = vsub.f32 1.0, %v2481
  %v2483 = vmul.f32 %v2480, %v2482
  %v2484 = vadd.f32 %v2480, %v2483
  %vm2485 = vweird.f32 %v2266
  %vm2486 = vweird.f32 %v2480
  %vm2487 = vmor %vm2485, %vm2486
  %v2488 = vsel %vm2487, %v2480, %v2484
  %v2489 = vand.u32 2147483647, %v2266
  %vm2490 = vcmp.eq.f32.partialorder %v2489, 8.507059e+37
  %v2491 = vand.u32 %v2266, 2147483648
  %v2492 = vor.u32 1.1754944e-38, %v2491
  %v2493 = vsel %vm2490, %v2492, %v2488
  %v2494 = vmul.f32 1.0, %v2493
  %v2495 = vrcp.pop %v2267
  %v2496 = vmul.f32 %v2267, %v2495
  %v2497 = vsub.f32 1.0, %v2496
  %v2498 = vmul.f32 %v2495, %v2497
  %v2499 = vadd.f32 %v2495, %v2498
  %vm2500 = vweird.f32 %v2267
  %vm2501 = vweird.f32 %v2495
  %vm2502 = vmor %vm2500, %vm2501
  %v2503 = vsel %vm2502, %v2495, %v2499
  %v2504 = vand.u32 2147483647, %v2267
  %vm2505 = vcmp.eq.f32.partialorder %v2504, 8.507059e+37
  %v2506 = vand.u32 %v2267, 2147483648
  %v2507 = vor.u32 1.1754944e-38, %v2506
  %v2508 = vsel %vm2505, %v2507, %v2503
  %v2509 = vmul.f32 1.0, %v2508
  %v2510 = vrcp.pop %v2268
  %v2511 = vmul.f32 %v2268, %v2510
  %v2512 = vsub.f32 1.0, %v2511
  %v2513 = vmul.f32 %v2510, %v2512
  %v2514 = vadd.f32 %v2510, %v2513
  %vm2515 = vweird.f32 %v2268
  %vm2516 = vweird.f32 %v2510
  %vm2517 = vmor %vm2515, %vm2516
  %v2518 = vsel %vm2517, %v2510, %v2514
  %v2519 = vand.u32 2147483647, %v2268
  %vm2520 = vcmp.eq.f32.partialorder %v2519, 8.507059e+37
  %v2521 = vand.u32 %v2268, 2147483648
  %v2522 = vor.u32 1.1754944e-38, %v2521
  %v2523 = vsel %vm2520, %v2522, %v2518
  %v2524 = vmul.f32 1.0, %v2523
  %v2525 = vrcp.pop %v2269
  %v2526 = vmul.f32 %v2269, %v2525
  %v2527 = vsub.f32 1.0, %v2526
  %v2528 = vmul.f32 %v2525, %v2527
  %v2529 = vadd.f32 %v2525, %v2528
  %vm2530 = vweird.f32 %v2269
  %vm2531 = vweird.f32 %v2525
  %vm2532 = vmor %vm2530, %vm2531
  %v2533 = vsel %vm2532, %v2525, %v2529
  %v2534 = vand.u32 2147483647, %v2269
  %vm2535 = vcmp.eq.f32.partialorder %v2534, 8.507059e+37
  %v2536 = vand.u32 %v2269, 2147483648
  %v2537 = vor.u32 1.1754944e-38, %v2536
  %v2538 = vsel %vm2535, %v2537, %v2533
  %v2539 = vmul.f32 1.0, %v2538
  %v2540 = vrcp.pop %v2270
  %v2541 = vmul.f32 %v2270, %v2540
  %v2542 = vsub.f32 1.0, %v2541
  %v2543 = vmul.f32 %v2540, %v2542
  %v2544 = vadd.f32 %v2540, %v2543
  %vm2545 = vweird.f32 %v2270
  %vm2546 = vweird.f32 %v2540
  %vm2547 = vmor %vm2545, %vm2546
  %v2548 = vsel %vm2547, %v2540, %v2544
  %v2549 = vand.u32 2147483647, %v2270
  %vm2550 = vcmp.eq.f32.partialorder %v2549, 8.507059e+37
  %v2551 = vand.u32 %v2270, 2147483648
  %v2552 = vor.u32 1.1754944e-38, %v2551
  %v2553 = vsel %vm2550, %v2552, %v2548
  %v2554 = vmul.f32 1.0, %v2553
  %v2555 = vrcp.pop %v2271
  %v2556 = vmul.f32 %v2271, %v2555
  %v2557 = vsub.f32 1.0, %v2556
  %v2558 = vmul.f32 %v2555, %v2557
  %v2559 = vadd.f32 %v2555, %v2558
  %vm2560 = vweird.f32 %v2271
  %vm2561 = vweird.f32 %v2555
  %vm2562 = vmor %vm2560, %vm2561
  %v2563 = vsel %vm2562, %v2555, %v2559
  %v2564 = vand.u32 2147483647, %v2271
  %vm2565 = vcmp.eq.f32.partialorder %v2564, 8.507059e+37
  %v2566 = vand.u32 %v2271, 2147483648
  %v2567 = vor.u32 1.1754944e-38, %v2566
  %v2568 = vsel %vm2565, %v2567, %v2563
  %v2569 = vmul.f32 1.0, %v2568
  %v2570 = vrcp.pop %v2272
  %v2571 = vmul.f32 %v2272, %v2570
  %v2572 = vsub.f32 1.0, %v2571
  %v2573 = vmul.f32 %v2570, %v2572
  %v2574 = vadd.f32 %v2570, %v2573
  %vm2575 = vweird.f32 %v2272
  %vm2576 = vweird.f32 %v2570
  %vm2577 = vmor %vm2575, %vm2576
  %v2578 = vsel %vm2577, %v2570, %v2574
  %v2579 = vand.u32 2147483647, %v2272
  %vm2580 = vcmp.eq.f32.partialorder %v2579, 8.507059e+37
  %v2581 = vand.u32 %v2272, 2147483648
  %v2582 = vor.u32 1.1754944e-38, %v2581
  %v2583 = vsel %vm2580, %v2582, %v2578
  %v2584 = vmul.f32 1.0, %v2583
  %v2585 = vrcp.pop %v2273
  %v2586 = vmul.f32 %v2273, %v2585
  %v2587 = vsub.f32 1.0, %v2586
  %v2588 = vmul.f32 %v2585, %v2587
  %v2589 = vadd.f32 %v2585, %v2588
  %vm2590 = vweird.f32 %v2273
  %vm2591 = vweird.f32 %v2585
  %vm2592 = vmor %vm2590, %vm2591
  %v2593 = vsel %vm2592, %v2585, %v2589
  %v2594 = vand.u32 2147483647, %v2273
  %vm2595 = vcmp.eq.f32.partialorder %v2594, 8.507059e+37
  %v2596 = vand.u32 %v2273, 2147483648
  %v2597 = vor.u32 1.1754944e-38, %v2596
  %v2598 = vsel %vm2595, %v2597, %v2593
  %v2599 = vmul.f32 1.0, %v2598
  %v2600 = vrcp.pop %v2274
  %v2601 = vmul.f32 %v2274, %v2600
  %v2602 = vsub.f32 1.0, %v2601
  %v2603 = vmul.f32 %v2600, %v2602
  %v2604 = vadd.f32 %v2600, %v2603
  %vm2605 = vweird.f32 %v2274
  %vm2606 = vweird.f32 %v2600
  %vm2607 = vmor %vm2605, %vm2606
  %v2608 = vsel %vm2607, %v2600, %v2604
  %v2609 = vand.u32 2147483647, %v2274
  %vm2610 = vcmp.eq.f32.partialorder %v2609, 8.507059e+37
  %v2611 = vand.u32 %v2274, 2147483648
  %v2612 = vor.u32 1.1754944e-38, %v2611
  %v2613 = vsel %vm2610, %v2612, %v2608
  %v2614 = vmul.f32 1.0, %v2613
  %v2615 = vrcp.pop %v2275
  %v2616 = vmul.f32 %v2275, %v2615
  %v2617 = vsub.f32 1.0, %v2616
  %v2618 = vmul.f32 %v2615, %v2617
  %v2619 = vadd.f32 %v2615, %v2618
  %vm2620 = vweird.f32 %v2275
  %vm2621 = vweird.f32 %v2615
  %vm2622 = vmor %vm2620, %vm2621
  %v2623 = vsel %vm2622, %v2615, %v2619
  %v2624 = vand.u32 2147483647, %v2275
  %vm2625 = vcmp.eq.f32.partialorder %v2624, 8.507059e+37
  %v2626 = vand.u32 %v2275, 2147483648
  %v2627 = vor.u32 1.1754944e-38, %v2626
  %v2628 = vsel %vm2625, %v2627, %v2623
  %v2629 = vmul.f32 1.0, %v2628
  %v2630 = vrcp.pop %v2276
  %v2631 = vmul.f32 %v2276, %v2630
  %v2632 = vsub.f32 1.0, %v2631
  %v2633 = vmul.f32 %v2630, %v2632
  %v2634 = vadd.f32 %v2630, %v2633
  %vm2635 = vweird.f32 %v2276
  %vm2636 = vweird.f32 %v2630
  %vm2637 = vmor %vm2635, %vm2636
  %v2638 = vsel %vm2637, %v2630, %v2634
  %v2639 = vand.u32 2147483647, %v2276
  %vm2640 = vcmp.eq.f32.partialorder %v2639, 8.507059e+37
  %v2641 = vand.u32 %v2276, 2147483648
  %v2642 = vor.u32 1.1754944e-38, %v2641
  %v2643 = vsel %vm2640, %v2642, %v2638
  %v2644 = vmul.f32 1.0, %v2643
  %v2645 = vrcp.pop %v2277
  %v2646 = vmul.f32 %v2277, %v2645
  %v2647 = vsub.f32 1.0, %v2646
  %v2648 = vmul.f32 %v2645, %v2647
  %v2649 = vadd.f32 %v2645, %v2648
  %vm2650 = vweird.f32 %v2277
  %vm2651 = vweird.f32 %v2645
  %vm2652 = vmor %vm2650, %vm2651
  %v2653 = vsel %vm2652, %v2645, %v2649
  %v2654 = vand.u32 2147483647, %v2277
  %vm2655 = vcmp.eq.f32.partialorder %v2654, 8.507059e+37
  %v2656 = vand.u32 %v2277, 2147483648
  %v2657 = vor.u32 1.1754944e-38, %v2656
  %v2658 = vsel %vm2655, %v2657, %v2653
  %v2659 = vmul.f32 1.0, %v2658
  %v2660 = vrcp.pop %v2278
  %v2661 = vmul.f32 %v2278, %v2660
  %v2662 = vsub.f32 1.0, %v2661
  %v2663 = vmul.f32 %v2660, %v2662
  %v2664 = vadd.f32 %v2660, %v2663
  %vm2665 = vweird.f32 %v2278
  %vm2666 = vweird.f32 %v2660
  %vm2667 = vmor %vm2665, %vm2666
  %v2668 = vsel %vm2667, %v2660, %v2664
  %v2669 = vand.u32 2147483647, %v2278
  %vm2670 = vcmp.eq.f32.partialorder %v2669, 8.507059e+37
  %v2671 = vand.u32 %v2278, 2147483648
  %v2672 = vor.u32 1.1754944e-38, %v2671
  %v2673 = vsel %vm2670, %v2672, %v2668
  %v2674 = vmul.f32 1.0, %v2673
  %v2675 = vrcp.pop %v2279
  %v2676 = vmul.f32 %v2279, %v2675
  %v2677 = vsub.f32 1.0, %v2676
  %v2678 = vmul.f32 %v2675, %v2677
  %v2679 = vadd.f32 %v2675, %v2678
  %vm2680 = vweird.f32 %v2279
  %vm2681 = vweird.f32 %v2675
  %vm2682 = vmor %vm2680, %vm2681
  %v2683 = vsel %vm2682, %v2675, %v2679
  %v2684 = vand.u32 2147483647, %v2279
  %vm2685 = vcmp.eq.f32.partialorder %v2684, 8.507059e+37
  %v2686 = vand.u32 %v2279, 2147483648
  %v2687 = vor.u32 1.1754944e-38, %v2686
  %v2688 = vsel %vm2685, %v2687, %v2683
  %v2689 = vmul.f32 1.0, %v2688
  %v2690 = vrcp.pop %v2280
  %v2691 = vmul.f32 %v2280, %v2690
  %v2692 = vsub.f32 1.0, %v2691
  %v2693 = vmul.f32 %v2690, %v2692
  %v2694 = vadd.f32 %v2690, %v2693
  %vm2695 = vweird.f32 %v2280
  %vm2696 = vweird.f32 %v2690
  %vm2697 = vmor %vm2695, %vm2696
  %v2698 = vsel %vm2697, %v2690, %v2694
  %v2699 = vand.u32 2147483647, %v2280
  %vm2700 = vcmp.eq.f32.partialorder %v2699, 8.507059e+37
  %v2701 = vand.u32 %v2280, 2147483648
  %v2702 = vor.u32 1.1754944e-38, %v2701
  %v2703 = vsel %vm2700, %v2702, %v2698
  %v2704 = vmul.f32 1.0, %v2703
  %v2705 = vrcp.pop %v2281
  %v2706 = vmul.f32 %v2281, %v2705
  %v2707 = vsub.f32 1.0, %v2706
  %v2708 = vmul.f32 %v2705, %v2707
  %v2709 = vadd.f32 %v2705, %v2708
  %vm2710 = vweird.f32 %v2281
  %vm2711 = vweird.f32 %v2705
  %vm2712 = vmor %vm2710, %vm2711
  %v2713 = vsel %vm2712, %v2705, %v2709
  %v2714 = vand.u32 2147483647, %v2281
  %vm2715 = vcmp.eq.f32.partialorder %v2714, 8.507059e+37
  %v2716 = vand.u32 %v2281, 2147483648
  %v2717 = vor.u32 1.1754944e-38, %v2716
  %v2718 = vsel %vm2715, %v2717, %v2713
  %v2719 = vmul.f32 1.0, %v2718
  %v2720 = vrcp.pop %v2282
  %v2721 = vmul.f32 %v2282, %v2720
  %v2722 = vsub.f32 1.0, %v2721
  %v2723 = vmul.f32 %v2720, %v2722
  %v2724 = vadd.f32 %v2720, %v2723
  %vm2725 = vweird.f32 %v2282
  %vm2726 = vweird.f32 %v2720
  %vm2727 = vmor %vm2725, %vm2726
  %v2728 = vsel %vm2727, %v2720, %v2724
  %v2729 = vand.u32 2147483647, %v2282
  %vm2730 = vcmp.eq.f32.partialorder %v2729, 8.507059e+37
  %v2731 = vand.u32 %v2282, 2147483648
  %v2732 = vor.u32 1.1754944e-38, %v2731
  %v2733 = vsel %vm2730, %v2732, %v2728
  %v2734 = vmul.f32 1.0, %v2733
  %v2735 = vrcp.pop %v2283
  %v2736 = vmul.f32 %v2283, %v2735
  %v2737 = vsub.f32 1.0, %v2736
  %v2738 = vmul.f32 %v2735, %v2737
  %v2739 = vadd.f32 %v2735, %v2738
  %vm2740 = vweird.f32 %v2283
  %vm2741 = vweird.f32 %v2735
  %vm2742 = vmor %vm2740, %vm2741
  %v2743 = vsel %vm2742, %v2735, %v2739
  %v2744 = vand.u32 2147483647, %v2283
  %vm2745 = vcmp.eq.f32.partialorder %v2744, 8.507059e+37
  %v2746 = vand.u32 %v2283, 2147483648
  %v2747 = vor.u32 1.1754944e-38, %v2746
  %v2748 = vsel %vm2745, %v2747, %v2743
  %v2749 = vmul.f32 1.0, %v2748
  %v2750 = vrcp.pop %v2284
  %v2751 = vmul.f32 %v2284, %v2750
  %v2752 = vsub.f32 1.0, %v2751
  %v2753 = vmul.f32 %v2750, %v2752
  %v2754 = vadd.f32 %v2750, %v2753
  %vm2755 = vweird.f32 %v2284
  %vm2756 = vweird.f32 %v2750
  %vm2757 = vmor %vm2755, %vm2756
  %v2758 = vsel %vm2757, %v2750, %v2754
  %v2759 = vand.u32 2147483647, %v2284
  %vm2760 = vcmp.eq.f32.partialorder %v2759, 8.507059e+37
  %v2761 = vand.u32 %v2284, 2147483648
  %v2762 = vor.u32 1.1754944e-38, %v2761
  %v2763 = vsel %vm2760, %v2762, %v2758
  %v2764 = vmul.f32 1.0, %v2763
  %2797 = vrot.lane.b32.xlu0 %v1901, 12
  %v2798 = vpop.permute.xlu0 %2797
  %2799 = vrot.lane.b32.xlu0 %v1902, 12
  %v2800 = vpop.permute.xlu0 %2799
  %2801 = vrot.lane.b32.xlu0 %v1903, 12
  %v2802 = vpop.permute.xlu0 %2801
  %2803 = vrot.lane.b32.xlu0 %v1904, 12
  %v2804 = vpop.permute.xlu0 %2803
  %2805 = vrot.lane.b32.xlu0 %v1905, 12
  %v2806 = vpop.permute.xlu0 %2805
  %2807 = vrot.lane.b32.xlu0 %v1906, 12
  %v2808 = vpop.permute.xlu0 %2807
  %2809 = vrot.lane.b32.xlu0 %v1907, 12
  %v2810 = vpop.permute.xlu0 %2809
  %2811 = vrot.lane.b32.xlu0 %v1908, 12
  %v2812 = vpop.permute.xlu0 %2811
  %2813 = vrot.lane.b32.xlu0 %v1909, 12
  %v2814 = vpop.permute.xlu0 %2813
  %2815 = vrot.lane.b32.xlu0 %v1910, 12
  %v2816 = vpop.permute.xlu0 %2815
  %2817 = vrot.lane.b32.xlu0 %v1911, 12
  %v2818 = vpop.permute.xlu0 %2817
  %2819 = vrot.lane.b32.xlu0 %v1912, 12
  %v2820 = vpop.permute.xlu0 %2819
  %2821 = vrot.lane.b32.xlu0 %v1913, 12
  %v2822 = vpop.permute.xlu0 %2821
  %2823 = vrot.lane.b32.xlu0 %v1914, 12
  %v2824 = vpop.permute.xlu0 %2823
  %2825 = vrot.lane.b32.xlu0 %v1915, 12
  %v2826 = vpop.permute.xlu0 %2825
  %2827 = vrot.lane.b32.xlu0 %v1916, 12
  %v2828 = vpop.permute.xlu0 %2827
  %2829 = vrot.lane.b32.xlu0 %v1917, 12
  %v2830 = vpop.permute.xlu0 %2829
  %2831 = vrot.lane.b32.xlu0 %v1918, 12
  %v2832 = vpop.permute.xlu0 %2831
  %2833 = vrot.lane.b32.xlu0 %v1919, 12
  %v2834 = vpop.permute.xlu0 %2833
  %2835 = vrot.lane.b32.xlu0 %v1920, 12
  %v2836 = vpop.permute.xlu0 %2835
  %2837 = vrot.lane.b32.xlu0 %v1921, 12
  %v2838 = vpop.permute.xlu0 %2837
  %2839 = vrot.lane.b32.xlu0 %v1922, 12
  %v2840 = vpop.permute.xlu0 %2839
  %2841 = vrot.lane.b32.xlu0 %v1923, 12
  %v2842 = vpop.permute.xlu0 %2841
  %2843 = vrot.lane.b32.xlu0 %v1924, 12
  %v2844 = vpop.permute.xlu0 %2843
  %2845 = vrot.lane.b32.xlu0 %v1925, 12
  %v2846 = vpop.permute.xlu0 %2845
  %2847 = vrot.lane.b32.xlu0 %v1926, 12
  %v2848 = vpop.permute.xlu0 %2847
  %2849 = vrot.lane.b32.xlu0 %v1927, 12
  %v2850 = vpop.permute.xlu0 %2849
  %2851 = vrot.lane.b32.xlu0 %v1928, 12
  %v2852 = vpop.permute.xlu0 %2851
  %2853 = vrot.lane.b32.xlu0 %v1929, 12
  %v2854 = vpop.permute.xlu0 %2853
  %2855 = vrot.lane.b32.xlu0 %v1930, 12
  %v2856 = vpop.permute.xlu0 %2855
  %2857 = vrot.lane.b32.xlu0 %v1931, 12
  %v2858 = vpop.permute.xlu0 %2857
  %2859 = vrot.lane.b32.xlu0 %v1932, 12
  %v2860 = vpop.permute.xlu0 %2859
  %2925 = vrot.lane.b32.xlu0 %v1965, 24
  %v2926 = vpop.permute.xlu0 %2925
  %2927 = vrot.lane.b32.xlu0 %v1966, 24
  %v2928 = vpop.permute.xlu0 %2927
  %2929 = vrot.lane.b32.xlu0 %v1967, 24
  %v2930 = vpop.permute.xlu0 %2929
  %2931 = vrot.lane.b32.xlu0 %v1968, 24
  %v2932 = vpop.permute.xlu0 %2931
  %2933 = vrot.lane.b32.xlu0 %v1969, 24
  %v2934 = vpop.permute.xlu0 %2933
  %2935 = vrot.lane.b32.xlu0 %v1970, 24
  %v2936 = vpop.permute.xlu0 %2935
  %2937 = vrot.lane.b32.xlu0 %v1971, 24
  %v2938 = vpop.permute.xlu0 %2937
  %2939 = vrot.lane.b32.xlu0 %v1972, 24
  %v2940 = vpop.permute.xlu0 %2939
  %2941 = vrot.lane.b32.xlu0 %v1973, 24
  %v2942 = vpop.permute.xlu0 %2941
  %2943 = vrot.lane.b32.xlu0 %v1974, 24
  %v2944 = vpop.permute.xlu0 %2943
  %2945 = vrot.lane.b32.xlu0 %v1975, 24
  %v2946 = vpop.permute.xlu0 %2945
  %2947 = vrot.lane.b32.xlu0 %v1976, 24
  %v2948 = vpop.permute.xlu0 %2947
  %2949 = vrot.lane.b32.xlu0 %v1977, 24
  %v2950 = vpop.permute.xlu0 %2949
  %2951 = vrot.lane.b32.xlu0 %v1978, 24
  %v2952 = vpop.permute.xlu0 %2951
  %2953 = vrot.lane.b32.xlu0 %v1979, 24
  %v2954 = vpop.permute.xlu0 %2953
  %2955 = vrot.lane.b32.xlu0 %v1980, 24
  %v2956 = vpop.permute.xlu0 %2955
  %2957 = vrot.lane.b32.xlu0 %v1981, 24
  %v2958 = vpop.permute.xlu0 %2957
  %2959 = vrot.lane.b32.xlu0 %v1982, 24
  %v2960 = vpop.permute.xlu0 %2959
  %2961 = vrot.lane.b32.xlu0 %v1983, 24
  %v2962 = vpop.permute.xlu0 %2961
  %2963 = vrot.lane.b32.xlu0 %v1984, 24
  %v2964 = vpop.permute.xlu0 %2963
  %2965 = vrot.lane.b32.xlu0 %v1985, 24
  %v2966 = vpop.permute.xlu0 %2965
  %2967 = vrot.lane.b32.xlu0 %v1986, 24
  %v2968 = vpop.permute.xlu0 %2967
  %2969 = vrot.lane.b32.xlu0 %v1987, 24
  %v2970 = vpop.permute.xlu0 %2969
  %2971 = vrot.lane.b32.xlu0 %v1988, 24
  %v2972 = vpop.permute.xlu0 %2971
  %2973 = vrot.lane.b32.xlu0 %v1989, 24
  %v2974 = vpop.permute.xlu0 %2973
  %2975 = vrot.lane.b32.xlu0 %v1990, 24
  %v2976 = vpop.permute.xlu0 %2975
  %2977 = vrot.lane.b32.xlu0 %v1991, 24
  %v2978 = vpop.permute.xlu0 %2977
  %2979 = vrot.lane.b32.xlu0 %v1992, 24
  %v2980 = vpop.permute.xlu0 %2979
  %2981 = vrot.lane.b32.xlu0 %v1993, 24
  %v2982 = vpop.permute.xlu0 %2981
  %2983 = vrot.lane.b32.xlu0 %v1994, 24
  %v2984 = vpop.permute.xlu0 %2983
  %2985 = vrot.lane.b32.xlu0 %v1995, 24
  %v2986 = vpop.permute.xlu0 %2985
  %2987 = vrot.lane.b32.xlu0 %v1996, 24
  %v2988 = vpop.permute.xlu0 %2987
  %3053 = vrot.lane.b32.xlu0 %v2029, 36
  %v3054 = vpop.permute.xlu0 %3053
  %3055 = vrot.lane.b32.xlu0 %v2030, 36
  %v3056 = vpop.permute.xlu0 %3055
  %3057 = vrot.lane.b32.xlu0 %v2031, 36
  %v3058 = vpop.permute.xlu0 %3057
  %3059 = vrot.lane.b32.xlu0 %v2032, 36
  %v3060 = vpop.permute.xlu0 %3059
  %3061 = vrot.lane.b32.xlu0 %v2033, 36
  %v3062 = vpop.permute.xlu0 %3061
  %3063 = vrot.lane.b32.xlu0 %v2034, 36
  %v3064 = vpop.permute.xlu0 %3063
  %3065 = vrot.lane.b32.xlu0 %v2035, 36
  %v3066 = vpop.permute.xlu0 %3065
  %3067 = vrot.lane.b32.xlu0 %v2036, 36
  %v3068 = vpop.permute.xlu0 %3067
  %3069 = vrot.lane.b32.xlu0 %v2037, 36
  %v3070 = vpop.permute.xlu0 %3069
  %3071 = vrot.lane.b32.xlu0 %v2038, 36
  %v3072 = vpop.permute.xlu0 %3071
  %3073 = vrot.lane.b32.xlu0 %v2039, 36
  %v3074 = vpop.permute.xlu0 %3073
  %3075 = vrot.lane.b32.xlu0 %v2040, 36
  %v3076 = vpop.permute.xlu0 %3075
  %3077 = vrot.lane.b32.xlu0 %v2041, 36
  %v3078 = vpop.permute.xlu0 %3077
  %3079 = vrot.lane.b32.xlu0 %v2042, 36
  %v3080 = vpop.permute.xlu0 %3079
  %3081 = vrot.lane.b32.xlu0 %v2043, 36
  %v3082 = vpop.permute.xlu0 %3081
  %3083 = vrot.lane.b32.xlu0 %v2044, 36
  %v3084 = vpop.permute.xlu0 %3083
  %3085 = vrot.lane.b32.xlu0 %v2045, 36
  %v3086 = vpop.permute.xlu0 %3085
  %3087 = vrot.lane.b32.xlu0 %v2046, 36
  %v3088 = vpop.permute.xlu0 %3087
  %3089 = vrot.lane.b32.xlu0 %v2047, 36
  %v3090 = vpop.permute.xlu0 %3089
  %3091 = vrot.lane.b32.xlu0 %v2048, 36
  %v3092 = vpop.permute.xlu0 %3091
  %3093 = vrot.lane.b32.xlu0 %v2049, 36
  %v3094 = vpop.permute.xlu0 %3093
  %3095 = vrot.lane.b32.xlu0 %v2050, 36
  %v3096 = vpop.permute.xlu0 %3095
  %3097 = vrot.lane.b32.xlu0 %v2051, 36
  %v3098 = vpop.permute.xlu0 %3097
  %3099 = vrot.lane.b32.xlu0 %v2052, 36
  %v3100 = vpop.permute.xlu0 %3099
  %3101 = vrot.lane.b32.xlu0 %v2053, 36
  %v3102 = vpop.permute.xlu0 %3101
  %3103 = vrot.lane.b32.xlu0 %v2054, 36
  %v3104 = vpop.permute.xlu0 %3103
  %3105 = vrot.lane.b32.xlu0 %v2055, 36
  %v3106 = vpop.permute.xlu0 %3105
  %3107 = vrot.lane.b32.xlu0 %v2056, 36
  %v3108 = vpop.permute.xlu0 %3107
  %3109 = vrot.lane.b32.xlu0 %v2057, 36
  %v3110 = vpop.permute.xlu0 %3109
  %3111 = vrot.lane.b32.xlu0 %v2058, 36
  %v3112 = vpop.permute.xlu0 %3111
  %3113 = vrot.lane.b32.xlu0 %v2059, 36
  %v3114 = vpop.permute.xlu0 %3113
  %3115 = vrot.lane.b32.xlu0 %v2060, 36
  %v3116 = vpop.permute.xlu0 %3115
  %3181 = vrot.lane.b32.xlu0 %v2299, 24
  %v3182 = vpop.permute.xlu0 %3181
  %3183 = vrot.lane.b32.xlu0 %v2314, 24
  %v3184 = vpop.permute.xlu0 %3183
  %3185 = vrot.lane.b32.xlu0 %v2329, 24
  %v3186 = vpop.permute.xlu0 %3185
  %3187 = vrot.lane.b32.xlu0 %v2344, 24
  %v3188 = vpop.permute.xlu0 %3187
  %3189 = vrot.lane.b32.xlu0 %v2359, 24
  %v3190 = vpop.permute.xlu0 %3189
  %3191 = vrot.lane.b32.xlu0 %v2374, 24
  %v3192 = vpop.permute.xlu0 %3191
  %3193 = vrot.lane.b32.xlu0 %v2389, 24
  %v3194 = vpop.permute.xlu0 %3193
  %3195 = vrot.lane.b32.xlu0 %v2404, 24
  %v3196 = vpop.permute.xlu0 %3195
  %3197 = vrot.lane.b32.xlu0 %v2419, 24
  %v3198 = vpop.permute.xlu0 %3197
  %3199 = vrot.lane.b32.xlu0 %v2434, 24
  %v3200 = vpop.permute.xlu0 %3199
  %3201 = vrot.lane.b32.xlu0 %v2449, 24
  %v3202 = vpop.permute.xlu0 %3201
  %3203 = vrot.lane.b32.xlu0 %v2464, 24
  %v3204 = vpop.permute.xlu0 %3203
  %3205 = vrot.lane.b32.xlu0 %v2479, 24
  %v3206 = vpop.permute.xlu0 %3205
  %3207 = vrot.lane.b32.xlu0 %v2494, 24
  %v3208 = vpop.permute.xlu0 %3207
  %3209 = vrot.lane.b32.xlu0 %v2509, 24
  %v3210 = vpop.permute.xlu0 %3209
  %3211 = vrot.lane.b32.xlu0 %v2524, 24
  %v3212 = vpop.permute.xlu0 %3211
  %3213 = vrot.lane.b32.xlu0 %v2539, 24
  %v3214 = vpop.permute.xlu0 %3213
  %3215 = vrot.lane.b32.xlu0 %v2554, 24
  %v3216 = vpop.permute.xlu0 %3215
  %3217 = vrot.lane.b32.xlu0 %v2569, 24
  %v3218 = vpop.permute.xlu0 %3217
  %3219 = vrot.lane.b32.xlu0 %v2584, 24
  %v3220 = vpop.permute.xlu0 %3219
  %3221 = vrot.lane.b32.xlu0 %v2599, 24
  %v3222 = vpop.permute.xlu0 %3221
  %3223 = vrot.lane.b32.xlu0 %v2614, 24
  %v3224 = vpop.permute.xlu0 %3223
  %3225 = vrot.lane.b32.xlu0 %v2629, 24
  %v3226 = vpop.permute.xlu0 %3225
  %3227 = vrot.lane.b32.xlu0 %v2644, 24
  %v3228 = vpop.permute.xlu0 %3227
  %3229 = vrot.lane.b32.xlu0 %v2659, 24
  %v3230 = vpop.permute.xlu0 %3229
  %3231 = vrot.lane.b32.xlu0 %v2674, 24
  %v3232 = vpop.permute.xlu0 %3231
  %3233 = vrot.lane.b32.xlu0 %v2689, 24
  %v3234 = vpop.permute.xlu0 %3233
  %3235 = vrot.lane.b32.xlu0 %v2704, 24
  %v3236 = vpop.permute.xlu0 %3235
  %3237 = vrot.lane.b32.xlu0 %v2719, 24
  %v3238 = vpop.permute.xlu0 %3237
  %3239 = vrot.lane.b32.xlu0 %v2734, 24
  %v3240 = vpop.permute.xlu0 %3239
  %3241 = vrot.lane.b32.xlu0 %v2749, 24
  %v3242 = vpop.permute.xlu0 %3241
  %3243 = vrot.lane.b32.xlu0 %v2764, 24
  %v3244 = vpop.permute.xlu0 %3243
  %3277 = vrot.lane.b32.xlu0 %v1134, 30
  %v3278 = vpop.permute.xlu0 %3277
  %3279 = vrot.lane.b32.xlu0 %v1137, 30
  %v3280 = vpop.permute.xlu0 %3279
  %3281 = vrot.lane.b32.xlu0 %v1140, 30
  %v3282 = vpop.permute.xlu0 %3281
  %3283 = vrot.lane.b32.xlu0 %v1143, 30
  %v3284 = vpop.permute.xlu0 %3283
  %3285 = vrot.lane.b32.xlu0 %v1146, 30
  %v3286 = vpop.permute.xlu0 %3285
  %3287 = vrot.lane.b32.xlu0 %v1149, 30
  %v3288 = vpop.permute.xlu0 %3287
  %3289 = vrot.lane.b32.xlu0 %v1152, 30
  %v3290 = vpop.permute.xlu0 %3289
  %3291 = vrot.lane.b32.xlu0 %v1155, 30
  %v3292 = vpop.permute.xlu0 %3291
  %3293 = vrot.lane.b32.xlu0 %v1158, 30
  %v3294 = vpop.permute.xlu0 %3293
  %3295 = vrot.lane.b32.xlu0 %v1161, 30
  %v3296 = vpop.permute.xlu0 %3295
  %3297 = vrot.lane.b32.xlu0 %v1164, 30
  %v3298 = vpop.permute.xlu0 %3297
  %3299 = vrot.lane.b32.xlu0 %v1167, 30
  %v3300 = vpop.permute.xlu0 %3299
  %3301 = vrot.lane.b32.xlu0 %v1170, 30
  %v3302 = vpop.permute.xlu0 %3301
  %3303 = vrot.lane.b32.xlu0 %v1173, 30
  %v3304 = vpop.permute.xlu0 %3303
  %3305 = vrot.lane.b32.xlu0 %v1176, 30
  %v3306 = vpop.permute.xlu0 %3305
  %3307 = vrot.lane.b32.xlu0 %v1179, 30
  %v3308 = vpop.permute.xlu0 %3307
  %3309 = vrot.lane.b32.xlu0 %v1182, 30
  %v3310 = vpop.permute.xlu0 %3309
  %3311 = vrot.lane.b32.xlu0 %v1185, 30
  %v3312 = vpop.permute.xlu0 %3311
  %3313 = vrot.lane.b32.xlu0 %v1188, 30
  %v3314 = vpop.permute.xlu0 %3313
  %3315 = vrot.lane.b32.xlu0 %v1191, 30
  %v3316 = vpop.permute.xlu0 %3315
  %3317 = vrot.lane.b32.xlu0 %v1194, 30
  %v3318 = vpop.permute.xlu0 %3317
  %3319 = vrot.lane.b32.xlu0 %v1197, 30
  %v3320 = vpop.permute.xlu0 %3319
  %3321 = vrot.lane.b32.xlu0 %v1200, 30
  %v3322 = vpop.permute.xlu0 %3321
  %3323 = vrot.lane.b32.xlu0 %v1203, 30
  %v3324 = vpop.permute.xlu0 %3323
  %3325 = vrot.lane.b32.xlu0 %v1206, 30
  %v3326 = vpop.permute.xlu0 %3325
  %3327 = vrot.lane.b32.xlu0 %v1209, 30
  %v3328 = vpop.permute.xlu0 %3327
  %3329 = vrot.lane.b32.xlu0 %v1212, 30
  %v3330 = vpop.permute.xlu0 %3329
  %3331 = vrot.lane.b32.xlu0 %v1215, 30
  %v3332 = vpop.permute.xlu0 %3331
  %3333 = vrot.lane.b32.xlu0 %v1218, 30
  %v3334 = vpop.permute.xlu0 %3333
  %3335 = vrot.lane.b32.xlu0 %v1221, 30
  %v3336 = vpop.permute.xlu0 %3335
  %3337 = vrot.lane.b32.xlu0 %v1224, 30
  %v3338 = vpop.permute.xlu0 %3337
  %3339 = vrot.lane.b32.xlu0 %v1227, 30
  %v3340 = vpop.permute.xlu0 %3339
  %vm3373 = vcmask 97280
  %v3374 = vsel %vm3373, %v1869, %v2798
  %v3375 = vsel %vm3373, %v1870, %v2800
  %v3376 = vsel %vm3373, %v1871, %v2802
  %v3377 = vsel %vm3373, %v1872, %v2804
  %v3378 = vsel %vm3373, %v1873, %v2806
  %v3379 = vsel %vm3373, %v1874, %v2808
  %v3380 = vsel %vm3373, %v1875, %v2810
  %v3381 = vsel %vm3373, %v1876, %v2812
  %v3382 = vsel %vm3373, %v1877, %v2814
  %v3383 = vsel %vm3373, %v1878, %v2816
  %v3384 = vsel %vm3373, %v1879, %v2818
  %v3385 = vsel %vm3373, %v1880, %v2820
  %v3386 = vsel %vm3373, %v1881, %v2822
  %v3387 = vsel %vm3373, %v1882, %v2824
  %v3388 = vsel %vm3373, %v1883, %v2826
  %v3389 = vsel %vm3373, %v1884, %v2828
  %v3390 = vsel %vm3373, %v1885, %v2830
  %v3391 = vsel %vm3373, %v1886, %v2832
  %v3392 = vsel %vm3373, %v1887, %v2834
  %v3393 = vsel %vm3373, %v1888, %v2836
  %v3394 = vsel %vm3373, %v1889, %v2838
  %v3395 = vsel %vm3373, %v1890, %v2840
  %v3396 = vsel %vm3373, %v1891, %v2842
  %v3397 = vsel %vm3373, %v1892, %v2844
  %v3398 = vsel %vm3373, %v1893, %v2846
  %v3399 = vsel %vm3373, %v1894, %v2848
  %v3400 = vsel %vm3373, %v1895, %v2850
  %v3401 = vsel %vm3373, %v1896, %v2852
  %v3402 = vsel %vm3373, %v1897, %v2854
  %v3403 = vsel %vm3373, %v1898, %v2856
  %v3404 = vsel %vm3373, %v1899, %v2858
  %v3405 = vsel %vm3373, %v1900, %v2860
  %vm3406 = vcmask 146432
  %v3407 = vsel %vm3406, %v3374, %v2798
  %v3408 = vsel %vm3406, %v3375, %v2800
  %v3409 = vsel %vm3406, %v3376, %v2802
  %v3410 = vsel %vm3406, %v3377, %v2804
  %v3411 = vsel %vm3406, %v3378, %v2806
  %v3412 = vsel %vm3406, %v3379, %v2808
  %v3413 = vsel %vm3406, %v3380, %v2810
  %v3414 = vsel %vm3406, %v3381, %v2812
  %v3415 = vsel %vm3406, %v3382, %v2814
  %v3416 = vsel %vm3406, %v3383, %v2816
  %v3417 = vsel %vm3406, %v3384, %v2818
  %v3418 = vsel %vm3406, %v3385, %v2820
  %v3419 = vsel %vm3406, %v3386, %v2822
  %v3420 = vsel %vm3406, %v3387, %v2824
  %v3421 = vsel %vm3406, %v3388, %v2826
  %v3422 = vsel %vm3406, %v3389, %v2828
  %v3423 = vsel %vm3406, %v3390, %v2830
  %v3424 = vsel %vm3406, %v3391, %v2832
  %v3425 = vsel %vm3406, %v3392, %v2834
  %v3426 = vsel %vm3406, %v3393, %v2836
  %v3427 = vsel %vm3406, %v3394, %v2838
  %v3428 = vsel %vm3406, %v3395, %v2840
  %v3429 = vsel %vm3406, %v3396, %v2842
  %v3430 = vsel %vm3406, %v3397, %v2844
  %v3431 = vsel %vm3406, %v3398, %v2846
  %v3432 = vsel %vm3406, %v3399, %v2848
  %v3433 = vsel %vm3406, %v3400, %v2850
  %v3434 = vsel %vm3406, %v3401, %v2852
  %v3435 = vsel %vm3406, %v3402, %v2854
  %v3436 = vsel %vm3406, %v3403, %v2856
  %v3437 = vsel %vm3406, %v3404, %v2858
  %v3438 = vsel %vm3406, %v3405, %v2860
  %vm3439 = vcmask 195584
  %v3440 = vsel %vm3439, %v3407, %v2926
  %v3441 = vsel %vm3439, %v3408, %v2928
  %v3442 = vsel %vm3439, %v3409, %v2930
  %v3443 = vsel %vm3439, %v3410, %v2932
  %v3444 = vsel %vm3439, %v3411, %v2934
  %v3445 = vsel %vm3439, %v3412, %v2936
  %v3446 = vsel %vm3439, %v3413, %v2938
  %v3447 = vsel %vm3439, %v3414, %v2940
  %v3448 = vsel %vm3439, %v3415, %v2942
  %v3449 = vsel %vm3439, %v3416, %v2944
  %v3450 = vsel %vm3439, %v3417, %v2946
  %v3451 = vsel %vm3439, %v3418, %v2948
  %v3452 = vsel %vm3439, %v3419, %v2950
  %v3453 = vsel %vm3439, %v3420, %v2952
  %v3454 = vsel %vm3439, %v3421, %v2954
  %v3455 = vsel %vm3439, %v3422, %v2956
  %v3456 = vsel %vm3439, %v3423, %v2958
  %v3457 = vsel %vm3439, %v3424, %v2960
  %v3458 = vsel %vm3439, %v3425, %v2962
  %v3459 = vsel %vm3439, %v3426, %v2964
  %v3460 = vsel %vm3439, %v3427, %v2966
  %v3461 = vsel %vm3439, %v3428, %v2968
  %v3462 = vsel %vm3439, %v3429, %v2970
  %v3463 = vsel %vm3439, %v3430, %v2972
  %v3464 = vsel %vm3439, %v3431, %v2974
  %v3465 = vsel %vm3439, %v3432, %v2976
  %v3466 = vsel %vm3439, %v3433, %v2978
  %v3467 = vsel %vm3439, %v3434, %v2980
  %v3468 = vsel %vm3439, %v3435, %v2982
  %v3469 = vsel %vm3439, %v3436, %v2984
  %v3470 = vsel %vm3439, %v3437, %v2986
  %v3471 = vsel %vm3439, %v3438, %v2988
  %vm3472 = vcmask 244736
  %v3473 = vsel %vm3472, %v3440, %v2926
  %v3474 = vsel %vm3472, %v3441, %v2928
  %v3475 = vsel %vm3472, %v3442, %v2930
  %v3476 = vsel %vm3472, %v3443, %v2932
  %v3477 = vsel %vm3472, %v3444, %v2934
  %v3478 = vsel %vm3472, %v3445, %v2936
  %v3479 = vsel %vm3472, %v3446, %v2938
  %v3480 = vsel %vm3472, %v3447, %v2940
  %v3481 = vsel %vm3472, %v3448, %v2942
  %v3482 = vsel %vm3472, %v3449, %v2944
  %v3483 = vsel %vm3472, %v3450, %v2946
  %v3484 = vsel %vm3472, %v3451, %v2948
  %v3485 = vsel %vm3472, %v3452, %v2950
  %v3486 = vsel %vm3472, %v3453, %v2952
  %v3487 = vsel %vm3472, %v3454, %v2954
  %v3488 = vsel %vm3472, %v3455, %v2956
  %v3489 = vsel %vm3472, %v3456, %v2958
  %v3490 = vsel %vm3472, %v3457, %v2960
  %v3491 = vsel %vm3472, %v3458, %v2962
  %v3492 = vsel %vm3472, %v3459, %v2964
  %v3493 = vsel %vm3472, %v3460, %v2966
  %v3494 = vsel %vm3472, %v3461, %v2968
  %v3495 = vsel %vm3472, %v3462, %v2970
  %v3496 = vsel %vm3472, %v3463, %v2972
  %v3497 = vsel %vm3472, %v3464, %v2974
  %v3498 = vsel %vm3472, %v3465, %v2976
  %v3499 = vsel %vm3472, %v3466, %v2978
  %v3500 = vsel %vm3472, %v3467, %v2980
  %v3501 = vsel %vm3472, %v3468, %v2982
  %v3502 = vsel %vm3472, %v3469, %v2984
  %v3503 = vsel %vm3472, %v3470, %v2986
  %v3504 = vsel %vm3472, %v3471, %v2988
  %vm3505 = vcmask 293888
  %v3506 = vsel %vm3505, %v3473, %v3054
  %v3507 = vsel %vm3505, %v3474, %v3056
  %v3508 = vsel %vm3505, %v3475, %v3058
  %v3509 = vsel %vm3505, %v3476, %v3060
  %v3510 = vsel %vm3505, %v3477, %v3062
  %v3511 = vsel %vm3505, %v3478, %v3064
  %v3512 = vsel %vm3505, %v3479, %v3066
  %v3513 = vsel %vm3505, %v3480, %v3068
  %v3514 = vsel %vm3505, %v3481, %v3070
  %v3515 = vsel %vm3505, %v3482, %v3072
  %v3516 = vsel %vm3505, %v3483, %v3074
  %v3517 = vsel %vm3505, %v3484, %v3076
  %v3518 = vsel %vm3505, %v3485, %v3078
  %v3519 = vsel %vm3505, %v3486, %v3080
  %v3520 = vsel %vm3505, %v3487, %v3082
  %v3521 = vsel %vm3505, %v3488, %v3084
  %v3522 = vsel %vm3505, %v3489, %v3086
  %v3523 = vsel %vm3505, %v3490, %v3088
  %v3524 = vsel %vm3505, %v3491, %v3090
  %v3525 = vsel %vm3505, %v3492, %v3092
  %v3526 = vsel %vm3505, %v3493, %v3094
  %v3527 = vsel %vm3505, %v3494, %v3096
  %v3528 = vsel %vm3505, %v3495, %v3098
  %v3529 = vsel %vm3505, %v3496, %v3100
  %v3530 = vsel %vm3505, %v3497, %v3102
  %v3531 = vsel %vm3505, %v3498, %v3104
  %v3532 = vsel %vm3505, %v3499, %v3106
  %v3533 = vsel %vm3505, %v3500, %v3108
  %v3534 = vsel %vm3505, %v3501, %v3110
  %v3535 = vsel %vm3505, %v3502, %v3112
  %v3536 = vsel %vm3505, %v3503, %v3114
  %v3537 = vsel %vm3505, %v3504, %v3116
  %vm3538 = vcmask 343040
  %v3539 = vsel %vm3538, %v3506, %v3054
  %v3540 = vsel %vm3538, %v3507, %v3056
  %v3541 = vsel %vm3538, %v3508, %v3058
  %v3542 = vsel %vm3538, %v3509, %v3060
  %v3543 = vsel %vm3538, %v3510, %v3062
  %v3544 = vsel %vm3538, %v3511, %v3064
  %v3545 = vsel %vm3538, %v3512, %v3066
  %v3546 = vsel %vm3538, %v3513, %v3068
  %v3547 = vsel %vm3538, %v3514, %v3070
  %v3548 = vsel %vm3538, %v3515, %v3072
  %v3549 = vsel %vm3538, %v3516, %v3074
  %v3550 = vsel %vm3538, %v3517, %v3076
  %v3551 = vsel %vm3538, %v3518, %v3078
  %v3552 = vsel %vm3538, %v3519, %v3080
  %v3553 = vsel %vm3538, %v3520, %v3082
  %v3554 = vsel %vm3538, %v3521, %v3084
  %v3555 = vsel %vm3538, %v3522, %v3086
  %v3556 = vsel %vm3538, %v3523, %v3088
  %v3557 = vsel %vm3538, %v3524, %v3090
  %v3558 = vsel %vm3538, %v3525, %v3092
  %v3559 = vsel %vm3538, %v3526, %v3094
  %v3560 = vsel %vm3538, %v3527, %v3096
  %v3561 = vsel %vm3538, %v3528, %v3098
  %v3562 = vsel %vm3538, %v3529, %v3100
  %v3563 = vsel %vm3538, %v3530, %v3102
  %v3564 = vsel %vm3538, %v3531, %v3104
  %v3565 = vsel %vm3538, %v3532, %v3106
  %v3566 = vsel %vm3538, %v3533, %v3108
  %v3567 = vsel %vm3538, %v3534, %v3110
  %v3568 = vsel %vm3538, %v3535, %v3112
  %v3569 = vsel %vm3538, %v3536, %v3114
  %v3570 = vsel %vm3538, %v3537, %v3116
  %vm3571 = vcmask 392192
  %v3572 = vsel %vm3571, %v3539, %v3182
  %v3573 = vsel %vm3571, %v3540, %v3184
  %v3574 = vsel %vm3571, %v3541, %v3186
  %v3575 = vsel %vm3571, %v3542, %v3188
  %v3576 = vsel %vm3571, %v3543, %v3190
  %v3577 = vsel %vm3571, %v3544, %v3192
  %v3578 = vsel %vm3571, %v3545, %v3194
  %v3579 = vsel %vm3571, %v3546, %v3196
  %v3580 = vsel %vm3571, %v3547, %v3198
  %v3581 = vsel %vm3571, %v3548, %v3200
  %v3582 = vsel %vm3571, %v3549, %v3202
  %v3583 = vsel %vm3571, %v3550, %v3204
  %v3584 = vsel %vm3571, %v3551, %v3206
  %v3585 = vsel %vm3571, %v3552, %v3208
  %v3586 = vsel %vm3571, %v3553, %v3210
  %v3587 = vsel %vm3571, %v3554, %v3212
  %v3588 = vsel %vm3571, %v3555, %v3214
  %v3589 = vsel %vm3571, %v3556, %v3216
  %v3590 = vsel %vm3571, %v3557, %v3218
  %v3591 = vsel %vm3571, %v3558, %v3220
  %v3592 = vsel %vm3571, %v3559, %v3222
  %v3593 = vsel %vm3571, %v3560, %v3224
  %v3594 = vsel %vm3571, %v3561, %v3226
  %v3595 = vsel %vm3571, %v3562, %v3228
  %v3596 = vsel %vm3571, %v3563, %v3230
  %v3597 = vsel %vm3571, %v3564, %v3232
  %v3598 = vsel %vm3571, %v3565, %v3234
  %v3599 = vsel %vm3571, %v3566, %v3236
  %v3600 = vsel %vm3571, %v3567, %v3238
  %v3601 = vsel %vm3571, %v3568, %v3240
  %v3602 = vsel %vm3571, %v3569, %v3242
  %v3603 = vsel %vm3571, %v3570, %v3244
  %vm3604 = vcmask 441344
  %v3605 = vsel %vm3604, %v3572, %v3278
  %v3606 = vsel %vm3604, %v3573, %v3280
  %v3607 = vsel %vm3604, %v3574, %v3282
  %v3608 = vsel %vm3604, %v3575, %v3284
  %v3609 = vsel %vm3604, %v3576, %v3286
  %v3610 = vsel %vm3604, %v3577, %v3288
  %v3611 = vsel %vm3604, %v3578, %v3290
  %v3612 = vsel %vm3604, %v3579, %v3292
  %v3613 = vsel %vm3604, %v3580, %v3294
  %v3614 = vsel %vm3604, %v3581, %v3296
  %v3615 = vsel %vm3604, %v3582, %v3298
  %v3616 = vsel %vm3604, %v3583, %v3300
  %v3617 = vsel %vm3604, %v3584, %v3302
  %v3618 = vsel %vm3604, %v3585, %v3304
  %v3619 = vsel %vm3604, %v3586, %v3306
  %v3620 = vsel %vm3604, %v3587, %v3308
  %v3621 = vsel %vm3604, %v3588, %v3310
  %v3622 = vsel %vm3604, %v3589, %v3312
  %v3623 = vsel %vm3604, %v3590, %v3314
  %v3624 = vsel %vm3604, %v3591, %v3316
  %v3625 = vsel %vm3604, %v3592, %v3318
  %v3626 = vsel %vm3604, %v3593, %v3320
  %v3627 = vsel %vm3604, %v3594, %v3322
  %v3628 = vsel %vm3604, %v3595, %v3324
  %v3629 = vsel %vm3604, %v3596, %v3326
  %v3630 = vsel %vm3604, %v3597, %v3328
  %v3631 = vsel %vm3604, %v3598, %v3330
  %v3632 = vsel %vm3604, %v3599, %v3332
  %v3633 = vsel %vm3604, %v3600, %v3334
  %v3634 = vsel %vm3604, %v3601, %v3336
  %v3635 = vsel %vm3604, %v3602, %v3338
  %v3636 = vsel %vm3604, %v3603, %v3340
  %vm3637 = vcmask 490496
  %v3638 = vsel %vm3637, %v3605, %v3278
  %v3639 = vsel %vm3637, %v3606, %v3280
  %v3640 = vsel %vm3637, %v3607, %v3282
  %v3641 = vsel %vm3637, %v3608, %v3284
  %v3642 = vsel %vm3637, %v3609, %v3286
  %v3643 = vsel %vm3637, %v3610, %v3288
  %v3644 = vsel %vm3637, %v3611, %v3290
  %v3645 = vsel %vm3637, %v3612, %v3292
  %v3646 = vsel %vm3637, %v3613, %v3294
  %v3647 = vsel %vm3637, %v3614, %v3296
  %v3648 = vsel %vm3637, %v3615, %v3298
  %v3649 = vsel %vm3637, %v3616, %v3300
  %v3650 = vsel %vm3637, %v3617, %v3302
  %v3651 = vsel %vm3637, %v3618, %v3304
  %v3652 = vsel %vm3637, %v3619, %v3306
  %v3653 = vsel %vm3637, %v3620, %v3308
  %v3654 = vsel %vm3637, %v3621, %v3310
  %v3655 = vsel %vm3637, %v3622, %v3312
  %v3656 = vsel %vm3637, %v3623, %v3314
  %v3657 = vsel %vm3637, %v3624, %v3316
  %v3658 = vsel %vm3637, %v3625, %v3318
  %v3659 = vsel %vm3637, %v3626, %v3320
  %v3660 = vsel %vm3637, %v3627, %v3322
  %v3661 = vsel %vm3637, %v3628, %v3324
  %v3662 = vsel %vm3637, %v3629, %v3326
  %v3663 = vsel %vm3637, %v3630, %v3328
  %v3664 = vsel %vm3637, %v3631, %v3330
  %v3665 = vsel %vm3637, %v3632, %v3332
  %v3666 = vsel %vm3637, %v3633, %v3334
  %v3667 = vsel %vm3637, %v3634, %v3336
  %v3668 = vsel %vm3637, %v3635, %v3338
  %v3669 = vsel %vm3637, %v3636, %v3340
  %vm3670 = vcmask 539648
  %v3671 = vsel %vm3670, %v3638, 0.0
  %v3672 = vsel %vm3670, %v3639, 0.0
  %v3673 = vsel %vm3670, %v3640, 0.0
  %v3674 = vsel %vm3670, %v3641, 0.0
  %v3675 = vsel %vm3670, %v3642, 0.0
  %v3676 = vsel %vm3670, %v3643, 0.0
  %v3677 = vsel %vm3670, %v3644, 0.0
  %v3678 = vsel %vm3670, %v3645, 0.0
  %v3679 = vsel %vm3670, %v3646, 0.0
  %v3680 = vsel %vm3670, %v3647, 0.0
  %v3681 = vsel %vm3670, %v3648, 0.0
  %v3682 = vsel %vm3670, %v3649, 0.0
  %v3683 = vsel %vm3670, %v3650, 0.0
  %v3684 = vsel %vm3670, %v3651, 0.0
  %v3685 = vsel %vm3670, %v3652, 0.0
  %v3686 = vsel %vm3670, %v3653, 0.0
  %v3687 = vsel %vm3670, %v3654, 0.0
  %v3688 = vsel %vm3670, %v3655, 0.0
  %v3689 = vsel %vm3670, %v3656, 0.0
  %v3690 = vsel %vm3670, %v3657, 0.0
  %v3691 = vsel %vm3670, %v3658, 0.0
  %v3692 = vsel %vm3670, %v3659, 0.0
  %v3693 = vsel %vm3670, %v3660, 0.0
  %v3694 = vsel %vm3670, %v3661, 0.0
  %v3695 = vsel %vm3670, %v3662, 0.0
  %v3696 = vsel %vm3670, %v3663, 0.0
  %v3697 = vsel %vm3670, %v3664, 0.0
  %v3698 = vsel %vm3670, %v3665, 0.0
  %v3699 = vsel %vm3670, %v3666, 0.0
  %v3700 = vsel %vm3670, %v3667, 0.0
  %v3701 = vsel %vm3670, %v3668, 0.0
  %v3702 = vsel %vm3670, %v3669, 0.0
  %3703 = vst [vmem:[%s6] sm:$0xff] %v3671
  %3704 = vst [vmem:[%s6 + $0x8] sm:$0xff] %v3672
  %3705 = vst [vmem:[%s6 + $0x10] sm:$0xff] %v3673
  %3706 = vst [vmem:[%s6 + $0x18] sm:$0xff] %v3674
  %3707 = vst [vmem:[%s6 + $0x20] sm:$0xff] %v3675
  %3708 = vst [vmem:[%s6 + $0x28] sm:$0xff] %v3676
  %3709 = vst [vmem:[%s6 + $0x30] sm:$0xff] %v3677
  %3710 = vst [vmem:[%s6 + $0x38] sm:$0xff] %v3678
  %3711 = vst [vmem:[%s6 + $0x40] sm:$0xff] %v3679
  %3712 = vst [vmem:[%s6 + $0x48] sm:$0xff] %v3680
  %3713 = vst [vmem:[%s6 + $0x50] sm:$0xff] %v3681
  %3714 = vst [vmem:[%s6 + $0x58] sm:$0xff] %v3682
  %3715 = vst [vmem:[%s6 + $0x60] sm:$0xff] %v3683
  %3716 = vst [vmem:[%s6 + $0x68] sm:$0xff] %v3684
  %3717 = vst [vmem:[%s6 + $0x70] sm:$0xff] %v3685
  %3718 = vst [vmem:[%s6 + $0x78] sm:$0xff] %v3686
  %3719 = vst [vmem:[%s6 + $0x80] sm:$0xff] %v3687
  %3720 = vst [vmem:[%s6 + $0x88] sm:$0xff] %v3688
  %3721 = vst [vmem:[%s6 + $0x90] sm:$0xff] %v3689
  %3722 = vst [vmem:[%s6 + $0x98] sm:$0xff] %v3690
  %3723 = vst [vmem:[%s6 + $0xa0] sm:$0xff] %v3691
  %3724 = vst [vmem:[%s6 + $0xa8] sm:$0xff] %v3692
  %3725 = vst [vmem:[%s6 + $0xb0] sm:$0xff] %v3693
  %3726 = vst [vmem:[%s6 + $0xb8] sm:$0xff] %v3694
  %3727 = vst [vmem:[%s6 + $0xc0] sm:$0xff] %v3695
  %3728 = vst [vmem:[%s6 + $0xc8] sm:$0xff] %v3696
  %3729 = vst [vmem:[%s6 + $0xd0] sm:$0xff] %v3697
  %3730 = vst [vmem:[%s6 + $0xd8] sm:$0xff] %v3698
  %3731 = vst [vmem:[%s6 + $0xe0] sm:$0xff] %v3699
  %3732 = vst [vmem:[%s6 + $0xe8] sm:$0xff] %v3700
  %3733 = vst [vmem:[%s6 + $0xf0] sm:$0xff] %v3701
  %3734 = vst [vmem:[%s6 + $0xf8] sm:$0xff] %v3702
  // Predicated region
  $region26: #{rpn_device.1} parent=0 // pred_check
    _
  $region27: #{rpn_device.1} parent=0 // pred_check_branch
    %3736 = sbr.rel (0) target = $region29
  $region28: #{rpn_device.1} parent=0 // pred_region
    _
  $region29: #{rpn_device.1} parent=0 // pred_fallthru
    _
  // Predicated region
  $region30: #{rpn_device.1} parent=0 // pred_check
    _
  $region31: #{rpn_device.1} parent=0 // pred_check_branch
    %3738 = sbr.rel (0) target = $region33
  $region32: #{rpn_device.1} parent=0 // pred_region
    _
  $region33: #{rpn_device.1} parent=0 // pred_fallthru
    _

</llo_original>
